<compile_context>
chip_gen: v5e
topology: v5e:2x2
jax: 0.10.0
libtpu: 0.0.40
codegen_flags: <defaults>
</compile_context>

<pallas_src>
import jax
import jax.numpy as jnp
from jax.experimental import pallas as pl
from jax.experimental.pallas import tpu as pltpu

INPUT_DIM = 784
H1, H2, H3 = 1024, 512, 256
OUT = 1
OUT_PAD = 128      # last-layer weight padded to a full MXU column tile (col 0 is real)
TM_MAX = 512       # max batch tile


def _leaky_relu_bf16(h_f32, slope=0.2):
    """Bias-added f32 activations -> bf16, then LeakyReLU in bf16 (VPU-cheap on v6e/v7x)."""
    h = h_f32.astype(jnp.bfloat16)
    return jnp.where(h > 0, h, h * slope)


def discriminator_kernel(x_ref,
                         w1_ref, b1_ref,
                         w2_ref, b2_ref,
                         w3_ref, b3_ref,
                         w4_ref, b4_ref,
                         o_ref):
    # Fused 4-layer MLP on one (TM, 784) f32 batch tile; all weights resident in VMEM
    # (bf16, single-buffered). f32 accumulation on the MXU, bf16 elementwise epilogue.
    x = x_ref[...].astype(jnp.bfloat16)                                   # VPU cast, hidden under MXU

    h = jnp.dot(x, w1_ref[...], preferred_element_type=jnp.float32)      # (TM, 1024) f32
    h = _leaky_relu_bf16(h + b1_ref[...])                                 # Dropout: identity (eval)

    h = jnp.dot(h, w2_ref[...], preferred_element_type=jnp.float32)      # (TM, 512) f32
    h = _leaky_relu_bf16(h + b2_ref[...])

    h = jnp.dot(h, w3_ref[...], preferred_element_type=jnp.float32)      # (TM, 256) f32
    h = _leaky_relu_bf16(h + b3_ref[...])

    logits = jnp.dot(h, w4_ref[...], preferred_element_type=jnp.float32) # (TM, 128); col 0 real
    z = logits[:, 0:1] + b4_ref[...]                                      # (TM, 1) f32 logit
    z = jnp.clip(z, -30.0, 30.0)                                          # stable sigmoid range
    sig = pl.reciprocal(1.0 + jnp.exp(-z), approx=True)                   # exp + rcp on the EUP
    o_ref[...] = sig.astype(o_ref.dtype)


def _const_spec(shape):
    # Invariant operand: constant index_map, single VMEM buffer (no double-buffering needed).
    return pl.BlockSpec(shape, lambda i: (0, 0), pipeline_mode=pl.Buffered(buffer_count=1))


def _choose_tm(batch):
    """Largest tile (<=512) that (a) keeps >=2 grid steps so both v7x TensorCores get work
    and (b) divides the batch so no batch-pad pre-pass is needed. Falls back to ~batch/2."""
    for tm in (512, 256, 128, 64, 32, 16, 8):
        if batch % tm == 0 and batch // tm >= 2:
            return tm
    half = -(-batch // 2)
    return max(8, min(TM_MAX, -(-half // 8) * 8))


def prepare_params(params):
    """Convert f32 (in, out)-layout params to the kernel layout (bf16 weights, padded w4)."""
    w1, b1, w2, b2, w3, b3, w4, b4 = params
    w1p = w1.astype(jnp.bfloat16)                                              # (784, 1024)
    w2p = w2.astype(jnp.bfloat16)                                              # (1024, 512)
    w3p = w3.astype(jnp.bfloat16)                                              # (512, 256)
    w4p = jnp.pad(w4, ((0, 0), (0, OUT_PAD - OUT))).astype(jnp.bfloat16)       # (256, 128)
    return (w1p, b1, w2p, b2, w3p, b3, w4p, b4)                                # b4 stays (1,1) f32


@jax.jit
def discriminator_forward(x, prepared_params):
    """x: (B, 784) f32 -> (B, 1) f32, matching torch Discriminator.forward (eval mode)."""
    w1, b1, w2, b2, w3, b3, w4, b4 = prepared_params
    B = x.shape[0]

    TM = _choose_tm(B)
    B_pad = -(-B // TM) * TM
    if B_pad != B:
        # Only touches HBM when B is not tile-aligned (typical batch sizes hit the no-pad path).
        x = jnp.pad(x, ((0, B_pad - B), (0, 0)))
    n_tiles = B_pad // TM

    macs = INPUT_DIM * H1 + H1 * H2 + H2 * H3 + H3 * OUT_PAD
    cost = pl.CostEstimate(
        flops=2 * B_pad * macs,
        transcendentals=B_pad,
        bytes_accessed=B_pad * INPUT_DIM * 4 + 2 * macs + 4 * (H1 + H2 + H3 + 1) + B_pad * 4,
    )

    out = pl.pallas_call(
        discriminator_kernel,
        out_shape=jax.ShapeDtypeStruct((B_pad, OUT), jnp.float32),
        grid_spec=pltpu.PrefetchScalarGridSpec(
            num_scalar_prefetch=0,
            grid=(n_tiles,),
            in_specs=[
                pl.BlockSpec((TM, INPUT_DIM), lambda i: (i, 0)),   # f32 x tile, cast in-kernel
                _const_spec((INPUT_DIM, H1)), _const_spec((1, H1)),
                _const_spec((H1, H2)),        _const_spec((1, H2)),
                _const_spec((H2, H3)),        _const_spec((1, H3)),
                _const_spec((H3, OUT_PAD)),   _const_spec((1, OUT)),
            ],
            out_specs=pl.BlockSpec((TM, OUT), lambda i: (i, 0)),
        ),
        compiler_params=pltpu.CompilerParams(
            dimension_semantics=("parallel",),       # batch tiles shard across TCs on v7x
            vmem_limit_bytes=48 * 1024 * 1024,       # headroom for TM=512 within v7x's 64 MiB
        ),
        cost_estimate=cost,
    )(x, w1, b1, w2, b2, w3, b3, w4, b4)

    return out[:B]


def init_params(key):
    """Deterministic init mirroring torch.nn.Linear default: U(-1/sqrt(fan_in), +1/sqrt(fan_in))."""
    dims = [(INPUT_DIM, H1), (H1, H2), (H2, H3), (H3, OUT)]
    params = []
    for (fan_in, fan_out) in dims:
        key, kw, kb = jax.random.split(key, 3)
        bound = fan_in ** -0.5
        w = jax.random.uniform(kw, (fan_in, fan_out), jnp.float32, -bound, bound)
        b = jax.random.uniform(kb, (1, fan_out), jnp.float32, -bound, bound)
        params += [w, b]
    return tuple(params)


def reference_forward_mixed(x, params):
    """Plain-JAX reference with the kernel's precision recipe (bf16 matmul inputs, f32 accum,
    bf16 LeakyReLU, eval-mode dropout)."""
    w1, b1, w2, b2, w3, b3, w4, b4 = params
    bf = jnp.bfloat16

    def lin(a, w, b):
        return jnp.dot(a.astype(bf), w.astype(bf), preferred_element_type=jnp.float32) + b

    def lrelu(h):
        h = h.astype(bf)
        return jnp.where(h > 0, h, h * 0.2)

    h = lrelu(lin(x, w1, b1))
    h = lrelu(lin(h, w2, b2))
    h = lrelu(lin(h, w3, b3))
    return jax.nn.sigmoid(lin(h, w4, b4))


def reference_forward_f32(x, params):
    """Full-f32 reference matching the torch eval-mode module semantics."""
    w1, b1, w2, b2, w3, b3, w4, b4 = params

    def lrelu(h):
        return jnp.where(h > 0, h, 0.2 * h)

    h = lrelu(x @ w1 + b1)
    h = lrelu(h @ w2 + b2)
    h = lrelu(h @ w3 + b3)
    return jax.nn.sigmoid(h @ w4 + b4)


if __name__ == "__main__":
    key = jax.random.PRNGKey(0)
    kx, kp = jax.random.split(key)

    B = 2
    x = jax.random.normal(kx, (B, INPUT_DIM), jnp.float32)
    params = init_params(kp)
    prepared = prepare_params(params)

    y = jax.block_until_ready(discriminator_forward(x, prepared))
    assert y.shape == (B, OUT), y.shape

    y_ref = reference_forward_mixed(x, params)       # same precision recipe as the kernel
    assert jnp.allclose(y, y_ref, atol=2e-3, rtol=0.0), (y, y_ref)

    y_ref32 = reference_forward_f32(x, params)       # torch-equivalent f32 semantics
    assert jnp.allclose(y, y_ref32, atol=1e-2, rtol=0.0), (y, y_ref32)

    print("KERNEL_OK")
</pallas_src>

<mosaic_0001>
module attributes {stable_mosaic.version = 11 : i64} {
  func.func @discriminator_kernel(%arg0: i32, %arg1: memref<8x784xf32, #tpu.memory_space<vmem>>, %arg2: memref<784x1024xbf16, #tpu.memory_space<vmem>>, %arg3: memref<1x1024xf32, #tpu.memory_space<vmem>>, %arg4: memref<1024x512xbf16, #tpu.memory_space<vmem>>, %arg5: memref<1x512xf32, #tpu.memory_space<vmem>>, %arg6: memref<512x256xbf16, #tpu.memory_space<vmem>>, %arg7: memref<1x256xf32, #tpu.memory_space<vmem>>, %arg8: memref<256x128xbf16, #tpu.memory_space<vmem>>, %arg9: memref<1x1xf32, #tpu.memory_space<vmem>>, %arg10: memref<8x1xf32, #tpu.memory_space<vmem>>) attributes {dimension_semantics = [#tpu.dimension_semantics<parallel>], iteration_bounds = array<i64: 1>, scalar_prefetch = 0 : i64, scratch_operands = 0 : i64, tpu.core_type = #tpu.core_type<tc>, window_params = [{transform_indices = @transform_0, window_bounds = array<i64: 8, 784>}, {pipeline_mode = #tpu.pipeline_mode<synchronous>, transform_indices = @transform_1, window_bounds = array<i64: 784, 1024>}, {pipeline_mode = #tpu.pipeline_mode<synchronous>, transform_indices = @transform_2, window_bounds = array<i64: 1, 1024>}, {pipeline_mode = #tpu.pipeline_mode<synchronous>, transform_indices = @transform_3, window_bounds = array<i64: 1024, 512>}, {pipeline_mode = #tpu.pipeline_mode<synchronous>, transform_indices = @transform_4, window_bounds = array<i64: 1, 512>}, {pipeline_mode = #tpu.pipeline_mode<synchronous>, transform_indices = @transform_5, window_bounds = array<i64: 512, 256>}, {pipeline_mode = #tpu.pipeline_mode<synchronous>, transform_indices = @transform_6, window_bounds = array<i64: 1, 256>}, {pipeline_mode = #tpu.pipeline_mode<synchronous>, transform_indices = @transform_7, window_bounds = array<i64: 256, 128>}, {pipeline_mode = #tpu.pipeline_mode<synchronous>, transform_indices = @transform_8, window_bounds = array<i64: 1, 1>}, {transform_indices = @transform_9, window_bounds = array<i64: 8, 1>}]} {
    %c0 = arith.constant 0 : index
    %c0_0 = arith.constant 0 : index
    %0 = vector.load %arg1[%c0, %c0_0] : memref<8x784xf32, #tpu.memory_space<vmem>>, vector<8x784xf32>
    %1 = arith.truncf %0 : vector<8x784xf32> to vector<8x784xbf16>
    %c0_1 = arith.constant 0 : index
    %c0_2 = arith.constant 0 : index
    %2 = vector.load %arg2[%c0_1, %c0_2] : memref<784x1024xbf16, #tpu.memory_space<vmem>>, vector<784x1024xbf16>
    %cst = arith.constant dense<0.000000e+00> : vector<8x1024xf32>
    %3 = tpu.matmul %1, %2, %cst {dimension_numbers = #tpu.dot_dimension_numbers<[1], [0], [0], [1], [0, 0, 1, 1], [], []>} : vector<8x784xbf16>, vector<784x1024xbf16>, vector<8x1024xf32> -> vector<8x1024xf32>
    %c0_3 = arith.constant 0 : index
    %c0_4 = arith.constant 0 : index
    %4 = vector.load %arg3[%c0_3, %c0_4] : memref<1x1024xf32, #tpu.memory_space<vmem>>, vector<1x1024xf32>
    %5 = vector.broadcast %4 : vector<1x1024xf32> to vector<8x1024xf32>
    %6 = arith.addf %3, %5 : vector<8x1024xf32>
    %7 = arith.truncf %6 : vector<8x1024xf32> to vector<8x1024xbf16>
    %cst_5 = arith.constant 0.000000e+00 : bf16
    %8 = vector.broadcast %cst_5 : bf16 to vector<8x1024xbf16>
    %9 = arith.cmpf ogt, %7, %8 : vector<8x1024xbf16>
    %cst_6 = arith.constant 2.001950e-01 : bf16
    %10 = vector.broadcast %cst_6 : bf16 to vector<8x1024xbf16>
    %11 = arith.mulf %7, %10 : vector<8x1024xbf16>
    %12 = arith.select %9, %7, %11 : vector<8x1024xi1>, vector<8x1024xbf16>
    %c0_7 = arith.constant 0 : index
    %c0_8 = arith.constant 0 : index
    %13 = vector.load %arg4[%c0_7, %c0_8] : memref<1024x512xbf16, #tpu.memory_space<vmem>>, vector<1024x512xbf16>
    %cst_9 = arith.constant dense<0.000000e+00> : vector<8x512xf32>
    %14 = tpu.matmul %12, %13, %cst_9 {dimension_numbers = #tpu.dot_dimension_numbers<[1], [0], [0], [1], [0, 0, 1, 1], [], []>} : vector<8x1024xbf16>, vector<1024x512xbf16>, vector<8x512xf32> -> vector<8x512xf32>
    %c0_10 = arith.constant 0 : index
    %c0_11 = arith.constant 0 : index
    %15 = vector.load %arg5[%c0_10, %c0_11] : memref<1x512xf32, #tpu.memory_space<vmem>>, vector<1x512xf32>
    %16 = vector.broadcast %15 : vector<1x512xf32> to vector<8x512xf32>
    %17 = arith.addf %14, %16 : vector<8x512xf32>
    %18 = arith.truncf %17 : vector<8x512xf32> to vector<8x512xbf16>
    %cst_12 = arith.constant 0.000000e+00 : bf16
    %19 = vector.broadcast %cst_12 : bf16 to vector<8x512xbf16>
    %20 = arith.cmpf ogt, %18, %19 : vector<8x512xbf16>
    %cst_13 = arith.constant 2.001950e-01 : bf16
    %21 = vector.broadcast %cst_13 : bf16 to vector<8x512xbf16>
    %22 = arith.mulf %18, %21 : vector<8x512xbf16>
    %23 = arith.select %20, %18, %22 : vector<8x512xi1>, vector<8x512xbf16>
    %c0_14 = arith.constant 0 : index
    %c0_15 = arith.constant 0 : index
    %24 = vector.load %arg6[%c0_14, %c0_15] : memref<512x256xbf16, #tpu.memory_space<vmem>>, vector<512x256xbf16>
    %cst_16 = arith.constant dense<0.000000e+00> : vector<8x256xf32>
    %25 = tpu.matmul %23, %24, %cst_16 {dimension_numbers = #tpu.dot_dimension_numbers<[1], [0], [0], [1], [0, 0, 1, 1], [], []>} : vector<8x512xbf16>, vector<512x256xbf16>, vector<8x256xf32> -> vector<8x256xf32>
    %c0_17 = arith.constant 0 : index
    %c0_18 = arith.constant 0 : index
    %26 = vector.load %arg7[%c0_17, %c0_18] : memref<1x256xf32, #tpu.memory_space<vmem>>, vector<1x256xf32>
    %27 = vector.broadcast %26 : vector<1x256xf32> to vector<8x256xf32>
    %28 = arith.addf %25, %27 : vector<8x256xf32>
    %29 = arith.truncf %28 : vector<8x256xf32> to vector<8x256xbf16>
    %cst_19 = arith.constant 0.000000e+00 : bf16
    %30 = vector.broadcast %cst_19 : bf16 to vector<8x256xbf16>
    %31 = arith.cmpf ogt, %29, %30 : vector<8x256xbf16>
    %cst_20 = arith.constant 2.001950e-01 : bf16
    %32 = vector.broadcast %cst_20 : bf16 to vector<8x256xbf16>
    %33 = arith.mulf %29, %32 : vector<8x256xbf16>
    %34 = arith.select %31, %29, %33 : vector<8x256xi1>, vector<8x256xbf16>
    %c0_21 = arith.constant 0 : index
    %c0_22 = arith.constant 0 : index
    %35 = vector.load %arg8[%c0_21, %c0_22] : memref<256x128xbf16, #tpu.memory_space<vmem>>, vector<256x128xbf16>
    %cst_23 = arith.constant dense<0.000000e+00> : vector<8x128xf32>
    %36 = tpu.matmul %34, %35, %cst_23 {dimension_numbers = #tpu.dot_dimension_numbers<[1], [0], [0], [1], [0, 0, 1, 1], [], []>} : vector<8x256xbf16>, vector<256x128xbf16>, vector<8x128xf32> -> vector<8x128xf32>
    %37 = vector.extract_strided_slice %36 {offsets = [0, 0], sizes = [8, 1], strides = [1, 1]} : vector<8x128xf32> to vector<8x1xf32>
    %c0_24 = arith.constant 0 : index
    %c0_25 = arith.constant 0 : index
    %38 = vector.load %arg9[%c0_24, %c0_25] : memref<1x1xf32, #tpu.memory_space<vmem>>, vector<1x1xf32>
    %39 = vector.broadcast %38 : vector<1x1xf32> to vector<8x1xf32>
    %40 = arith.addf %37, %39 : vector<8x1xf32>
    %cst_26 = arith.constant -3.000000e+01 : f32
    %cst_27 = arith.constant 3.000000e+01 : f32
    %41 = vector.broadcast %cst_26 : f32 to vector<8x1xf32>
    %42 = arith.maximumf %41, %40 : vector<8x1xf32>
    %43 = vector.broadcast %cst_27 : f32 to vector<8x1xf32>
    %44 = arith.minimumf %43, %42 : vector<8x1xf32>
    %cst_28 = arith.constant 0.000000e+00 : f32
    %45 = vector.broadcast %cst_28 : f32 to vector<8x1xf32>
    %46 = arith.subf %45, %44 : vector<8x1xf32>
    %47 = math.exp %46 : vector<8x1xf32>
    %cst_29 = arith.constant 1.000000e+00 : f32
    %48 = vector.broadcast %cst_29 : f32 to vector<8x1xf32>
    %49 = arith.addf %48, %47 : vector<8x1xf32>
    %50 = tpu.reciprocal %49 {approx = true} : vector<8x1xf32> -> vector<8x1xf32>
    %c0_30 = arith.constant 0 : index
    %c0_31 = arith.constant 0 : index
    %51 = vector.load %arg10[%c0_30, %c0_31] : memref<8x1xf32, #tpu.memory_space<vmem>>, vector<8x1xf32>
    tpu.vector_store %arg10[%c0_30, %c0_31], %50 {strides = array<i32>} : memref<8x1xf32, #tpu.memory_space<vmem>>, vector<8x1xf32>,
    return
  }
  func.func @transform_0(%arg0: i32) -> (i32, i32) {
    %c0_i32 = arith.constant 0 : i32
    %c0_i32_0 = arith.constant 0 : i32
    return %arg0, %c0_i32 : i32, i32
  }
  func.func @transform_1(%arg0: i32) -> (i32, i32) {
    %c0_i32 = arith.constant 0 : i32
    %c0_i32_0 = arith.constant 0 : i32
    %c0_i32_1 = arith.constant 0 : i32
    return %c0_i32, %c0_i32_0 : i32, i32
  }
  func.func @transform_2(%arg0: i32) -> (i32, i32) {
    %c0_i32 = arith.constant 0 : i32
    %c0_i32_0 = arith.constant 0 : i32
    %c0_i32_1 = arith.constant 0 : i32
    return %c0_i32, %c0_i32_0 : i32, i32
  }
  func.func @transform_3(%arg0: i32) -> (i32, i32) {
    %c0_i32 = arith.constant 0 : i32
    %c0_i32_0 = arith.constant 0 : i32
    %c0_i32_1 = arith.constant 0 : i32
    return %c0_i32, %c0_i32_0 : i32, i32
  }
  func.func @transform_4(%arg0: i32) -> (i32, i32) {
    %c0_i32 = arith.constant 0 : i32
    %c0_i32_0 = arith.constant 0 : i32
    %c0_i32_1 = arith.constant 0 : i32
    return %c0_i32, %c0_i32_0 : i32, i32
  }
  func.func @transform_5(%arg0: i32) -> (i32, i32) {
    %c0_i32 = arith.constant 0 : i32
    %c0_i32_0 = arith.constant 0 : i32
    %c0_i32_1 = arith.constant 0 : i32
    return %c0_i32, %c0_i32_0 : i32, i32
  }
  func.func @transform_6(%arg0: i32) -> (i32, i32) {
    %c0_i32 = arith.constant 0 : i32
    %c0_i32_0 = arith.constant 0 : i32
    %c0_i32_1 = arith.constant 0 : i32
    return %c0_i32, %c0_i32_0 : i32, i32
  }
  func.func @transform_7(%arg0: i32) -> (i32, i32) {
    %c0_i32 = arith.constant 0 : i32
    %c0_i32_0 = arith.constant 0 : i32
    %c0_i32_1 = arith.constant 0 : i32
    return %c0_i32, %c0_i32_0 : i32, i32
  }
  func.func @transform_8(%arg0: i32) -> (i32, i32) {
    %c0_i32 = arith.constant 0 : i32
    %c0_i32_0 = arith.constant 0 : i32
    %c0_i32_1 = arith.constant 0 : i32
    return %c0_i32, %c0_i32_0 : i32, i32
  }
  func.func @transform_9(%arg0: i32) -> (i32, i32) {
    %c0_i32 = arith.constant 0 : i32
    %c0_i32_0 = arith.constant 0 : i32
    return %arg0, %c0_i32 : i32, i32
  }
}

</mosaic_0001>

<llo_original>
// kernel: discriminator_forward.1
$region0: #{discriminator_forward.1}
  #allocation0 [shape = 'u32[]', space=smem, size = 0x4, offset = 0x4, fixed_abs, tag = 'smem constant byte address 0x4 - core index']
  #allocation1 [shape = 'u32[72,128]{1,0:T(1,128)}', space=vmem, size = 0x9000, scoped, tag = 'internal scratch']
  #allocation2 [shape = 'f32[1,1]{1,0:T(1,128)S(1)}', space=vmem, size = 0x200, scoped, tag = 'scoped memory for discriminator_forward.1']
  %s0 = inlined_call_operand.vmem [shape: f32[8,784], index: 0, kind: input, shape index: {}]
  %s1 = inlined_call_operand.hbm [shape: bf16[784,1024], index: 1, kind: input, shape index: {}]
  %s2 = inlined_call_operand.hbm [shape: f32[1,1024], index: 2, kind: input, shape index: {}]
  %s3 = inlined_call_operand.hbm [shape: bf16[1024,512], index: 3, kind: input, shape index: {}]
  %s4 = inlined_call_operand.hbm [shape: f32[1,512], index: 4, kind: input, shape index: {}]
  %s5 = inlined_call_operand.hbm [shape: bf16[512,256], index: 5, kind: input, shape index: {}]
  %s6 = inlined_call_operand.hbm [shape: f32[1,256], index: 6, kind: input, shape index: {}]
  %s7 = inlined_call_operand.hbm [shape: bf16[256,128], index: 7, kind: input, shape index: {}]
  %s8 = inlined_call_operand.<no memory space> [shape: f32[1,1], index: 8, kind: input, shape index: {}]
  %s9 = inlined_call_operand.vmem [shape: f32[8,1], index: 9, kind: output, shape index: {}]
  %s10 = sld [smem:[#allocation0]]
  $region74: #{discriminator_forward.1} parent=0
    _
  %s12 = ssub.s32 1, %s10
  %s13 = scalar_select 0, %s12, %s10
  %v14 = vstv %s8
  %15 = vst [vmem:[#allocation2] sm:$0x1] %v14
  $region1: #{discriminator_forward.1} parent=0
    #allocation3 [shape = 'u8[1605632]{0}', space=vmem, size = 0x188000, scoped, tag = 'input window, operand 1, single buffered']
    #allocation4 [shape = 's32[1]{0}', space=sflag, size = 0x4, scoped, tag = 'scoped memory for discriminator_forward.1']
    #allocation5 [shape = 'u8[4096]{0}', space=vmem, size = 0x1000, scoped, tag = 'input window, operand 2, single buffered']
    #allocation6 [shape = 's32[1]{0}', space=sflag, size = 0x4, scoped, tag = 'scoped memory for discriminator_forward.1']
    #allocation7 [shape = 'u8[1048576]{0}', space=vmem, size = 0x100000, scoped, tag = 'input window, operand 3, single buffered']
    #allocation8 [shape = 'u8[2048]{0}', space=vmem, size = 0x800, scoped, tag = 'input window, operand 4, single buffered']
    #allocation9 [shape = 's32[1]{0}', space=sflag, size = 0x4, scoped, tag = 'scoped memory for discriminator_forward.1']
    #allocation10 [shape = 'u8[262144]{0}', space=vmem, size = 0x40000, scoped, tag = 'input window, operand 5, single buffered']
    #allocation11 [shape = 'u8[1024]{0}', space=vmem, size = 0x400, scoped, tag = 'input window, operand 6, single buffered']
    #allocation12 [shape = 's32[1]{0}', space=sflag, size = 0x4, scoped, tag = 'scoped memory for discriminator_forward.1']
    #allocation13 [shape = 'u8[65536]{0}', space=vmem, size = 0x10000, scoped, tag = 'input window, operand 7, single buffered']
    %16 = vsyncpa [#allocation4], 0
    %17 = vsyncpa [#allocation6], 0
    %18 = vsyncpa [#allocation9], 0
    %19 = vsyncpa [#allocation12], 0
    // Predicated region
    $region2: #{discriminator_forward.1} parent=1 // pred_check
      _
    $region3: #{discriminator_forward.1} parent=1 // pred_check_branch
      %21 = sbr.rel (0) target = $region5
    $region4: #{discriminator_forward.1} parent=1 // pred_region
      _
    $region5: #{discriminator_forward.1} parent=1 // pred_fallthru
      _
    // Predicated region
    $region6: #{discriminator_forward.1} parent=1 // pred_check
      _
    $region7: #{discriminator_forward.1} parent=1 // pred_check_branch
      %23 = sbr.rel (0) target = $region9
    $region8: #{discriminator_forward.1} parent=1 // pred_region
      %25 = vsyncadd [#allocation4], 0
      %s26 = sshll.u32 %s1, 4
      %s27 = int_to_ptr.hbm [resolvable:$true] %s26
      %s28 = sshll.u32 [#allocation3], 4
      %s29 = int_to_ptr.vmem [resolvable:$true] %s28
      %34 = dma.hbm_to_vmem [thread:$0]  %s27, 50176, %s29, [#allocation4], 512, 512, 32
    $region9: #{discriminator_forward.1} parent=1 // pred_fallthru
      _
    // Predicated region
    $region10: #{discriminator_forward.1} parent=1 // pred_check
      _
    $region11: #{discriminator_forward.1} parent=1 // pred_check_branch
      %36 = sbr.rel (0) target = $region13
    $region12: #{discriminator_forward.1} parent=1 // pred_region
      %38 = vsyncadd [#allocation6], 0
      %s40 = sshll.u32 %s2, 4
      %s41 = int_to_ptr.hbm [resolvable:$true] %s40
      %s42 = sshll.u32 [#allocation5], 4
      %s43 = int_to_ptr.vmem [resolvable:$true] %s42
      %45 = dma.hbm_to_vmem [thread:$0]  %s41, 128, %s43, [#allocation6]
    $region13: #{discriminator_forward.1} parent=1 // pred_fallthru
      _
    // Predicated region
    $region14: #{discriminator_forward.1} parent=1 // pred_check
      _
    $region15: #{discriminator_forward.1} parent=1 // pred_check_branch
      %47 = sbr.rel (0) target = $region17
    $region16: #{discriminator_forward.1} parent=1 // pred_region
      %49 = vsyncadd [#allocation6], 0
      %s50 = sshll.u32 %s3, 4
      %s51 = int_to_ptr.hbm [resolvable:$true] %s50
      %s52 = sshll.u32 [#allocation7], 4
      %s53 = int_to_ptr.vmem [resolvable:$true] %s52
      %58 = dma.hbm_to_vmem [thread:$0]  %s51, 32768, %s53, [#allocation6], 256, 256, 16
    $region17: #{discriminator_forward.1} parent=1 // pred_fallthru
      _
    // Predicated region
    $region18: #{discriminator_forward.1} parent=1 // pred_check
      _
    $region19: #{discriminator_forward.1} parent=1 // pred_check_branch
      %60 = sbr.rel (0) target = $region21
    $region20: #{discriminator_forward.1} parent=1 // pred_region
      %62 = vsyncadd [#allocation9], 0
      %s64 = sshll.u32 %s4, 4
      %s65 = int_to_ptr.hbm [resolvable:$true] %s64
      %s66 = sshll.u32 [#allocation8], 4
      %s67 = int_to_ptr.vmem [resolvable:$true] %s66
      %69 = dma.hbm_to_vmem [thread:$0]  %s65, 64, %s67, [#allocation9]
    $region21: #{discriminator_forward.1} parent=1 // pred_fallthru
      _
    // Predicated region
    $region22: #{discriminator_forward.1} parent=1 // pred_check
      _
    $region23: #{discriminator_forward.1} parent=1 // pred_check_branch
      %71 = sbr.rel (0) target = $region25
    $region24: #{discriminator_forward.1} parent=1 // pred_region
      %73 = vsyncadd [#allocation9], 0
      %s74 = sshll.u32 %s5, 4
      %s75 = int_to_ptr.hbm [resolvable:$true] %s74
      %s76 = sshll.u32 [#allocation10], 4
      %s77 = int_to_ptr.vmem [resolvable:$true] %s76
      %82 = dma.hbm_to_vmem [thread:$0]  %s75, 8192, %s77, [#allocation9], 128, 128, 8
    $region25: #{discriminator_forward.1} parent=1 // pred_fallthru
      _
    // Predicated region
    $region26: #{discriminator_forward.1} parent=1 // pred_check
      _
    $region27: #{discriminator_forward.1} parent=1 // pred_check_branch
      %84 = sbr.rel (0) target = $region29
    $region28: #{discriminator_forward.1} parent=1 // pred_region
      %86 = vsyncadd [#allocation12], 0
      %s88 = sshll.u32 %s6, 4
      %s89 = int_to_ptr.hbm [resolvable:$true] %s88
      %s90 = sshll.u32 [#allocation11], 4
      %s91 = int_to_ptr.vmem [resolvable:$true] %s90
      %93 = dma.hbm_to_vmem [thread:$0]  %s89, 32, %s91, [#allocation12]
    $region29: #{discriminator_forward.1} parent=1 // pred_fallthru
      _
    // Predicated region
    $region30: #{discriminator_forward.1} parent=1 // pred_check
      _
    $region31: #{discriminator_forward.1} parent=1 // pred_check_branch
      %95 = sbr.rel (0) target = $region33
    $region32: #{discriminator_forward.1} parent=1 // pred_region
      %97 = vsyncadd [#allocation12], 0
      %s98 = sshll.u32 %s7, 4
      %s99 = int_to_ptr.hbm [resolvable:$true] %s98
      %s100 = sshll.u32 [#allocation13], 4
      %s101 = int_to_ptr.vmem [resolvable:$true] %s100
      %106 = dma.hbm_to_vmem [thread:$0]  %s99, 2048, %s101, [#allocation12], 64, 64, 4
    $region33: #{discriminator_forward.1} parent=1 // pred_fallthru
      _
    // Predicated region
    $region34: #{discriminator_forward.1} parent=1 // pred_check
      _
    $region35: #{discriminator_forward.1} parent=1 // pred_check_branch
      %108 = sbr.rel (0) target = $region37
    $region36: #{discriminator_forward.1} parent=1 // pred_region
      _
    $region37: #{discriminator_forward.1} parent=1 // pred_fallthru
      _
    // Predicated region
    $region38: #{discriminator_forward.1} parent=1 // pred_check
      _
    $region39: #{discriminator_forward.1} parent=1 // pred_check_branch
      %110 = sbr.rel (0) target = $region41
    $region40: #{discriminator_forward.1} parent=1 // pred_region
      %112 = dma.done [#allocation4], 50176
    $region41: #{discriminator_forward.1} parent=1 // pred_fallthru
      _
    // Predicated region
    $region42: #{discriminator_forward.1} parent=1 // pred_check
      _
    $region43: #{discriminator_forward.1} parent=1 // pred_check_branch
      %114 = sbr.rel (0) target = $region45
    $region44: #{discriminator_forward.1} parent=1 // pred_region
      %116 = dma.done [#allocation6], 128
    $region45: #{discriminator_forward.1} parent=1 // pred_fallthru
      _
    // Predicated region
    $region46: #{discriminator_forward.1} parent=1 // pred_check
      _
    $region47: #{discriminator_forward.1} parent=1 // pred_check_branch
      %118 = sbr.rel (0) target = $region49
    $region48: #{discriminator_forward.1} parent=1 // pred_region
      %120 = dma.done [#allocation6], 32768
    $region49: #{discriminator_forward.1} parent=1 // pred_fallthru
      _
    // Predicated region
    $region50: #{discriminator_forward.1} parent=1 // pred_check
      _
    $region51: #{discriminator_forward.1} parent=1 // pred_check_branch
      %122 = sbr.rel (0) target = $region53
    $region52: #{discriminator_forward.1} parent=1 // pred_region
      %124 = dma.done [#allocation9], 64
    $region53: #{discriminator_forward.1} parent=1 // pred_fallthru
      _
    // Predicated region
    $region54: #{discriminator_forward.1} parent=1 // pred_check
      _
    $region55: #{discriminator_forward.1} parent=1 // pred_check_branch
      %126 = sbr.rel (0) target = $region57
    $region56: #{discriminator_forward.1} parent=1 // pred_region
      %128 = dma.done [#allocation9], 8192
    $region57: #{discriminator_forward.1} parent=1 // pred_fallthru
      _
    // Predicated region
    $region58: #{discriminator_forward.1} parent=1 // pred_check
      _
    $region59: #{discriminator_forward.1} parent=1 // pred_check_branch
      %130 = sbr.rel (0) target = $region61
    $region60: #{discriminator_forward.1} parent=1 // pred_region
      %132 = dma.done [#allocation12], 32
    $region61: #{discriminator_forward.1} parent=1 // pred_fallthru
      _
    // Predicated region
    $region62: #{discriminator_forward.1} parent=1 // pred_check
      _
    $region63: #{discriminator_forward.1} parent=1 // pred_check_branch
      %134 = sbr.rel (0) target = $region65
    $region64: #{discriminator_forward.1} parent=1 // pred_region
      %136 = dma.done [#allocation12], 2048
    $region65: #{discriminator_forward.1} parent=1 // pred_fallthru
      _
    %v138 = vld [vmem:[%s0] sm:$0xff]
    %v139 = vld [vmem:[%s0 + $0x8] sm:$0xff]
    %v140 = vld [vmem:[%s0 + $0x10] sm:$0xff]
    %v141 = vld [vmem:[%s0 + $0x18] sm:$0xff]
    %v142 = vld [vmem:[%s0 + $0x20] sm:$0xff]
    %v143 = vld [vmem:[%s0 + $0x28] sm:$0xff]
    %v144 = vld [vmem:[%s0 + $0x30] sm:$0xff]
    %v145 = vpack.c.bf16 %v138, %v138
    %v146 = vpack.c.bf16 %v139, %v139
    %v147 = vpack.c.bf16 %v140, %v140
    %v148 = vpack.c.bf16 %v141, %v141
    %v149 = vpack.c.bf16 %v142, %v142
    %v150 = vpack.c.bf16 %v143, %v143
    %v151 = vpack.c.bf16 %v144, %v144
    %v152 = vld [vmem:[#allocation3] sm:$0xff]
    %v153 = vld [vmem:[#allocation3 + $0x8] sm:$0xff]
    %v154 = vld [vmem:[#allocation3 + $0x10] sm:$0xff]
    %v155 = vld [vmem:[#allocation3 + $0x18] sm:$0xff]
    %v156 = vld [vmem:[#allocation3 + $0x20] sm:$0xff]
    %v157 = vld [vmem:[#allocation3 + $0x28] sm:$0xff]
    %v158 = vld [vmem:[#allocation3 + $0x30] sm:$0xff]
    %v159 = vld [vmem:[#allocation3 + $0x38] sm:$0xff]
    %v160 = vld [vmem:[#allocation3 + $0x40] sm:$0xff]
    %v161 = vld [vmem:[#allocation3 + $0x48] sm:$0xff]
    %v162 = vld [vmem:[#allocation3 + $0x50] sm:$0xff]
    %v163 = vld [vmem:[#allocation3 + $0x58] sm:$0xff]
    %v164 = vld [vmem:[#allocation3 + $0x60] sm:$0xff]
    %v165 = vld [vmem:[#allocation3 + $0x68] sm:$0xff]
    %v166 = vld [vmem:[#allocation3 + $0x70] sm:$0xff]
    %v167 = vld [vmem:[#allocation3 + $0x78] sm:$0xff]
    %v168 = vld [vmem:[#allocation3 + $0x80] sm:$0xff]
    %v169 = vld [vmem:[#allocation3 + $0x88] sm:$0xff]
    %v170 = vld [vmem:[#allocation3 + $0x90] sm:$0xff]
    %v171 = vld [vmem:[#allocation3 + $0x98] sm:$0xff]
    %v172 = vld [vmem:[#allocation3 + $0xa0] sm:$0xff]
    %v173 = vld [vmem:[#allocation3 + $0xa8] sm:$0xff]
    %v174 = vld [vmem:[#allocation3 + $0xb0] sm:$0xff]
    %v175 = vld [vmem:[#allocation3 + $0xb8] sm:$0xff]
    %v176 = vld [vmem:[#allocation3 + $0xc0] sm:$0xff]
    %v177 = vld [vmem:[#allocation3 + $0xc8] sm:$0xff]
    %v178 = vld [vmem:[#allocation3 + $0xd0] sm:$0xff]
    %v179 = vld [vmem:[#allocation3 + $0xd8] sm:$0xff]
    %v180 = vld [vmem:[#allocation3 + $0xe0] sm:$0xff]
    %v181 = vld [vmem:[#allocation3 + $0xe8] sm:$0xff]
    %v182 = vld [vmem:[#allocation3 + $0xf0] sm:$0xff]
    %v183 = vld [vmem:[#allocation3 + $0xf8] sm:$0xff]
    %v184 = vld [vmem:[#allocation3 + $0x100] sm:$0xff]
    %v185 = vld [vmem:[#allocation3 + $0x108] sm:$0xff]
    %v186 = vld [vmem:[#allocation3 + $0x110] sm:$0xff]
    %v187 = vld [vmem:[#allocation3 + $0x118] sm:$0xff]
    %v188 = vld [vmem:[#allocation3 + $0x120] sm:$0xff]
    %v189 = vld [vmem:[#allocation3 + $0x128] sm:$0xff]
    %v190 = vld [vmem:[#allocation3 + $0x130] sm:$0xff]
    %v191 = vld [vmem:[#allocation3 + $0x138] sm:$0xff]
    %v192 = vld [vmem:[#allocation3 + $0x140] sm:$0xff]
    %v193 = vld [vmem:[#allocation3 + $0x148] sm:$0xff]
    %v194 = vld [vmem:[#allocation3 + $0x150] sm:$0xff]
    %v195 = vld [vmem:[#allocation3 + $0x158] sm:$0xff]
    %v196 = vld [vmem:[#allocation3 + $0x160] sm:$0xff]
    %v197 = vld [vmem:[#allocation3 + $0x168] sm:$0xff]
    %v198 = vld [vmem:[#allocation3 + $0x170] sm:$0xff]
    %v199 = vld [vmem:[#allocation3 + $0x178] sm:$0xff]
    %v200 = vld [vmem:[#allocation3 + $0x180] sm:$0xff]
    %v201 = vld [vmem:[#allocation3 + $0x188] sm:$0xff]
    %v202 = vld [vmem:[#allocation3 + $0x190] sm:$0xff]
    %v203 = vld [vmem:[#allocation3 + $0x198] sm:$0xff]
    %v204 = vld [vmem:[#allocation3 + $0x1a0] sm:$0xff]
    %v205 = vld [vmem:[#allocation3 + $0x1a8] sm:$0xff]
    %v206 = vld [vmem:[#allocation3 + $0x1b0] sm:$0xff]
    %v207 = vld [vmem:[#allocation3 + $0x1b8] sm:$0xff]
    %v208 = vld [vmem:[#allocation3 + $0x1c0] sm:$0xff]
    %v209 = vld [vmem:[#allocation3 + $0x1c8] sm:$0xff]
    %v210 = vld [vmem:[#allocation3 + $0x1d0] sm:$0xff]
    %v211 = vld [vmem:[#allocation3 + $0x1d8] sm:$0xff]
    %v212 = vld [vmem:[#allocation3 + $0x1e0] sm:$0xff]
    %v213 = vld [vmem:[#allocation3 + $0x1e8] sm:$0xff]
    %v214 = vld [vmem:[#allocation3 + $0x1f0] sm:$0xff]
    %v215 = vld [vmem:[#allocation3 + $0x1f8] sm:$0xff]
    %v216 = vld [vmem:[#allocation3 + $0x200] sm:$0xff]
    %v217 = vld [vmem:[#allocation3 + $0x208] sm:$0xff]
    %v218 = vld [vmem:[#allocation3 + $0x210] sm:$0xff]
    %v219 = vld [vmem:[#allocation3 + $0x218] sm:$0xff]
    %v220 = vld [vmem:[#allocation3 + $0x220] sm:$0xff]
    %v221 = vld [vmem:[#allocation3 + $0x228] sm:$0xff]
    %v222 = vld [vmem:[#allocation3 + $0x230] sm:$0xff]
    %v223 = vld [vmem:[#allocation3 + $0x238] sm:$0xff]
    %v224 = vld [vmem:[#allocation3 + $0x240] sm:$0xff]
    %v225 = vld [vmem:[#allocation3 + $0x248] sm:$0xff]
    %v226 = vld [vmem:[#allocation3 + $0x250] sm:$0xff]
    %v227 = vld [vmem:[#allocation3 + $0x258] sm:$0xff]
    %v228 = vld [vmem:[#allocation3 + $0x260] sm:$0xff]
    %v229 = vld [vmem:[#allocation3 + $0x268] sm:$0xff]
    %v230 = vld [vmem:[#allocation3 + $0x270] sm:$0xff]
    %v231 = vld [vmem:[#allocation3 + $0x278] sm:$0xff]
    %v232 = vld [vmem:[#allocation3 + $0x280] sm:$0xff]
    %v233 = vld [vmem:[#allocation3 + $0x288] sm:$0xff]
    %v234 = vld [vmem:[#allocation3 + $0x290] sm:$0xff]
    %v235 = vld [vmem:[#allocation3 + $0x298] sm:$0xff]
    %v236 = vld [vmem:[#allocation3 + $0x2a0] sm:$0xff]
    %v237 = vld [vmem:[#allocation3 + $0x2a8] sm:$0xff]
    %v238 = vld [vmem:[#allocation3 + $0x2b0] sm:$0xff]
    %v239 = vld [vmem:[#allocation3 + $0x2b8] sm:$0xff]
    %v240 = vld [vmem:[#allocation3 + $0x2c0] sm:$0xff]
    %v241 = vld [vmem:[#allocation3 + $0x2c8] sm:$0xff]
    %v242 = vld [vmem:[#allocation3 + $0x2d0] sm:$0xff]
    %v243 = vld [vmem:[#allocation3 + $0x2d8] sm:$0xff]
    %v244 = vld [vmem:[#allocation3 + $0x2e0] sm:$0xff]
    %v245 = vld [vmem:[#allocation3 + $0x2e8] sm:$0xff]
    %v246 = vld [vmem:[#allocation3 + $0x2f0] sm:$0xff]
    %v247 = vld [vmem:[#allocation3 + $0x2f8] sm:$0xff]
    %v248 = vld [vmem:[#allocation3 + $0x300] sm:$0xff]
    %v249 = vld [vmem:[#allocation3 + $0x308] sm:$0xff]
    %v250 = vld [vmem:[#allocation3 + $0x310] sm:$0xff]
    %v251 = vld [vmem:[#allocation3 + $0x318] sm:$0xff]
    %v252 = vld [vmem:[#allocation3 + $0x320] sm:$0xff]
    %v253 = vld [vmem:[#allocation3 + $0x328] sm:$0xff]
    %v254 = vld [vmem:[#allocation3 + $0x330] sm:$0xff]
    %v255 = vld [vmem:[#allocation3 + $0x338] sm:$0xff]
    %v256 = vld [vmem:[#allocation3 + $0x340] sm:$0xff]
    %v257 = vld [vmem:[#allocation3 + $0x348] sm:$0xff]
    %v258 = vld [vmem:[#allocation3 + $0x350] sm:$0xff]
    %v259 = vld [vmem:[#allocation3 + $0x358] sm:$0xff]
    %v260 = vld [vmem:[#allocation3 + $0x360] sm:$0xff]
    %v261 = vld [vmem:[#allocation3 + $0x368] sm:$0xff]
    %v262 = vld [vmem:[#allocation3 + $0x370] sm:$0xff]
    %v263 = vld [vmem:[#allocation3 + $0x378] sm:$0xff]
    %v264 = vld [vmem:[#allocation3 + $0x380] sm:$0xff]
    %v265 = vld [vmem:[#allocation3 + $0x388] sm:$0xff]
    %v266 = vld [vmem:[#allocation3 + $0x390] sm:$0xff]
    %v267 = vld [vmem:[#allocation3 + $0x398] sm:$0xff]
    %v268 = vld [vmem:[#allocation3 + $0x3a0] sm:$0xff]
    %v269 = vld [vmem:[#allocation3 + $0x3a8] sm:$0xff]
    %v270 = vld [vmem:[#allocation3 + $0x3b0] sm:$0xff]
    %v271 = vld [vmem:[#allocation3 + $0x3b8] sm:$0xff]
    %v272 = vld [vmem:[#allocation3 + $0x3c0] sm:$0xff]
    %v273 = vld [vmem:[#allocation3 + $0x3c8] sm:$0xff]
    %v274 = vld [vmem:[#allocation3 + $0x3d0] sm:$0xff]
    %v275 = vld [vmem:[#allocation3 + $0x3d8] sm:$0xff]
    %v276 = vld [vmem:[#allocation3 + $0x3e0] sm:$0xff]
    %v277 = vld [vmem:[#allocation3 + $0x3e8] sm:$0xff]
    %v278 = vld [vmem:[#allocation3 + $0x3f0] sm:$0xff]
    %v279 = vld [vmem:[#allocation3 + $0x3f8] sm:$0xff]
    %v280 = vld [vmem:[#allocation3 + $0x400] sm:$0xff]
    %v281 = vld [vmem:[#allocation3 + $0x408] sm:$0xff]
    %v282 = vld [vmem:[#allocation3 + $0x410] sm:$0xff]
    %v283 = vld [vmem:[#allocation3 + $0x418] sm:$0xff]
    %v284 = vld [vmem:[#allocation3 + $0x420] sm:$0xff]
    %v285 = vld [vmem:[#allocation3 + $0x428] sm:$0xff]
    %v286 = vld [vmem:[#allocation3 + $0x430] sm:$0xff]
    %v287 = vld [vmem:[#allocation3 + $0x438] sm:$0xff]
    %v288 = vld [vmem:[#allocation3 + $0x440] sm:$0xff]
    %v289 = vld [vmem:[#allocation3 + $0x448] sm:$0xff]
    %v290 = vld [vmem:[#allocation3 + $0x450] sm:$0xff]
    %v291 = vld [vmem:[#allocation3 + $0x458] sm:$0xff]
    %v292 = vld [vmem:[#allocation3 + $0x460] sm:$0xff]
    %v293 = vld [vmem:[#allocation3 + $0x468] sm:$0xff]
    %v294 = vld [vmem:[#allocation3 + $0x470] sm:$0xff]
    %v295 = vld [vmem:[#allocation3 + $0x478] sm:$0xff]
    %v296 = vld [vmem:[#allocation3 + $0x480] sm:$0xff]
    %v297 = vld [vmem:[#allocation3 + $0x488] sm:$0xff]
    %v298 = vld [vmem:[#allocation3 + $0x490] sm:$0xff]
    %v299 = vld [vmem:[#allocation3 + $0x498] sm:$0xff]
    %v300 = vld [vmem:[#allocation3 + $0x4a0] sm:$0xff]
    %v301 = vld [vmem:[#allocation3 + $0x4a8] sm:$0xff]
    %v302 = vld [vmem:[#allocation3 + $0x4b0] sm:$0xff]
    %v303 = vld [vmem:[#allocation3 + $0x4b8] sm:$0xff]
    %v304 = vld [vmem:[#allocation3 + $0x4c0] sm:$0xff]
    %v305 = vld [vmem:[#allocation3 + $0x4c8] sm:$0xff]
    %v306 = vld [vmem:[#allocation3 + $0x4d0] sm:$0xff]
    %v307 = vld [vmem:[#allocation3 + $0x4d8] sm:$0xff]
    %v308 = vld [vmem:[#allocation3 + $0x4e0] sm:$0xff]
    %v309 = vld [vmem:[#allocation3 + $0x4e8] sm:$0xff]
    %v310 = vld [vmem:[#allocation3 + $0x4f0] sm:$0xff]
    %v311 = vld [vmem:[#allocation3 + $0x4f8] sm:$0xff]
    %v312 = vld [vmem:[#allocation3 + $0x500] sm:$0xff]
    %v313 = vld [vmem:[#allocation3 + $0x508] sm:$0xff]
    %v314 = vld [vmem:[#allocation3 + $0x510] sm:$0xff]
    %v315 = vld [vmem:[#allocation3 + $0x518] sm:$0xff]
    %v316 = vld [vmem:[#allocation3 + $0x520] sm:$0xff]
    %v317 = vld [vmem:[#allocation3 + $0x528] sm:$0xff]
    %v318 = vld [vmem:[#allocation3 + $0x530] sm:$0xff]
    %v319 = vld [vmem:[#allocation3 + $0x538] sm:$0xff]
    %v320 = vld [vmem:[#allocation3 + $0x540] sm:$0xff]
    %v321 = vld [vmem:[#allocation3 + $0x548] sm:$0xff]
    %v322 = vld [vmem:[#allocation3 + $0x550] sm:$0xff]
    %v323 = vld [vmem:[#allocation3 + $0x558] sm:$0xff]
    %v324 = vld [vmem:[#allocation3 + $0x560] sm:$0xff]
    %v325 = vld [vmem:[#allocation3 + $0x568] sm:$0xff]
    %v326 = vld [vmem:[#allocation3 + $0x570] sm:$0xff]
    %v327 = vld [vmem:[#allocation3 + $0x578] sm:$0xff]
    %v328 = vld [vmem:[#allocation3 + $0x580] sm:$0xff]
    %v329 = vld [vmem:[#allocation3 + $0x588] sm:$0xff]
    %v330 = vld [vmem:[#allocation3 + $0x590] sm:$0xff]
    %v331 = vld [vmem:[#allocation3 + $0x598] sm:$0xff]
    %v332 = vld [vmem:[#allocation3 + $0x5a0] sm:$0xff]
    %v333 = vld [vmem:[#allocation3 + $0x5a8] sm:$0xff]
    %v334 = vld [vmem:[#allocation3 + $0x5b0] sm:$0xff]
    %v335 = vld [vmem:[#allocation3 + $0x5b8] sm:$0xff]
    %v336 = vld [vmem:[#allocation3 + $0x5c0] sm:$0xff]
    %v337 = vld [vmem:[#allocation3 + $0x5c8] sm:$0xff]
    %v338 = vld [vmem:[#allocation3 + $0x5d0] sm:$0xff]
    %v339 = vld [vmem:[#allocation3 + $0x5d8] sm:$0xff]
    %v340 = vld [vmem:[#allocation3 + $0x5e0] sm:$0xff]
    %v341 = vld [vmem:[#allocation3 + $0x5e8] sm:$0xff]
    %v342 = vld [vmem:[#allocation3 + $0x5f0] sm:$0xff]
    %v343 = vld [vmem:[#allocation3 + $0x5f8] sm:$0xff]
    %v344 = vld [vmem:[#allocation3 + $0x600] sm:$0xff]
    %v345 = vld [vmem:[#allocation3 + $0x608] sm:$0xff]
    %v346 = vld [vmem:[#allocation3 + $0x610] sm:$0xff]
    %v347 = vld [vmem:[#allocation3 + $0x618] sm:$0xff]
    %v348 = vld [vmem:[#allocation3 + $0x620] sm:$0xff]
    %v349 = vld [vmem:[#allocation3 + $0x628] sm:$0xff]
    %v350 = vld [vmem:[#allocation3 + $0x630] sm:$0xff]
    %v351 = vld [vmem:[#allocation3 + $0x638] sm:$0xff]
    %v352 = vld [vmem:[#allocation3 + $0x640] sm:$0xff]
    %v353 = vld [vmem:[#allocation3 + $0x648] sm:$0xff]
    %v354 = vld [vmem:[#allocation3 + $0x650] sm:$0xff]
    %v355 = vld [vmem:[#allocation3 + $0x658] sm:$0xff]
    %v356 = vld [vmem:[#allocation3 + $0x660] sm:$0xff]
    %v357 = vld [vmem:[#allocation3 + $0x668] sm:$0xff]
    %v358 = vld [vmem:[#allocation3 + $0x670] sm:$0xff]
    %v359 = vld [vmem:[#allocation3 + $0x678] sm:$0xff]
    %v360 = vld [vmem:[#allocation3 + $0x680] sm:$0xff]
    %v361 = vld [vmem:[#allocation3 + $0x688] sm:$0xff]
    %v362 = vld [vmem:[#allocation3 + $0x690] sm:$0xff]
    %v363 = vld [vmem:[#allocation3 + $0x698] sm:$0xff]
    %v364 = vld [vmem:[#allocation3 + $0x6a0] sm:$0xff]
    %v365 = vld [vmem:[#allocation3 + $0x6a8] sm:$0xff]
    %v366 = vld [vmem:[#allocation3 + $0x6b0] sm:$0xff]
    %v367 = vld [vmem:[#allocation3 + $0x6b8] sm:$0xff]
    %v368 = vld [vmem:[#allocation3 + $0x6c0] sm:$0xff]
    %v369 = vld [vmem:[#allocation3 + $0x6c8] sm:$0xff]
    %v370 = vld [vmem:[#allocation3 + $0x6d0] sm:$0xff]
    %v371 = vld [vmem:[#allocation3 + $0x6d8] sm:$0xff]
    %v372 = vld [vmem:[#allocation3 + $0x6e0] sm:$0xff]
    %v373 = vld [vmem:[#allocation3 + $0x6e8] sm:$0xff]
    %v374 = vld [vmem:[#allocation3 + $0x6f0] sm:$0xff]
    %v375 = vld [vmem:[#allocation3 + $0x6f8] sm:$0xff]
    %v376 = vld [vmem:[#allocation3 + $0x700] sm:$0xff]
    %v377 = vld [vmem:[#allocation3 + $0x708] sm:$0xff]
    %v378 = vld [vmem:[#allocation3 + $0x710] sm:$0xff]
    %v379 = vld [vmem:[#allocation3 + $0x718] sm:$0xff]
    %v380 = vld [vmem:[#allocation3 + $0x720] sm:$0xff]
    %v381 = vld [vmem:[#allocation3 + $0x728] sm:$0xff]
    %v382 = vld [vmem:[#allocation3 + $0x730] sm:$0xff]
    %v383 = vld [vmem:[#allocation3 + $0x738] sm:$0xff]
    %v384 = vld [vmem:[#allocation3 + $0x740] sm:$0xff]
    %v385 = vld [vmem:[#allocation3 + $0x748] sm:$0xff]
    %v386 = vld [vmem:[#allocation3 + $0x750] sm:$0xff]
    %v387 = vld [vmem:[#allocation3 + $0x758] sm:$0xff]
    %v388 = vld [vmem:[#allocation3 + $0x760] sm:$0xff]
    %v389 = vld [vmem:[#allocation3 + $0x768] sm:$0xff]
    %v390 = vld [vmem:[#allocation3 + $0x770] sm:$0xff]
    %v391 = vld [vmem:[#allocation3 + $0x778] sm:$0xff]
    %v392 = vld [vmem:[#allocation3 + $0x780] sm:$0xff]
    %v393 = vld [vmem:[#allocation3 + $0x788] sm:$0xff]
    %v394 = vld [vmem:[#allocation3 + $0x790] sm:$0xff]
    %v395 = vld [vmem:[#allocation3 + $0x798] sm:$0xff]
    %v396 = vld [vmem:[#allocation3 + $0x7a0] sm:$0xff]
    %v397 = vld [vmem:[#allocation3 + $0x7a8] sm:$0xff]
    %v398 = vld [vmem:[#allocation3 + $0x7b0] sm:$0xff]
    %v399 = vld [vmem:[#allocation3 + $0x7b8] sm:$0xff]
    %v400 = vld [vmem:[#allocation3 + $0x7c0] sm:$0xff]
    %v401 = vld [vmem:[#allocation3 + $0x7c8] sm:$0xff]
    %v402 = vld [vmem:[#allocation3 + $0x7d0] sm:$0xff]
    %v403 = vld [vmem:[#allocation3 + $0x7d8] sm:$0xff]
    %v404 = vld [vmem:[#allocation3 + $0x7e0] sm:$0xff]
    %v405 = vld [vmem:[#allocation3 + $0x7e8] sm:$0xff]
    %v406 = vld [vmem:[#allocation3 + $0x7f0] sm:$0xff]
    %v407 = vld [vmem:[#allocation3 + $0x7f8] sm:$0xff]
    %v408 = vld [vmem:[#allocation3 + $0x800] sm:$0xff]
    %v409 = vld [vmem:[#allocation3 + $0x808] sm:$0xff]
    %v410 = vld [vmem:[#allocation3 + $0x810] sm:$0xff]
    %v411 = vld [vmem:[#allocation3 + $0x818] sm:$0xff]
    %v412 = vld [vmem:[#allocation3 + $0x820] sm:$0xff]
    %v413 = vld [vmem:[#allocation3 + $0x828] sm:$0xff]
    %v414 = vld [vmem:[#allocation3 + $0x830] sm:$0xff]
    %v415 = vld [vmem:[#allocation3 + $0x838] sm:$0xff]
    %v416 = vld [vmem:[#allocation3 + $0x840] sm:$0xff]
    %v417 = vld [vmem:[#allocation3 + $0x848] sm:$0xff]
    %v418 = vld [vmem:[#allocation3 + $0x850] sm:$0xff]
    %v419 = vld [vmem:[#allocation3 + $0x858] sm:$0xff]
    %v420 = vld [vmem:[#allocation3 + $0x860] sm:$0xff]
    %v421 = vld [vmem:[#allocation3 + $0x868] sm:$0xff]
    %v422 = vld [vmem:[#allocation3 + $0x870] sm:$0xff]
    %v423 = vld [vmem:[#allocation3 + $0x878] sm:$0xff]
    %v424 = vld [vmem:[#allocation3 + $0x880] sm:$0xff]
    %v425 = vld [vmem:[#allocation3 + $0x888] sm:$0xff]
    %v426 = vld [vmem:[#allocation3 + $0x890] sm:$0xff]
    %v427 = vld [vmem:[#allocation3 + $0x898] sm:$0xff]
    %v428 = vld [vmem:[#allocation3 + $0x8a0] sm:$0xff]
    %v429 = vld [vmem:[#allocation3 + $0x8a8] sm:$0xff]
    %v430 = vld [vmem:[#allocation3 + $0x8b0] sm:$0xff]
    %v431 = vld [vmem:[#allocation3 + $0x8b8] sm:$0xff]
    %v432 = vld [vmem:[#allocation3 + $0x8c0] sm:$0xff]
    %v433 = vld [vmem:[#allocation3 + $0x8c8] sm:$0xff]
    %v434 = vld [vmem:[#allocation3 + $0x8d0] sm:$0xff]
    %v435 = vld [vmem:[#allocation3 + $0x8d8] sm:$0xff]
    %v436 = vld [vmem:[#allocation3 + $0x8e0] sm:$0xff]
    %v437 = vld [vmem:[#allocation3 + $0x8e8] sm:$0xff]
    %v438 = vld [vmem:[#allocation3 + $0x8f0] sm:$0xff]
    %v439 = vld [vmem:[#allocation3 + $0x8f8] sm:$0xff]
    %v440 = vld [vmem:[#allocation3 + $0x900] sm:$0xff]
    %v441 = vld [vmem:[#allocation3 + $0x908] sm:$0xff]
    %v442 = vld [vmem:[#allocation3 + $0x910] sm:$0xff]
    %v443 = vld [vmem:[#allocation3 + $0x918] sm:$0xff]
    %v444 = vld [vmem:[#allocation3 + $0x920] sm:$0xff]
    %v445 = vld [vmem:[#allocation3 + $0x928] sm:$0xff]
    %v446 = vld [vmem:[#allocation3 + $0x930] sm:$0xff]
    %v447 = vld [vmem:[#allocation3 + $0x938] sm:$0xff]
    %v448 = vld [vmem:[#allocation3 + $0x940] sm:$0xff]
    %v449 = vld [vmem:[#allocation3 + $0x948] sm:$0xff]
    %v450 = vld [vmem:[#allocation3 + $0x950] sm:$0xff]
    %v451 = vld [vmem:[#allocation3 + $0x958] sm:$0xff]
    %v452 = vld [vmem:[#allocation3 + $0x960] sm:$0xff]
    %v453 = vld [vmem:[#allocation3 + $0x968] sm:$0xff]
    %v454 = vld [vmem:[#allocation3 + $0x970] sm:$0xff]
    %v455 = vld [vmem:[#allocation3 + $0x978] sm:$0xff]
    %v456 = vld [vmem:[#allocation3 + $0x980] sm:$0xff]
    %v457 = vld [vmem:[#allocation3 + $0x988] sm:$0xff]
    %v458 = vld [vmem:[#allocation3 + $0x990] sm:$0xff]
    %v459 = vld [vmem:[#allocation3 + $0x998] sm:$0xff]
    %v460 = vld [vmem:[#allocation3 + $0x9a0] sm:$0xff]
    %v461 = vld [vmem:[#allocation3 + $0x9a8] sm:$0xff]
    %v462 = vld [vmem:[#allocation3 + $0x9b0] sm:$0xff]
    %v463 = vld [vmem:[#allocation3 + $0x9b8] sm:$0xff]
    %v464 = vld [vmem:[#allocation3 + $0x9c0] sm:$0xff]
    %v465 = vld [vmem:[#allocation3 + $0x9c8] sm:$0xff]
    %v466 = vld [vmem:[#allocation3 + $0x9d0] sm:$0xff]
    %v467 = vld [vmem:[#allocation3 + $0x9d8] sm:$0xff]
    %v468 = vld [vmem:[#allocation3 + $0x9e0] sm:$0xff]
    %v469 = vld [vmem:[#allocation3 + $0x9e8] sm:$0xff]
    %v470 = vld [vmem:[#allocation3 + $0x9f0] sm:$0xff]
    %v471 = vld [vmem:[#allocation3 + $0x9f8] sm:$0xff]
    %v472 = vld [vmem:[#allocation3 + $0xa00] sm:$0xff]
    %v473 = vld [vmem:[#allocation3 + $0xa08] sm:$0xff]
    %v474 = vld [vmem:[#allocation3 + $0xa10] sm:$0xff]
    %v475 = vld [vmem:[#allocation3 + $0xa18] sm:$0xff]
    %v476 = vld [vmem:[#allocation3 + $0xa20] sm:$0xff]
    %v477 = vld [vmem:[#allocation3 + $0xa28] sm:$0xff]
    %v478 = vld [vmem:[#allocation3 + $0xa30] sm:$0xff]
    %v479 = vld [vmem:[#allocation3 + $0xa38] sm:$0xff]
    %v480 = vld [vmem:[#allocation3 + $0xa40] sm:$0xff]
    %v481 = vld [vmem:[#allocation3 + $0xa48] sm:$0xff]
    %v482 = vld [vmem:[#allocation3 + $0xa50] sm:$0xff]
    %v483 = vld [vmem:[#allocation3 + $0xa58] sm:$0xff]
    %v484 = vld [vmem:[#allocation3 + $0xa60] sm:$0xff]
    %v485 = vld [vmem:[#allocation3 + $0xa68] sm:$0xff]
    %v486 = vld [vmem:[#allocation3 + $0xa70] sm:$0xff]
    %v487 = vld [vmem:[#allocation3 + $0xa78] sm:$0xff]
    %v488 = vld [vmem:[#allocation3 + $0xa80] sm:$0xff]
    %v489 = vld [vmem:[#allocation3 + $0xa88] sm:$0xff]
    %v490 = vld [vmem:[#allocation3 + $0xa90] sm:$0xff]
    %v491 = vld [vmem:[#allocation3 + $0xa98] sm:$0xff]
    %v492 = vld [vmem:[#allocation3 + $0xaa0] sm:$0xff]
    %v493 = vld [vmem:[#allocation3 + $0xaa8] sm:$0xff]
    %v494 = vld [vmem:[#allocation3 + $0xab0] sm:$0xff]
    %v495 = vld [vmem:[#allocation3 + $0xab8] sm:$0xff]
    %v496 = vld [vmem:[#allocation3 + $0xac0] sm:$0xff]
    %v497 = vld [vmem:[#allocation3 + $0xac8] sm:$0xff]
    %v498 = vld [vmem:[#allocation3 + $0xad0] sm:$0xff]
    %v499 = vld [vmem:[#allocation3 + $0xad8] sm:$0xff]
    %v500 = vld [vmem:[#allocation3 + $0xae0] sm:$0xff]
    %v501 = vld [vmem:[#allocation3 + $0xae8] sm:$0xff]
    %v502 = vld [vmem:[#allocation3 + $0xaf0] sm:$0xff]
    %v503 = vld [vmem:[#allocation3 + $0xaf8] sm:$0xff]
    %v504 = vld [vmem:[#allocation3 + $0xb00] sm:$0xff]
    %v505 = vld [vmem:[#allocation3 + $0xb08] sm:$0xff]
    %v506 = vld [vmem:[#allocation3 + $0xb10] sm:$0xff]
    %v507 = vld [vmem:[#allocation3 + $0xb18] sm:$0xff]
    %v508 = vld [vmem:[#allocation3 + $0xb20] sm:$0xff]
    %v509 = vld [vmem:[#allocation3 + $0xb28] sm:$0xff]
    %v510 = vld [vmem:[#allocation3 + $0xb30] sm:$0xff]
    %v511 = vld [vmem:[#allocation3 + $0xb38] sm:$0xff]
    %v512 = vld [vmem:[#allocation3 + $0xb40] sm:$0xff]
    %v513 = vld [vmem:[#allocation3 + $0xb48] sm:$0xff]
    %v514 = vld [vmem:[#allocation3 + $0xb50] sm:$0xff]
    %v515 = vld [vmem:[#allocation3 + $0xb58] sm:$0xff]
    %v516 = vld [vmem:[#allocation3 + $0xb60] sm:$0xff]
    %v517 = vld [vmem:[#allocation3 + $0xb68] sm:$0xff]
    %v518 = vld [vmem:[#allocation3 + $0xb70] sm:$0xff]
    %v519 = vld [vmem:[#allocation3 + $0xb78] sm:$0xff]
    %v520 = vld [vmem:[#allocation3 + $0xb80] sm:$0xff]
    %v521 = vld [vmem:[#allocation3 + $0xb88] sm:$0xff]
    %v522 = vld [vmem:[#allocation3 + $0xb90] sm:$0xff]
    %v523 = vld [vmem:[#allocation3 + $0xb98] sm:$0xff]
    %v524 = vld [vmem:[#allocation3 + $0xba0] sm:$0xff]
    %v525 = vld [vmem:[#allocation3 + $0xba8] sm:$0xff]
    %v526 = vld [vmem:[#allocation3 + $0xbb0] sm:$0xff]
    %v527 = vld [vmem:[#allocation3 + $0xbb8] sm:$0xff]
    %v528 = vld [vmem:[#allocation3 + $0xbc0] sm:$0xff]
    %v529 = vld [vmem:[#allocation3 + $0xbc8] sm:$0xff]
    %v530 = vld [vmem:[#allocation3 + $0xbd0] sm:$0xff]
    %v531 = vld [vmem:[#allocation3 + $0xbd8] sm:$0xff]
    %v532 = vld [vmem:[#allocation3 + $0xbe0] sm:$0xff]
    %v533 = vld [vmem:[#allocation3 + $0xbe8] sm:$0xff]
    %v534 = vld [vmem:[#allocation3 + $0xbf0] sm:$0xff]
    %v535 = vld [vmem:[#allocation3 + $0xbf8] sm:$0xff]
    %v536 = vld [vmem:[#allocation3 + $0xc00] sm:$0xff]
    %v537 = vld [vmem:[#allocation3 + $0xc08] sm:$0xff]
    %v538 = vld [vmem:[#allocation3 + $0xc10] sm:$0xff]
    %v539 = vld [vmem:[#allocation3 + $0xc18] sm:$0xff]
    %v540 = vld [vmem:[#allocation3 + $0xc20] sm:$0xff]
    %v541 = vld [vmem:[#allocation3 + $0xc28] sm:$0xff]
    %v542 = vld [vmem:[#allocation3 + $0xc30] sm:$0xff]
    %v543 = vld [vmem:[#allocation3 + $0xc38] sm:$0xff]
    %v544 = vld [vmem:[#allocation5] sm:$0xff]
    %v546 = vperm.slane %v544, 0
    %v547 = vperm.slane %v544, 1
    %v548 = vperm.slane %v544, 2
    %v549 = vperm.slane %v544, 3
    %v550 = vperm.slane %v544, 4
    %v551 = vperm.slane %v544, 5
    %v552 = vperm.slane %v544, 6
    %v553 = vperm.slane %v544, 7
    %v954 = vunpack.c.l.b16 %v152
    %v955 = vunpack.c.h.b16 %v152
    %v956 = vunpack.c.l.b16 %v153
    %v957 = vunpack.c.h.b16 %v153
    %v958 = vunpack.c.l.b16 %v154
    %v959 = vunpack.c.h.b16 %v154
    %v960 = vunpack.c.l.b16 %v155
    %v961 = vunpack.c.h.b16 %v155
    %v962 = vunpack.c.l.b16 %v156
    %v963 = vunpack.c.h.b16 %v156
    %v964 = vunpack.c.l.b16 %v157
    %v965 = vunpack.c.h.b16 %v157
    %v966 = vunpack.c.l.b16 %v158
    %v967 = vunpack.c.h.b16 %v158
    %v968 = vunpack.c.l.b16 %v159
    %v969 = vunpack.c.h.b16 %v159
    %v970 = vunpack.c.l.b16 %v160
    %v971 = vunpack.c.h.b16 %v160
    %v972 = vunpack.c.l.b16 %v161
    %v973 = vunpack.c.h.b16 %v161
    %v974 = vunpack.c.l.b16 %v162
    %v975 = vunpack.c.h.b16 %v162
    %v976 = vunpack.c.l.b16 %v163
    %v977 = vunpack.c.h.b16 %v163
    %v978 = vunpack.c.l.b16 %v164
    %v979 = vunpack.c.h.b16 %v164
    %v980 = vunpack.c.l.b16 %v165
    %v981 = vunpack.c.h.b16 %v165
    %v982 = vunpack.c.l.b16 %v166
    %v983 = vunpack.c.h.b16 %v166
    %v984 = vunpack.c.l.b16 %v167
    %v985 = vunpack.c.h.b16 %v167
    %v986 = vunpack.c.l.b16 %v168
    %v987 = vunpack.c.h.b16 %v168
    %v988 = vunpack.c.l.b16 %v169
    %v989 = vunpack.c.h.b16 %v169
    %v990 = vunpack.c.l.b16 %v170
    %v991 = vunpack.c.h.b16 %v170
    %v992 = vunpack.c.l.b16 %v171
    %v993 = vunpack.c.h.b16 %v171
    %v994 = vunpack.c.l.b16 %v172
    %v995 = vunpack.c.h.b16 %v172
    %v996 = vunpack.c.l.b16 %v173
    %v997 = vunpack.c.h.b16 %v173
    %v998 = vunpack.c.l.b16 %v174
    %v999 = vunpack.c.h.b16 %v174
    %v1000 = vunpack.c.l.b16 %v175
    %v1001 = vunpack.c.h.b16 %v175
    %v1002 = vunpack.c.l.b16 %v176
    %v1003 = vunpack.c.h.b16 %v176
    %v1004 = vunpack.c.l.b16 %v177
    %v1005 = vunpack.c.h.b16 %v177
    %v1006 = vunpack.c.l.b16 %v178
    %v1007 = vunpack.c.h.b16 %v178
    %v1008 = vunpack.c.l.b16 %v179
    %v1009 = vunpack.c.h.b16 %v179
    %v1010 = vunpack.c.l.b16 %v180
    %v1011 = vunpack.c.h.b16 %v180
    %v1012 = vunpack.c.l.b16 %v181
    %v1013 = vunpack.c.h.b16 %v181
    %v1014 = vunpack.c.l.b16 %v182
    %v1015 = vunpack.c.h.b16 %v182
    %v1016 = vunpack.c.l.b16 %v183
    %v1017 = vunpack.c.h.b16 %v183
    %v1018 = vunpack.c.l.b16 %v184
    %v1019 = vunpack.c.h.b16 %v184
    %v1020 = vunpack.c.l.b16 %v185
    %v1021 = vunpack.c.h.b16 %v185
    %v1022 = vunpack.c.l.b16 %v186
    %v1023 = vunpack.c.h.b16 %v186
    %v1024 = vunpack.c.l.b16 %v187
    %v1025 = vunpack.c.h.b16 %v187
    %v1026 = vunpack.c.l.b16 %v188
    %v1027 = vunpack.c.h.b16 %v188
    %v1028 = vunpack.c.l.b16 %v189
    %v1029 = vunpack.c.h.b16 %v189
    %v1030 = vunpack.c.l.b16 %v190
    %v1031 = vunpack.c.h.b16 %v190
    %v1032 = vunpack.c.l.b16 %v191
    %v1033 = vunpack.c.h.b16 %v191
    %v1034 = vunpack.c.l.b16 %v192
    %v1035 = vunpack.c.h.b16 %v192
    %v1036 = vunpack.c.l.b16 %v193
    %v1037 = vunpack.c.h.b16 %v193
    %v1038 = vunpack.c.l.b16 %v194
    %v1039 = vunpack.c.h.b16 %v194
    %v1040 = vunpack.c.l.b16 %v195
    %v1041 = vunpack.c.h.b16 %v195
    %v1042 = vunpack.c.l.b16 %v196
    %v1043 = vunpack.c.h.b16 %v196
    %v1044 = vunpack.c.l.b16 %v197
    %v1045 = vunpack.c.h.b16 %v197
    %v1046 = vunpack.c.l.b16 %v198
    %v1047 = vunpack.c.h.b16 %v198
    %v1048 = vunpack.c.l.b16 %v199
    %v1049 = vunpack.c.h.b16 %v199
    %v1050 = vunpack.c.l.b16 %v200
    %v1051 = vunpack.c.h.b16 %v200
    %v1052 = vunpack.c.l.b16 %v201
    %v1053 = vunpack.c.h.b16 %v201
    %v1054 = vunpack.c.l.b16 %v202
    %v1055 = vunpack.c.h.b16 %v202
    %v1056 = vunpack.c.l.b16 %v203
    %v1057 = vunpack.c.h.b16 %v203
    %v1058 = vunpack.c.l.b16 %v204
    %v1059 = vunpack.c.h.b16 %v204
    %v1060 = vunpack.c.l.b16 %v205
    %v1061 = vunpack.c.h.b16 %v205
    %v1062 = vunpack.c.l.b16 %v206
    %v1063 = vunpack.c.h.b16 %v206
    %v1064 = vunpack.c.l.b16 %v207
    %v1065 = vunpack.c.h.b16 %v207
    %v1066 = vunpack.c.l.b16 %v208
    %v1067 = vunpack.c.h.b16 %v208
    %v1068 = vunpack.c.l.b16 %v209
    %v1069 = vunpack.c.h.b16 %v209
    %v1070 = vunpack.c.l.b16 %v210
    %v1071 = vunpack.c.h.b16 %v210
    %v1072 = vunpack.c.l.b16 %v211
    %v1073 = vunpack.c.h.b16 %v211
    %v1074 = vunpack.c.l.b16 %v212
    %v1075 = vunpack.c.h.b16 %v212
    %v1076 = vunpack.c.l.b16 %v213
    %v1077 = vunpack.c.h.b16 %v213
    %v1078 = vunpack.c.l.b16 %v214
    %v1079 = vunpack.c.h.b16 %v214
    %v1080 = vunpack.c.l.b16 %v215
    %v1081 = vunpack.c.h.b16 %v215
    %v1082 = vunpack.c.l.b16 %v216
    %v1083 = vunpack.c.h.b16 %v216
    %v1084 = vunpack.c.l.b16 %v217
    %v1085 = vunpack.c.h.b16 %v217
    %v1086 = vunpack.c.l.b16 %v218
    %v1087 = vunpack.c.h.b16 %v218
    %v1088 = vunpack.c.l.b16 %v219
    %v1089 = vunpack.c.h.b16 %v219
    %v1090 = vunpack.c.l.b16 %v220
    %v1091 = vunpack.c.h.b16 %v220
    %v1092 = vunpack.c.l.b16 %v221
    %v1093 = vunpack.c.h.b16 %v221
    %v1094 = vunpack.c.l.b16 %v222
    %v1095 = vunpack.c.h.b16 %v222
    %v1096 = vunpack.c.l.b16 %v223
    %v1097 = vunpack.c.h.b16 %v223
    %v1098 = vunpack.c.l.b16 %v224
    %v1099 = vunpack.c.h.b16 %v224
    %v1100 = vunpack.c.l.b16 %v225
    %v1101 = vunpack.c.h.b16 %v225
    %v1102 = vunpack.c.l.b16 %v226
    %v1103 = vunpack.c.h.b16 %v226
    %v1104 = vunpack.c.l.b16 %v227
    %v1105 = vunpack.c.h.b16 %v227
    %v1106 = vunpack.c.l.b16 %v228
    %v1107 = vunpack.c.h.b16 %v228
    %v1108 = vunpack.c.l.b16 %v229
    %v1109 = vunpack.c.h.b16 %v229
    %v1110 = vunpack.c.l.b16 %v230
    %v1111 = vunpack.c.h.b16 %v230
    %v1112 = vunpack.c.l.b16 %v231
    %v1113 = vunpack.c.h.b16 %v231
    %v1114 = vunpack.c.l.b16 %v232
    %v1115 = vunpack.c.h.b16 %v232
    %v1116 = vunpack.c.l.b16 %v233
    %v1117 = vunpack.c.h.b16 %v233
    %v1118 = vunpack.c.l.b16 %v234
    %v1119 = vunpack.c.h.b16 %v234
    %v1120 = vunpack.c.l.b16 %v235
    %v1121 = vunpack.c.h.b16 %v235
    %v1122 = vunpack.c.l.b16 %v236
    %v1123 = vunpack.c.h.b16 %v236
    %v1124 = vunpack.c.l.b16 %v237
    %v1125 = vunpack.c.h.b16 %v237
    %v1126 = vunpack.c.l.b16 %v238
    %v1127 = vunpack.c.h.b16 %v238
    %v1128 = vunpack.c.l.b16 %v239
    %v1129 = vunpack.c.h.b16 %v239
    %v1130 = vunpack.c.l.b16 %v240
    %v1131 = vunpack.c.h.b16 %v240
    %v1132 = vunpack.c.l.b16 %v241
    %v1133 = vunpack.c.h.b16 %v241
    %v1134 = vunpack.c.l.b16 %v242
    %v1135 = vunpack.c.h.b16 %v242
    %v1136 = vunpack.c.l.b16 %v243
    %v1137 = vunpack.c.h.b16 %v243
    %v1138 = vunpack.c.l.b16 %v244
    %v1139 = vunpack.c.h.b16 %v244
    %v1140 = vunpack.c.l.b16 %v245
    %v1141 = vunpack.c.h.b16 %v245
    %v1142 = vunpack.c.l.b16 %v246
    %v1143 = vunpack.c.h.b16 %v246
    %v1144 = vunpack.c.l.b16 %v247
    %v1145 = vunpack.c.h.b16 %v247
    %v1146 = vunpack.c.l.b16 %v248
    %v1147 = vunpack.c.h.b16 %v248
    %v1148 = vunpack.c.l.b16 %v249
    %v1149 = vunpack.c.h.b16 %v249
    %v1150 = vunpack.c.l.b16 %v250
    %v1151 = vunpack.c.h.b16 %v250
    %v1152 = vunpack.c.l.b16 %v251
    %v1153 = vunpack.c.h.b16 %v251
    %v1154 = vunpack.c.l.b16 %v252
    %v1155 = vunpack.c.h.b16 %v252
    %v1156 = vunpack.c.l.b16 %v253
    %v1157 = vunpack.c.h.b16 %v253
    %v1158 = vunpack.c.l.b16 %v254
    %v1159 = vunpack.c.h.b16 %v254
    %v1160 = vunpack.c.l.b16 %v255
    %v1161 = vunpack.c.h.b16 %v255
    %v1162 = vunpack.c.l.b16 %v256
    %v1163 = vunpack.c.h.b16 %v256
    %v1164 = vunpack.c.l.b16 %v257
    %v1165 = vunpack.c.h.b16 %v257
    %v1166 = vunpack.c.l.b16 %v258
    %v1167 = vunpack.c.h.b16 %v258
    %v1168 = vunpack.c.l.b16 %v259
    %v1169 = vunpack.c.h.b16 %v259
    %v1170 = vunpack.c.l.b16 %v260
    %v1171 = vunpack.c.h.b16 %v260
    %v1172 = vunpack.c.l.b16 %v261
    %v1173 = vunpack.c.h.b16 %v261
    %v1174 = vunpack.c.l.b16 %v262
    %v1175 = vunpack.c.h.b16 %v262
    %v1176 = vunpack.c.l.b16 %v263
    %v1177 = vunpack.c.h.b16 %v263
    %v1178 = vunpack.c.l.b16 %v264
    %v1179 = vunpack.c.h.b16 %v264
    %v1180 = vunpack.c.l.b16 %v265
    %v1181 = vunpack.c.h.b16 %v265
    %v1182 = vunpack.c.l.b16 %v266
    %v1183 = vunpack.c.h.b16 %v266
    %v1184 = vunpack.c.l.b16 %v267
    %v1185 = vunpack.c.h.b16 %v267
    %v1186 = vunpack.c.l.b16 %v268
    %v1187 = vunpack.c.h.b16 %v268
    %v1188 = vunpack.c.l.b16 %v269
    %v1189 = vunpack.c.h.b16 %v269
    %v1190 = vunpack.c.l.b16 %v270
    %v1191 = vunpack.c.h.b16 %v270
    %v1192 = vunpack.c.l.b16 %v271
    %v1193 = vunpack.c.h.b16 %v271
    %v1194 = vunpack.c.l.b16 %v272
    %v1195 = vunpack.c.h.b16 %v272
    %v1196 = vunpack.c.l.b16 %v273
    %v1197 = vunpack.c.h.b16 %v273
    %v1198 = vunpack.c.l.b16 %v274
    %v1199 = vunpack.c.h.b16 %v274
    %v1200 = vunpack.c.l.b16 %v275
    %v1201 = vunpack.c.h.b16 %v275
    %v1202 = vunpack.c.l.b16 %v276
    %v1203 = vunpack.c.h.b16 %v276
    %v1204 = vunpack.c.l.b16 %v277
    %v1205 = vunpack.c.h.b16 %v277
    %v1206 = vunpack.c.l.b16 %v278
    %v1207 = vunpack.c.h.b16 %v278
    %v1208 = vunpack.c.l.b16 %v279
    %v1209 = vunpack.c.h.b16 %v279
    %v1210 = vunpack.c.l.b16 %v280
    %v1211 = vunpack.c.h.b16 %v280
    %v1212 = vunpack.c.l.b16 %v281
    %v1213 = vunpack.c.h.b16 %v281
    %v1214 = vunpack.c.l.b16 %v282
    %v1215 = vunpack.c.h.b16 %v282
    %v1216 = vunpack.c.l.b16 %v283
    %v1217 = vunpack.c.h.b16 %v283
    %v1218 = vunpack.c.l.b16 %v284
    %v1219 = vunpack.c.h.b16 %v284
    %v1220 = vunpack.c.l.b16 %v285
    %v1221 = vunpack.c.h.b16 %v285
    %v1222 = vunpack.c.l.b16 %v286
    %v1223 = vunpack.c.h.b16 %v286
    %v1224 = vunpack.c.l.b16 %v287
    %v1225 = vunpack.c.h.b16 %v287
    %v1226 = vunpack.c.l.b16 %v288
    %v1227 = vunpack.c.h.b16 %v288
    %v1228 = vunpack.c.l.b16 %v289
    %v1229 = vunpack.c.h.b16 %v289
    %v1230 = vunpack.c.l.b16 %v290
    %v1231 = vunpack.c.h.b16 %v290
    %v1232 = vunpack.c.l.b16 %v291
    %v1233 = vunpack.c.h.b16 %v291
    %v1234 = vunpack.c.l.b16 %v292
    %v1235 = vunpack.c.h.b16 %v292
    %v1236 = vunpack.c.l.b16 %v293
    %v1237 = vunpack.c.h.b16 %v293
    %v1238 = vunpack.c.l.b16 %v294
    %v1239 = vunpack.c.h.b16 %v294
    %v1240 = vunpack.c.l.b16 %v295
    %v1241 = vunpack.c.h.b16 %v295
    %v1242 = vunpack.c.l.b16 %v296
    %v1243 = vunpack.c.h.b16 %v296
    %v1244 = vunpack.c.l.b16 %v297
    %v1245 = vunpack.c.h.b16 %v297
    %v1246 = vunpack.c.l.b16 %v298
    %v1247 = vunpack.c.h.b16 %v298
    %v1248 = vunpack.c.l.b16 %v299
    %v1249 = vunpack.c.h.b16 %v299
    %v1250 = vunpack.c.l.b16 %v300
    %v1251 = vunpack.c.h.b16 %v300
    %v1252 = vunpack.c.l.b16 %v301
    %v1253 = vunpack.c.h.b16 %v301
    %v1254 = vunpack.c.l.b16 %v302
    %v1255 = vunpack.c.h.b16 %v302
    %v1256 = vunpack.c.l.b16 %v303
    %v1257 = vunpack.c.h.b16 %v303
    %v1258 = vunpack.c.l.b16 %v304
    %v1259 = vunpack.c.h.b16 %v304
    %v1260 = vunpack.c.l.b16 %v305
    %v1261 = vunpack.c.h.b16 %v305
    %v1262 = vunpack.c.l.b16 %v306
    %v1263 = vunpack.c.h.b16 %v306
    %v1264 = vunpack.c.l.b16 %v307
    %v1265 = vunpack.c.h.b16 %v307
    %v1266 = vunpack.c.l.b16 %v308
    %v1267 = vunpack.c.h.b16 %v308
    %v1268 = vunpack.c.l.b16 %v309
    %v1269 = vunpack.c.h.b16 %v309
    %v1270 = vunpack.c.l.b16 %v310
    %v1271 = vunpack.c.h.b16 %v310
    %v1272 = vunpack.c.l.b16 %v311
    %v1273 = vunpack.c.h.b16 %v311
    %v1274 = vunpack.c.l.b16 %v312
    %v1275 = vunpack.c.h.b16 %v312
    %v1276 = vunpack.c.l.b16 %v313
    %v1277 = vunpack.c.h.b16 %v313
    %v1278 = vunpack.c.l.b16 %v314
    %v1279 = vunpack.c.h.b16 %v314
    %v1280 = vunpack.c.l.b16 %v315
    %v1281 = vunpack.c.h.b16 %v315
    %v1282 = vunpack.c.l.b16 %v316
    %v1283 = vunpack.c.h.b16 %v316
    %v1284 = vunpack.c.l.b16 %v317
    %v1285 = vunpack.c.h.b16 %v317
    %v1286 = vunpack.c.l.b16 %v318
    %v1287 = vunpack.c.h.b16 %v318
    %v1288 = vunpack.c.l.b16 %v319
    %v1289 = vunpack.c.h.b16 %v319
    %v1290 = vunpack.c.l.b16 %v320
    %v1291 = vunpack.c.h.b16 %v320
    %v1292 = vunpack.c.l.b16 %v321
    %v1293 = vunpack.c.h.b16 %v321
    %v1294 = vunpack.c.l.b16 %v322
    %v1295 = vunpack.c.h.b16 %v322
    %v1296 = vunpack.c.l.b16 %v323
    %v1297 = vunpack.c.h.b16 %v323
    %v1298 = vunpack.c.l.b16 %v324
    %v1299 = vunpack.c.h.b16 %v324
    %v1300 = vunpack.c.l.b16 %v325
    %v1301 = vunpack.c.h.b16 %v325
    %v1302 = vunpack.c.l.b16 %v326
    %v1303 = vunpack.c.h.b16 %v326
    %v1304 = vunpack.c.l.b16 %v327
    %v1305 = vunpack.c.h.b16 %v327
    %v1306 = vunpack.c.l.b16 %v328
    %v1307 = vunpack.c.h.b16 %v328
    %v1308 = vunpack.c.l.b16 %v329
    %v1309 = vunpack.c.h.b16 %v329
    %v1310 = vunpack.c.l.b16 %v330
    %v1311 = vunpack.c.h.b16 %v330
    %v1312 = vunpack.c.l.b16 %v331
    %v1313 = vunpack.c.h.b16 %v331
    %v1314 = vunpack.c.l.b16 %v332
    %v1315 = vunpack.c.h.b16 %v332
    %v1316 = vunpack.c.l.b16 %v333
    %v1317 = vunpack.c.h.b16 %v333
    %v1318 = vunpack.c.l.b16 %v334
    %v1319 = vunpack.c.h.b16 %v334
    %v1320 = vunpack.c.l.b16 %v335
    %v1321 = vunpack.c.h.b16 %v335
    %v1322 = vunpack.c.l.b16 %v336
    %v1323 = vunpack.c.h.b16 %v336
    %v1324 = vunpack.c.l.b16 %v337
    %v1325 = vunpack.c.h.b16 %v337
    %v1326 = vunpack.c.l.b16 %v338
    %v1327 = vunpack.c.h.b16 %v338
    %v1328 = vunpack.c.l.b16 %v339
    %v1329 = vunpack.c.h.b16 %v339
    %v1330 = vunpack.c.l.b16 %v340
    %v1331 = vunpack.c.h.b16 %v340
    %v1332 = vunpack.c.l.b16 %v341
    %v1333 = vunpack.c.h.b16 %v341
    %v1334 = vunpack.c.l.b16 %v342
    %v1335 = vunpack.c.h.b16 %v342
    %v1336 = vunpack.c.l.b16 %v343
    %v1337 = vunpack.c.h.b16 %v343
    %v1338 = vunpack.c.l.b16 %v344
    %v1339 = vunpack.c.h.b16 %v344
    %v1340 = vunpack.c.l.b16 %v345
    %v1341 = vunpack.c.h.b16 %v345
    %v1342 = vunpack.c.l.b16 %v346
    %v1343 = vunpack.c.h.b16 %v346
    %v1344 = vunpack.c.l.b16 %v347
    %v1345 = vunpack.c.h.b16 %v347
    %v1346 = vunpack.c.l.b16 %v348
    %v1347 = vunpack.c.h.b16 %v348
    %v1348 = vunpack.c.l.b16 %v349
    %v1349 = vunpack.c.h.b16 %v349
    %v1350 = vunpack.c.l.b16 %v350
    %v1351 = vunpack.c.h.b16 %v350
    %v1352 = vunpack.c.l.b16 %v351
    %v1353 = vunpack.c.h.b16 %v351
    %v1354 = vunpack.c.l.b16 %v352
    %v1355 = vunpack.c.h.b16 %v352
    %v1356 = vunpack.c.l.b16 %v353
    %v1357 = vunpack.c.h.b16 %v353
    %v1358 = vunpack.c.l.b16 %v354
    %v1359 = vunpack.c.h.b16 %v354
    %v1360 = vunpack.c.l.b16 %v355
    %v1361 = vunpack.c.h.b16 %v355
    %v1362 = vunpack.c.l.b16 %v356
    %v1363 = vunpack.c.h.b16 %v356
    %v1364 = vunpack.c.l.b16 %v357
    %v1365 = vunpack.c.h.b16 %v357
    %v1366 = vunpack.c.l.b16 %v358
    %v1367 = vunpack.c.h.b16 %v358
    %v1368 = vunpack.c.l.b16 %v359
    %v1369 = vunpack.c.h.b16 %v359
    %v1370 = vunpack.c.l.b16 %v360
    %v1371 = vunpack.c.h.b16 %v360
    %v1372 = vunpack.c.l.b16 %v361
    %v1373 = vunpack.c.h.b16 %v361
    %v1374 = vunpack.c.l.b16 %v362
    %v1375 = vunpack.c.h.b16 %v362
    %v1376 = vunpack.c.l.b16 %v363
    %v1377 = vunpack.c.h.b16 %v363
    %v1378 = vunpack.c.l.b16 %v364
    %v1379 = vunpack.c.h.b16 %v364
    %v1380 = vunpack.c.l.b16 %v365
    %v1381 = vunpack.c.h.b16 %v365
    %v1382 = vunpack.c.l.b16 %v366
    %v1383 = vunpack.c.h.b16 %v366
    %v1384 = vunpack.c.l.b16 %v367
    %v1385 = vunpack.c.h.b16 %v367
    %v1386 = vunpack.c.l.b16 %v368
    %v1387 = vunpack.c.h.b16 %v368
    %v1388 = vunpack.c.l.b16 %v369
    %v1389 = vunpack.c.h.b16 %v369
    %v1390 = vunpack.c.l.b16 %v370
    %v1391 = vunpack.c.h.b16 %v370
    %v1392 = vunpack.c.l.b16 %v371
    %v1393 = vunpack.c.h.b16 %v371
    %v1394 = vunpack.c.l.b16 %v372
    %v1395 = vunpack.c.h.b16 %v372
    %v1396 = vunpack.c.l.b16 %v373
    %v1397 = vunpack.c.h.b16 %v373
    %v1398 = vunpack.c.l.b16 %v374
    %v1399 = vunpack.c.h.b16 %v374
    %v1400 = vunpack.c.l.b16 %v375
    %v1401 = vunpack.c.h.b16 %v375
    %v1402 = vunpack.c.l.b16 %v376
    %v1403 = vunpack.c.h.b16 %v376
    %v1404 = vunpack.c.l.b16 %v377
    %v1405 = vunpack.c.h.b16 %v377
    %v1406 = vunpack.c.l.b16 %v378
    %v1407 = vunpack.c.h.b16 %v378
    %v1408 = vunpack.c.l.b16 %v379
    %v1409 = vunpack.c.h.b16 %v379
    %v1410 = vunpack.c.l.b16 %v380
    %v1411 = vunpack.c.h.b16 %v380
    %v1412 = vunpack.c.l.b16 %v381
    %v1413 = vunpack.c.h.b16 %v381
    %v1414 = vunpack.c.l.b16 %v382
    %v1415 = vunpack.c.h.b16 %v382
    %v1416 = vunpack.c.l.b16 %v383
    %v1417 = vunpack.c.h.b16 %v383
    %v1418 = vunpack.c.l.b16 %v384
    %v1419 = vunpack.c.h.b16 %v384
    %v1420 = vunpack.c.l.b16 %v385
    %v1421 = vunpack.c.h.b16 %v385
    %v1422 = vunpack.c.l.b16 %v386
    %v1423 = vunpack.c.h.b16 %v386
    %v1424 = vunpack.c.l.b16 %v387
    %v1425 = vunpack.c.h.b16 %v387
    %v1426 = vunpack.c.l.b16 %v388
    %v1427 = vunpack.c.h.b16 %v388
    %v1428 = vunpack.c.l.b16 %v389
    %v1429 = vunpack.c.h.b16 %v389
    %v1430 = vunpack.c.l.b16 %v390
    %v1431 = vunpack.c.h.b16 %v390
    %v1432 = vunpack.c.l.b16 %v391
    %v1433 = vunpack.c.h.b16 %v391
    %v1434 = vunpack.c.l.b16 %v392
    %v1435 = vunpack.c.h.b16 %v392
    %v1436 = vunpack.c.l.b16 %v393
    %v1437 = vunpack.c.h.b16 %v393
    %v1438 = vunpack.c.l.b16 %v394
    %v1439 = vunpack.c.h.b16 %v394
    %v1440 = vunpack.c.l.b16 %v395
    %v1441 = vunpack.c.h.b16 %v395
    %v1442 = vunpack.c.l.b16 %v396
    %v1443 = vunpack.c.h.b16 %v396
    %v1444 = vunpack.c.l.b16 %v397
    %v1445 = vunpack.c.h.b16 %v397
    %v1446 = vunpack.c.l.b16 %v398
    %v1447 = vunpack.c.h.b16 %v398
    %v1448 = vunpack.c.l.b16 %v399
    %v1449 = vunpack.c.h.b16 %v399
    %v1450 = vunpack.c.l.b16 %v400
    %v1451 = vunpack.c.h.b16 %v400
    %v1452 = vunpack.c.l.b16 %v401
    %v1453 = vunpack.c.h.b16 %v401
    %v1454 = vunpack.c.l.b16 %v402
    %v1455 = vunpack.c.h.b16 %v402
    %v1456 = vunpack.c.l.b16 %v403
    %v1457 = vunpack.c.h.b16 %v403
    %v1458 = vunpack.c.l.b16 %v404
    %v1459 = vunpack.c.h.b16 %v404
    %v1460 = vunpack.c.l.b16 %v405
    %v1461 = vunpack.c.h.b16 %v405
    %v1462 = vunpack.c.l.b16 %v406
    %v1463 = vunpack.c.h.b16 %v406
    %v1464 = vunpack.c.l.b16 %v407
    %v1465 = vunpack.c.h.b16 %v407
    %v1466 = vunpack.c.l.b16 %v408
    %v1467 = vunpack.c.h.b16 %v408
    %v1468 = vunpack.c.l.b16 %v409
    %v1469 = vunpack.c.h.b16 %v409
    %v1470 = vunpack.c.l.b16 %v410
    %v1471 = vunpack.c.h.b16 %v410
    %v1472 = vunpack.c.l.b16 %v411
    %v1473 = vunpack.c.h.b16 %v411
    %v1474 = vunpack.c.l.b16 %v412
    %v1475 = vunpack.c.h.b16 %v412
    %v1476 = vunpack.c.l.b16 %v413
    %v1477 = vunpack.c.h.b16 %v413
    %v1478 = vunpack.c.l.b16 %v414
    %v1479 = vunpack.c.h.b16 %v414
    %v1480 = vunpack.c.l.b16 %v415
    %v1481 = vunpack.c.h.b16 %v415
    %v1482 = vunpack.c.l.b16 %v416
    %v1483 = vunpack.c.h.b16 %v416
    %v1484 = vunpack.c.l.b16 %v417
    %v1485 = vunpack.c.h.b16 %v417
    %v1486 = vunpack.c.l.b16 %v418
    %v1487 = vunpack.c.h.b16 %v418
    %v1488 = vunpack.c.l.b16 %v419
    %v1489 = vunpack.c.h.b16 %v419
    %v1490 = vunpack.c.l.b16 %v420
    %v1491 = vunpack.c.h.b16 %v420
    %v1492 = vunpack.c.l.b16 %v421
    %v1493 = vunpack.c.h.b16 %v421
    %v1494 = vunpack.c.l.b16 %v422
    %v1495 = vunpack.c.h.b16 %v422
    %v1496 = vunpack.c.l.b16 %v423
    %v1497 = vunpack.c.h.b16 %v423
    %v1498 = vunpack.c.l.b16 %v424
    %v1499 = vunpack.c.h.b16 %v424
    %v1500 = vunpack.c.l.b16 %v425
    %v1501 = vunpack.c.h.b16 %v425
    %v1502 = vunpack.c.l.b16 %v426
    %v1503 = vunpack.c.h.b16 %v426
    %v1504 = vunpack.c.l.b16 %v427
    %v1505 = vunpack.c.h.b16 %v427
    %v1506 = vunpack.c.l.b16 %v428
    %v1507 = vunpack.c.h.b16 %v428
    %v1508 = vunpack.c.l.b16 %v429
    %v1509 = vunpack.c.h.b16 %v429
    %v1510 = vunpack.c.l.b16 %v430
    %v1511 = vunpack.c.h.b16 %v430
    %v1512 = vunpack.c.l.b16 %v431
    %v1513 = vunpack.c.h.b16 %v431
    %v1514 = vunpack.c.l.b16 %v432
    %v1515 = vunpack.c.h.b16 %v432
    %v1516 = vunpack.c.l.b16 %v433
    %v1517 = vunpack.c.h.b16 %v433
    %v1518 = vunpack.c.l.b16 %v434
    %v1519 = vunpack.c.h.b16 %v434
    %v1520 = vunpack.c.l.b16 %v435
    %v1521 = vunpack.c.h.b16 %v435
    %v1522 = vunpack.c.l.b16 %v436
    %v1523 = vunpack.c.h.b16 %v436
    %v1524 = vunpack.c.l.b16 %v437
    %v1525 = vunpack.c.h.b16 %v437
    %v1526 = vunpack.c.l.b16 %v438
    %v1527 = vunpack.c.h.b16 %v438
    %v1528 = vunpack.c.l.b16 %v439
    %v1529 = vunpack.c.h.b16 %v439
    %v1530 = vunpack.c.l.b16 %v440
    %v1531 = vunpack.c.h.b16 %v440
    %v1532 = vunpack.c.l.b16 %v441
    %v1533 = vunpack.c.h.b16 %v441
    %v1534 = vunpack.c.l.b16 %v442
    %v1535 = vunpack.c.h.b16 %v442
    %v1536 = vunpack.c.l.b16 %v443
    %v1537 = vunpack.c.h.b16 %v443
    %v1538 = vunpack.c.l.b16 %v444
    %v1539 = vunpack.c.h.b16 %v444
    %v1540 = vunpack.c.l.b16 %v445
    %v1541 = vunpack.c.h.b16 %v445
    %v1542 = vunpack.c.l.b16 %v446
    %v1543 = vunpack.c.h.b16 %v446
    %v1544 = vunpack.c.l.b16 %v447
    %v1545 = vunpack.c.h.b16 %v447
    %v1546 = vunpack.c.l.b16 %v448
    %v1547 = vunpack.c.h.b16 %v448
    %v1548 = vunpack.c.l.b16 %v449
    %v1549 = vunpack.c.h.b16 %v449
    %v1550 = vunpack.c.l.b16 %v450
    %v1551 = vunpack.c.h.b16 %v450
    %v1552 = vunpack.c.l.b16 %v451
    %v1553 = vunpack.c.h.b16 %v451
    %v1554 = vunpack.c.l.b16 %v452
    %v1555 = vunpack.c.h.b16 %v452
    %v1556 = vunpack.c.l.b16 %v453
    %v1557 = vunpack.c.h.b16 %v453
    %v1558 = vunpack.c.l.b16 %v454
    %v1559 = vunpack.c.h.b16 %v454
    %v1560 = vunpack.c.l.b16 %v455
    %v1561 = vunpack.c.h.b16 %v455
    %v1562 = vunpack.c.l.b16 %v456
    %v1563 = vunpack.c.h.b16 %v456
    %v1564 = vunpack.c.l.b16 %v457
    %v1565 = vunpack.c.h.b16 %v457
    %v1566 = vunpack.c.l.b16 %v458
    %v1567 = vunpack.c.h.b16 %v458
    %v1568 = vunpack.c.l.b16 %v459
    %v1569 = vunpack.c.h.b16 %v459
    %v1570 = vunpack.c.l.b16 %v460
    %v1571 = vunpack.c.h.b16 %v460
    %v1572 = vunpack.c.l.b16 %v461
    %v1573 = vunpack.c.h.b16 %v461
    %v1574 = vunpack.c.l.b16 %v462
    %v1575 = vunpack.c.h.b16 %v462
    %v1576 = vunpack.c.l.b16 %v463
    %v1577 = vunpack.c.h.b16 %v463
    %v1578 = vunpack.c.l.b16 %v464
    %v1579 = vunpack.c.h.b16 %v464
    %v1580 = vunpack.c.l.b16 %v465
    %v1581 = vunpack.c.h.b16 %v465
    %v1582 = vunpack.c.l.b16 %v466
    %v1583 = vunpack.c.h.b16 %v466
    %v1584 = vunpack.c.l.b16 %v467
    %v1585 = vunpack.c.h.b16 %v467
    %v1586 = vunpack.c.l.b16 %v468
    %v1587 = vunpack.c.h.b16 %v468
    %v1588 = vunpack.c.l.b16 %v469
    %v1589 = vunpack.c.h.b16 %v469
    %v1590 = vunpack.c.l.b16 %v470
    %v1591 = vunpack.c.h.b16 %v470
    %v1592 = vunpack.c.l.b16 %v471
    %v1593 = vunpack.c.h.b16 %v471
    %v1594 = vunpack.c.l.b16 %v472
    %v1595 = vunpack.c.h.b16 %v472
    %v1596 = vunpack.c.l.b16 %v473
    %v1597 = vunpack.c.h.b16 %v473
    %v1598 = vunpack.c.l.b16 %v474
    %v1599 = vunpack.c.h.b16 %v474
    %v1600 = vunpack.c.l.b16 %v475
    %v1601 = vunpack.c.h.b16 %v475
    %v1602 = vunpack.c.l.b16 %v476
    %v1603 = vunpack.c.h.b16 %v476
    %v1604 = vunpack.c.l.b16 %v477
    %v1605 = vunpack.c.h.b16 %v477
    %v1606 = vunpack.c.l.b16 %v478
    %v1607 = vunpack.c.h.b16 %v478
    %v1608 = vunpack.c.l.b16 %v479
    %v1609 = vunpack.c.h.b16 %v479
    %v1610 = vunpack.c.l.b16 %v480
    %v1611 = vunpack.c.h.b16 %v480
    %v1612 = vunpack.c.l.b16 %v481
    %v1613 = vunpack.c.h.b16 %v481
    %v1614 = vunpack.c.l.b16 %v482
    %v1615 = vunpack.c.h.b16 %v482
    %v1616 = vunpack.c.l.b16 %v483
    %v1617 = vunpack.c.h.b16 %v483
    %v1618 = vunpack.c.l.b16 %v484
    %v1619 = vunpack.c.h.b16 %v484
    %v1620 = vunpack.c.l.b16 %v485
    %v1621 = vunpack.c.h.b16 %v485
    %v1622 = vunpack.c.l.b16 %v486
    %v1623 = vunpack.c.h.b16 %v486
    %v1624 = vunpack.c.l.b16 %v487
    %v1625 = vunpack.c.h.b16 %v487
    %v1626 = vunpack.c.l.b16 %v488
    %v1627 = vunpack.c.h.b16 %v488
    %v1628 = vunpack.c.l.b16 %v489
    %v1629 = vunpack.c.h.b16 %v489
    %v1630 = vunpack.c.l.b16 %v490
    %v1631 = vunpack.c.h.b16 %v490
    %v1632 = vunpack.c.l.b16 %v491
    %v1633 = vunpack.c.h.b16 %v491
    %v1634 = vunpack.c.l.b16 %v492
    %v1635 = vunpack.c.h.b16 %v492
    %v1636 = vunpack.c.l.b16 %v493
    %v1637 = vunpack.c.h.b16 %v493
    %v1638 = vunpack.c.l.b16 %v494
    %v1639 = vunpack.c.h.b16 %v494
    %v1640 = vunpack.c.l.b16 %v495
    %v1641 = vunpack.c.h.b16 %v495
    %v1642 = vunpack.c.l.b16 %v496
    %v1643 = vunpack.c.h.b16 %v496
    %v1644 = vunpack.c.l.b16 %v497
    %v1645 = vunpack.c.h.b16 %v497
    %v1646 = vunpack.c.l.b16 %v498
    %v1647 = vunpack.c.h.b16 %v498
    %v1648 = vunpack.c.l.b16 %v499
    %v1649 = vunpack.c.h.b16 %v499
    %v1650 = vunpack.c.l.b16 %v500
    %v1651 = vunpack.c.h.b16 %v500
    %v1652 = vunpack.c.l.b16 %v501
    %v1653 = vunpack.c.h.b16 %v501
    %v1654 = vunpack.c.l.b16 %v502
    %v1655 = vunpack.c.h.b16 %v502
    %v1656 = vunpack.c.l.b16 %v503
    %v1657 = vunpack.c.h.b16 %v503
    %v1658 = vunpack.c.l.b16 %v504
    %v1659 = vunpack.c.h.b16 %v504
    %v1660 = vunpack.c.l.b16 %v505
    %v1661 = vunpack.c.h.b16 %v505
    %v1662 = vunpack.c.l.b16 %v506
    %v1663 = vunpack.c.h.b16 %v506
    %v1664 = vunpack.c.l.b16 %v507
    %v1665 = vunpack.c.h.b16 %v507
    %v1666 = vunpack.c.l.b16 %v508
    %v1667 = vunpack.c.h.b16 %v508
    %v1668 = vunpack.c.l.b16 %v509
    %v1669 = vunpack.c.h.b16 %v509
    %v1670 = vunpack.c.l.b16 %v510
    %v1671 = vunpack.c.h.b16 %v510
    %v1672 = vunpack.c.l.b16 %v511
    %v1673 = vunpack.c.h.b16 %v511
    %v1674 = vunpack.c.l.b16 %v512
    %v1675 = vunpack.c.h.b16 %v512
    %v1676 = vunpack.c.l.b16 %v513
    %v1677 = vunpack.c.h.b16 %v513
    %v1678 = vunpack.c.l.b16 %v514
    %v1679 = vunpack.c.h.b16 %v514
    %v1680 = vunpack.c.l.b16 %v515
    %v1681 = vunpack.c.h.b16 %v515
    %v1682 = vunpack.c.l.b16 %v516
    %v1683 = vunpack.c.h.b16 %v516
    %v1684 = vunpack.c.l.b16 %v517
    %v1685 = vunpack.c.h.b16 %v517
    %v1686 = vunpack.c.l.b16 %v518
    %v1687 = vunpack.c.h.b16 %v518
    %v1688 = vunpack.c.l.b16 %v519
    %v1689 = vunpack.c.h.b16 %v519
    %v1690 = vunpack.c.l.b16 %v520
    %v1691 = vunpack.c.h.b16 %v520
    %v1692 = vunpack.c.l.b16 %v521
    %v1693 = vunpack.c.h.b16 %v521
    %v1694 = vunpack.c.l.b16 %v522
    %v1695 = vunpack.c.h.b16 %v522
    %v1696 = vunpack.c.l.b16 %v523
    %v1697 = vunpack.c.h.b16 %v523
    %v1698 = vunpack.c.l.b16 %v524
    %v1699 = vunpack.c.h.b16 %v524
    %v1700 = vunpack.c.l.b16 %v525
    %v1701 = vunpack.c.h.b16 %v525
    %v1702 = vunpack.c.l.b16 %v526
    %v1703 = vunpack.c.h.b16 %v526
    %v1704 = vunpack.c.l.b16 %v527
    %v1705 = vunpack.c.h.b16 %v527
    %v1706 = vunpack.c.l.b16 %v528
    %v1707 = vunpack.c.h.b16 %v528
    %v1708 = vunpack.c.l.b16 %v529
    %v1709 = vunpack.c.h.b16 %v529
    %v1710 = vunpack.c.l.b16 %v530
    %v1711 = vunpack.c.h.b16 %v530
    %v1712 = vunpack.c.l.b16 %v531
    %v1713 = vunpack.c.h.b16 %v531
    %v1714 = vunpack.c.l.b16 %v532
    %v1715 = vunpack.c.h.b16 %v532
    %v1716 = vunpack.c.l.b16 %v533
    %v1717 = vunpack.c.h.b16 %v533
    %v1718 = vunpack.c.l.b16 %v534
    %v1719 = vunpack.c.h.b16 %v534
    %v1720 = vunpack.c.l.b16 %v535
    %v1721 = vunpack.c.h.b16 %v535
    %v1722 = vunpack.c.l.b16 %v536
    %v1723 = vunpack.c.h.b16 %v536
    %v1724 = vunpack.c.l.b16 %v537
    %v1725 = vunpack.c.h.b16 %v537
    %v1726 = vunpack.c.l.b16 %v538
    %v1727 = vunpack.c.h.b16 %v538
    %v1728 = vunpack.c.l.b16 %v539
    %v1729 = vunpack.c.h.b16 %v539
    %v1730 = vunpack.c.l.b16 %v540
    %v1731 = vunpack.c.h.b16 %v540
    %v1732 = vunpack.c.l.b16 %v541
    %v1733 = vunpack.c.h.b16 %v541
    %v1734 = vunpack.c.l.b16 %v542
    %v1735 = vunpack.c.h.b16 %v542
    %v1736 = vunpack.c.l.b16 %v543
    %v1737 = vunpack.c.h.b16 %v543
    %v1738 = vpack.c.b16 %v962, %v954
    %v1739 = vpack.c.b16 %v963, %v955
    %v1740 = vpack.c.b16 %v964, %v956
    %v1741 = vpack.c.b16 %v965, %v957
    %v1742 = vpack.c.b16 %v966, %v958
    %v1743 = vpack.c.b16 %v967, %v959
    %v1744 = vpack.c.b16 %v968, %v960
    %v1745 = vpack.c.b16 %v969, %v961
    %v1746 = vpack.c.b16 %v978, %v970
    %v1747 = vpack.c.b16 %v979, %v971
    %v1748 = vpack.c.b16 %v980, %v972
    %v1749 = vpack.c.b16 %v981, %v973
    %v1750 = vpack.c.b16 %v982, %v974
    %v1751 = vpack.c.b16 %v983, %v975
    %v1752 = vpack.c.b16 %v984, %v976
    %v1753 = vpack.c.b16 %v985, %v977
    %v1754 = vpack.c.b16 %v994, %v986
    %v1755 = vpack.c.b16 %v995, %v987
    %v1756 = vpack.c.b16 %v996, %v988
    %v1757 = vpack.c.b16 %v997, %v989
    %v1758 = vpack.c.b16 %v998, %v990
    %v1759 = vpack.c.b16 %v999, %v991
    %v1760 = vpack.c.b16 %v1000, %v992
    %v1761 = vpack.c.b16 %v1001, %v993
    %v1762 = vpack.c.b16 %v1010, %v1002
    %v1763 = vpack.c.b16 %v1011, %v1003
    %v1764 = vpack.c.b16 %v1012, %v1004
    %v1765 = vpack.c.b16 %v1013, %v1005
    %v1766 = vpack.c.b16 %v1014, %v1006
    %v1767 = vpack.c.b16 %v1015, %v1007
    %v1768 = vpack.c.b16 %v1016, %v1008
    %v1769 = vpack.c.b16 %v1017, %v1009
    %v1770 = vpack.c.b16 %v1026, %v1018
    %v1771 = vpack.c.b16 %v1027, %v1019
    %v1772 = vpack.c.b16 %v1028, %v1020
    %v1773 = vpack.c.b16 %v1029, %v1021
    %v1774 = vpack.c.b16 %v1030, %v1022
    %v1775 = vpack.c.b16 %v1031, %v1023
    %v1776 = vpack.c.b16 %v1032, %v1024
    %v1777 = vpack.c.b16 %v1033, %v1025
    %v1778 = vpack.c.b16 %v1042, %v1034
    %v1779 = vpack.c.b16 %v1043, %v1035
    %v1780 = vpack.c.b16 %v1044, %v1036
    %v1781 = vpack.c.b16 %v1045, %v1037
    %v1782 = vpack.c.b16 %v1046, %v1038
    %v1783 = vpack.c.b16 %v1047, %v1039
    %v1784 = vpack.c.b16 %v1048, %v1040
    %v1785 = vpack.c.b16 %v1049, %v1041
    %v1786 = vpack.c.b16 %v1058, %v1050
    %v1787 = vpack.c.b16 %v1059, %v1051
    %v1788 = vpack.c.b16 %v1060, %v1052
    %v1789 = vpack.c.b16 %v1061, %v1053
    %v1790 = vpack.c.b16 %v1062, %v1054
    %v1791 = vpack.c.b16 %v1063, %v1055
    %v1792 = vpack.c.b16 %v1064, %v1056
    %v1793 = vpack.c.b16 %v1065, %v1057
    %v1794 = vpack.c.b16 %v1074, %v1066
    %v1795 = vpack.c.b16 %v1075, %v1067
    %v1796 = vpack.c.b16 %v1076, %v1068
    %v1797 = vpack.c.b16 %v1077, %v1069
    %v1798 = vpack.c.b16 %v1078, %v1070
    %v1799 = vpack.c.b16 %v1079, %v1071
    %v1800 = vpack.c.b16 %v1080, %v1072
    %v1801 = vpack.c.b16 %v1081, %v1073
    %v1802 = vpack.c.b16 %v1090, %v1082
    %v1803 = vpack.c.b16 %v1091, %v1083
    %v1804 = vpack.c.b16 %v1092, %v1084
    %v1805 = vpack.c.b16 %v1093, %v1085
    %v1806 = vpack.c.b16 %v1094, %v1086
    %v1807 = vpack.c.b16 %v1095, %v1087
    %v1808 = vpack.c.b16 %v1096, %v1088
    %v1809 = vpack.c.b16 %v1097, %v1089
    %v1810 = vpack.c.b16 %v1106, %v1098
    %v1811 = vpack.c.b16 %v1107, %v1099
    %v1812 = vpack.c.b16 %v1108, %v1100
    %v1813 = vpack.c.b16 %v1109, %v1101
    %v1814 = vpack.c.b16 %v1110, %v1102
    %v1815 = vpack.c.b16 %v1111, %v1103
    %v1816 = vpack.c.b16 %v1112, %v1104
    %v1817 = vpack.c.b16 %v1113, %v1105
    %v1818 = vpack.c.b16 %v1122, %v1114
    %v1819 = vpack.c.b16 %v1123, %v1115
    %v1820 = vpack.c.b16 %v1124, %v1116
    %v1821 = vpack.c.b16 %v1125, %v1117
    %v1822 = vpack.c.b16 %v1126, %v1118
    %v1823 = vpack.c.b16 %v1127, %v1119
    %v1824 = vpack.c.b16 %v1128, %v1120
    %v1825 = vpack.c.b16 %v1129, %v1121
    %v1826 = vpack.c.b16 %v1138, %v1130
    %v1827 = vpack.c.b16 %v1139, %v1131
    %v1828 = vpack.c.b16 %v1140, %v1132
    %v1829 = vpack.c.b16 %v1141, %v1133
    %v1830 = vpack.c.b16 %v1142, %v1134
    %v1831 = vpack.c.b16 %v1143, %v1135
    %v1832 = vpack.c.b16 %v1144, %v1136
    %v1833 = vpack.c.b16 %v1145, %v1137
    %v1834 = vpack.c.b16 %v1154, %v1146
    %v1835 = vpack.c.b16 %v1155, %v1147
    %v1836 = vpack.c.b16 %v1156, %v1148
    %v1837 = vpack.c.b16 %v1157, %v1149
    %v1838 = vpack.c.b16 %v1158, %v1150
    %v1839 = vpack.c.b16 %v1159, %v1151
    %v1840 = vpack.c.b16 %v1160, %v1152
    %v1841 = vpack.c.b16 %v1161, %v1153
    %v1842 = vpack.c.b16 %v1170, %v1162
    %v1843 = vpack.c.b16 %v1171, %v1163
    %v1844 = vpack.c.b16 %v1172, %v1164
    %v1845 = vpack.c.b16 %v1173, %v1165
    %v1846 = vpack.c.b16 %v1174, %v1166
    %v1847 = vpack.c.b16 %v1175, %v1167
    %v1848 = vpack.c.b16 %v1176, %v1168
    %v1849 = vpack.c.b16 %v1177, %v1169
    %v1850 = vpack.c.b16 %v1186, %v1178
    %v1851 = vpack.c.b16 %v1187, %v1179
    %v1852 = vpack.c.b16 %v1188, %v1180
    %v1853 = vpack.c.b16 %v1189, %v1181
    %v1854 = vpack.c.b16 %v1190, %v1182
    %v1855 = vpack.c.b16 %v1191, %v1183
    %v1856 = vpack.c.b16 %v1192, %v1184
    %v1857 = vpack.c.b16 %v1193, %v1185
    %v1858 = vpack.c.b16 %v1202, %v1194
    %v1859 = vpack.c.b16 %v1203, %v1195
    %v1860 = vpack.c.b16 %v1204, %v1196
    %v1861 = vpack.c.b16 %v1205, %v1197
    %v1862 = vpack.c.b16 %v1206, %v1198
    %v1863 = vpack.c.b16 %v1207, %v1199
    %v1864 = vpack.c.b16 %v1208, %v1200
    %v1865 = vpack.c.b16 %v1209, %v1201
    %v1866 = vpack.c.b16 %v1218, %v1210
    %v1867 = vpack.c.b16 %v1219, %v1211
    %v1868 = vpack.c.b16 %v1220, %v1212
    %v1869 = vpack.c.b16 %v1221, %v1213
    %v1870 = vpack.c.b16 %v1222, %v1214
    %v1871 = vpack.c.b16 %v1223, %v1215
    %v1872 = vpack.c.b16 %v1224, %v1216
    %v1873 = vpack.c.b16 %v1225, %v1217
    %v1874 = vpack.c.b16 %v1234, %v1226
    %v1875 = vpack.c.b16 %v1235, %v1227
    %v1876 = vpack.c.b16 %v1236, %v1228
    %v1877 = vpack.c.b16 %v1237, %v1229
    %v1878 = vpack.c.b16 %v1238, %v1230
    %v1879 = vpack.c.b16 %v1239, %v1231
    %v1880 = vpack.c.b16 %v1240, %v1232
    %v1881 = vpack.c.b16 %v1241, %v1233
    %v1882 = vpack.c.b16 %v1250, %v1242
    %v1883 = vpack.c.b16 %v1251, %v1243
    %v1884 = vpack.c.b16 %v1252, %v1244
    %v1885 = vpack.c.b16 %v1253, %v1245
    %v1886 = vpack.c.b16 %v1254, %v1246
    %v1887 = vpack.c.b16 %v1255, %v1247
    %v1888 = vpack.c.b16 %v1256, %v1248
    %v1889 = vpack.c.b16 %v1257, %v1249
    %v1890 = vpack.c.b16 %v1266, %v1258
    %v1891 = vpack.c.b16 %v1267, %v1259
    %v1892 = vpack.c.b16 %v1268, %v1260
    %v1893 = vpack.c.b16 %v1269, %v1261
    %v1894 = vpack.c.b16 %v1270, %v1262
    %v1895 = vpack.c.b16 %v1271, %v1263
    %v1896 = vpack.c.b16 %v1272, %v1264
    %v1897 = vpack.c.b16 %v1273, %v1265
    %v1898 = vpack.c.b16 %v1282, %v1274
    %v1899 = vpack.c.b16 %v1283, %v1275
    %v1900 = vpack.c.b16 %v1284, %v1276
    %v1901 = vpack.c.b16 %v1285, %v1277
    %v1902 = vpack.c.b16 %v1286, %v1278
    %v1903 = vpack.c.b16 %v1287, %v1279
    %v1904 = vpack.c.b16 %v1288, %v1280
    %v1905 = vpack.c.b16 %v1289, %v1281
    %v1906 = vpack.c.b16 %v1298, %v1290
    %v1907 = vpack.c.b16 %v1299, %v1291
    %v1908 = vpack.c.b16 %v1300, %v1292
    %v1909 = vpack.c.b16 %v1301, %v1293
    %v1910 = vpack.c.b16 %v1302, %v1294
    %v1911 = vpack.c.b16 %v1303, %v1295
    %v1912 = vpack.c.b16 %v1304, %v1296
    %v1913 = vpack.c.b16 %v1305, %v1297
    %v1914 = vpack.c.b16 %v1314, %v1306
    %v1915 = vpack.c.b16 %v1315, %v1307
    %v1916 = vpack.c.b16 %v1316, %v1308
    %v1917 = vpack.c.b16 %v1317, %v1309
    %v1918 = vpack.c.b16 %v1318, %v1310
    %v1919 = vpack.c.b16 %v1319, %v1311
    %v1920 = vpack.c.b16 %v1320, %v1312
    %v1921 = vpack.c.b16 %v1321, %v1313
    %v1922 = vpack.c.b16 %v1330, %v1322
    %v1923 = vpack.c.b16 %v1331, %v1323
    %v1924 = vpack.c.b16 %v1332, %v1324
    %v1925 = vpack.c.b16 %v1333, %v1325
    %v1926 = vpack.c.b16 %v1334, %v1326
    %v1927 = vpack.c.b16 %v1335, %v1327
    %v1928 = vpack.c.b16 %v1336, %v1328
    %v1929 = vpack.c.b16 %v1337, %v1329
    %v1930 = vpack.c.b16 %v1346, %v1338
    %v1931 = vpack.c.b16 %v1347, %v1339
    %v1932 = vpack.c.b16 %v1348, %v1340
    %v1933 = vpack.c.b16 %v1349, %v1341
    %v1934 = vpack.c.b16 %v1350, %v1342
    %v1935 = vpack.c.b16 %v1351, %v1343
    %v1936 = vpack.c.b16 %v1352, %v1344
    %v1937 = vpack.c.b16 %v1353, %v1345
    %v1938 = vpack.c.b16 %v1362, %v1354
    %v1939 = vpack.c.b16 %v1363, %v1355
    %v1940 = vpack.c.b16 %v1364, %v1356
    %v1941 = vpack.c.b16 %v1365, %v1357
    %v1942 = vpack.c.b16 %v1366, %v1358
    %v1943 = vpack.c.b16 %v1367, %v1359
    %v1944 = vpack.c.b16 %v1368, %v1360
    %v1945 = vpack.c.b16 %v1369, %v1361
    %v1946 = vpack.c.b16 %v1378, %v1370
    %v1947 = vpack.c.b16 %v1379, %v1371
    %v1948 = vpack.c.b16 %v1380, %v1372
    %v1949 = vpack.c.b16 %v1381, %v1373
    %v1950 = vpack.c.b16 %v1382, %v1374
    %v1951 = vpack.c.b16 %v1383, %v1375
    %v1952 = vpack.c.b16 %v1384, %v1376
    %v1953 = vpack.c.b16 %v1385, %v1377
    %v1954 = vpack.c.b16 %v1394, %v1386
    %v1955 = vpack.c.b16 %v1395, %v1387
    %v1956 = vpack.c.b16 %v1396, %v1388
    %v1957 = vpack.c.b16 %v1397, %v1389
    %v1958 = vpack.c.b16 %v1398, %v1390
    %v1959 = vpack.c.b16 %v1399, %v1391
    %v1960 = vpack.c.b16 %v1400, %v1392
    %v1961 = vpack.c.b16 %v1401, %v1393
    %v1962 = vpack.c.b16 %v1410, %v1402
    %v1963 = vpack.c.b16 %v1411, %v1403
    %v1964 = vpack.c.b16 %v1412, %v1404
    %v1965 = vpack.c.b16 %v1413, %v1405
    %v1966 = vpack.c.b16 %v1414, %v1406
    %v1967 = vpack.c.b16 %v1415, %v1407
    %v1968 = vpack.c.b16 %v1416, %v1408
    %v1969 = vpack.c.b16 %v1417, %v1409
    %v1970 = vpack.c.b16 %v1426, %v1418
    %v1971 = vpack.c.b16 %v1427, %v1419
    %v1972 = vpack.c.b16 %v1428, %v1420
    %v1973 = vpack.c.b16 %v1429, %v1421
    %v1974 = vpack.c.b16 %v1430, %v1422
    %v1975 = vpack.c.b16 %v1431, %v1423
    %v1976 = vpack.c.b16 %v1432, %v1424
    %v1977 = vpack.c.b16 %v1433, %v1425
    %v1978 = vpack.c.b16 %v1442, %v1434
    %v1979 = vpack.c.b16 %v1443, %v1435
    %v1980 = vpack.c.b16 %v1444, %v1436
    %v1981 = vpack.c.b16 %v1445, %v1437
    %v1982 = vpack.c.b16 %v1446, %v1438
    %v1983 = vpack.c.b16 %v1447, %v1439
    %v1984 = vpack.c.b16 %v1448, %v1440
    %v1985 = vpack.c.b16 %v1449, %v1441
    %v1986 = vpack.c.b16 %v1458, %v1450
    %v1987 = vpack.c.b16 %v1459, %v1451
    %v1988 = vpack.c.b16 %v1460, %v1452
    %v1989 = vpack.c.b16 %v1461, %v1453
    %v1990 = vpack.c.b16 %v1462, %v1454
    %v1991 = vpack.c.b16 %v1463, %v1455
    %v1992 = vpack.c.b16 %v1464, %v1456
    %v1993 = vpack.c.b16 %v1465, %v1457
    %v1994 = vpack.c.b16 %v1474, %v1466
    %v1995 = vpack.c.b16 %v1475, %v1467
    %v1996 = vpack.c.b16 %v1476, %v1468
    %v1997 = vpack.c.b16 %v1477, %v1469
    %v1998 = vpack.c.b16 %v1478, %v1470
    %v1999 = vpack.c.b16 %v1479, %v1471
    %v2000 = vpack.c.b16 %v1480, %v1472
    %v2001 = vpack.c.b16 %v1481, %v1473
    %v2002 = vpack.c.b16 %v1490, %v1482
    %v2003 = vpack.c.b16 %v1491, %v1483
    %v2004 = vpack.c.b16 %v1492, %v1484
    %v2005 = vpack.c.b16 %v1493, %v1485
    %v2006 = vpack.c.b16 %v1494, %v1486
    %v2007 = vpack.c.b16 %v1495, %v1487
    %v2008 = vpack.c.b16 %v1496, %v1488
    %v2009 = vpack.c.b16 %v1497, %v1489
    %v2010 = vpack.c.b16 %v1506, %v1498
    %v2011 = vpack.c.b16 %v1507, %v1499
    %v2012 = vpack.c.b16 %v1508, %v1500
    %v2013 = vpack.c.b16 %v1509, %v1501
    %v2014 = vpack.c.b16 %v1510, %v1502
    %v2015 = vpack.c.b16 %v1511, %v1503
    %v2016 = vpack.c.b16 %v1512, %v1504
    %v2017 = vpack.c.b16 %v1513, %v1505
    %v2018 = vpack.c.b16 %v1522, %v1514
    %v2019 = vpack.c.b16 %v1523, %v1515
    %v2020 = vpack.c.b16 %v1524, %v1516
    %v2021 = vpack.c.b16 %v1525, %v1517
    %v2022 = vpack.c.b16 %v1526, %v1518
    %v2023 = vpack.c.b16 %v1527, %v1519
    %v2024 = vpack.c.b16 %v1528, %v1520
    %v2025 = vpack.c.b16 %v1529, %v1521
    %v2026 = vpack.c.b16 %v1538, %v1530
    %v2027 = vpack.c.b16 %v1539, %v1531
    %v2028 = vpack.c.b16 %v1540, %v1532
    %v2029 = vpack.c.b16 %v1541, %v1533
    %v2030 = vpack.c.b16 %v1542, %v1534
    %v2031 = vpack.c.b16 %v1543, %v1535
    %v2032 = vpack.c.b16 %v1544, %v1536
    %v2033 = vpack.c.b16 %v1545, %v1537
    %v2034 = vpack.c.b16 %v1554, %v1546
    %v2035 = vpack.c.b16 %v1555, %v1547
    %v2036 = vpack.c.b16 %v1556, %v1548
    %v2037 = vpack.c.b16 %v1557, %v1549
    %v2038 = vpack.c.b16 %v1558, %v1550
    %v2039 = vpack.c.b16 %v1559, %v1551
    %v2040 = vpack.c.b16 %v1560, %v1552
    %v2041 = vpack.c.b16 %v1561, %v1553
    %v2042 = vpack.c.b16 %v1570, %v1562
    %v2043 = vpack.c.b16 %v1571, %v1563
    %v2044 = vpack.c.b16 %v1572, %v1564
    %v2045 = vpack.c.b16 %v1573, %v1565
    %v2046 = vpack.c.b16 %v1574, %v1566
    %v2047 = vpack.c.b16 %v1575, %v1567
    %v2048 = vpack.c.b16 %v1576, %v1568
    %v2049 = vpack.c.b16 %v1577, %v1569
    %v2050 = vpack.c.b16 %v1586, %v1578
    %v2051 = vpack.c.b16 %v1587, %v1579
    %v2052 = vpack.c.b16 %v1588, %v1580
    %v2053 = vpack.c.b16 %v1589, %v1581
    %v2054 = vpack.c.b16 %v1590, %v1582
    %v2055 = vpack.c.b16 %v1591, %v1583
    %v2056 = vpack.c.b16 %v1592, %v1584
    %v2057 = vpack.c.b16 %v1593, %v1585
    %v2058 = vpack.c.b16 %v1602, %v1594
    %v2059 = vpack.c.b16 %v1603, %v1595
    %v2060 = vpack.c.b16 %v1604, %v1596
    %v2061 = vpack.c.b16 %v1605, %v1597
    %v2062 = vpack.c.b16 %v1606, %v1598
    %v2063 = vpack.c.b16 %v1607, %v1599
    %v2064 = vpack.c.b16 %v1608, %v1600
    %v2065 = vpack.c.b16 %v1609, %v1601
    %v2066 = vpack.c.b16 %v1618, %v1610
    %v2067 = vpack.c.b16 %v1619, %v1611
    %v2068 = vpack.c.b16 %v1620, %v1612
    %v2069 = vpack.c.b16 %v1621, %v1613
    %v2070 = vpack.c.b16 %v1622, %v1614
    %v2071 = vpack.c.b16 %v1623, %v1615
    %v2072 = vpack.c.b16 %v1624, %v1616
    %v2073 = vpack.c.b16 %v1625, %v1617
    %v2074 = vpack.c.b16 %v1634, %v1626
    %v2075 = vpack.c.b16 %v1635, %v1627
    %v2076 = vpack.c.b16 %v1636, %v1628
    %v2077 = vpack.c.b16 %v1637, %v1629
    %v2078 = vpack.c.b16 %v1638, %v1630
    %v2079 = vpack.c.b16 %v1639, %v1631
    %v2080 = vpack.c.b16 %v1640, %v1632
    %v2081 = vpack.c.b16 %v1641, %v1633
    %v2082 = vpack.c.b16 %v1650, %v1642
    %v2083 = vpack.c.b16 %v1651, %v1643
    %v2084 = vpack.c.b16 %v1652, %v1644
    %v2085 = vpack.c.b16 %v1653, %v1645
    %v2086 = vpack.c.b16 %v1654, %v1646
    %v2087 = vpack.c.b16 %v1655, %v1647
    %v2088 = vpack.c.b16 %v1656, %v1648
    %v2089 = vpack.c.b16 %v1657, %v1649
    %v2090 = vpack.c.b16 %v1666, %v1658
    %v2091 = vpack.c.b16 %v1667, %v1659
    %v2092 = vpack.c.b16 %v1668, %v1660
    %v2093 = vpack.c.b16 %v1669, %v1661
    %v2094 = vpack.c.b16 %v1670, %v1662
    %v2095 = vpack.c.b16 %v1671, %v1663
    %v2096 = vpack.c.b16 %v1672, %v1664
    %v2097 = vpack.c.b16 %v1673, %v1665
    %v2098 = vpack.c.b16 %v1682, %v1674
    %v2099 = vpack.c.b16 %v1683, %v1675
    %v2100 = vpack.c.b16 %v1684, %v1676
    %v2101 = vpack.c.b16 %v1685, %v1677
    %v2102 = vpack.c.b16 %v1686, %v1678
    %v2103 = vpack.c.b16 %v1687, %v1679
    %v2104 = vpack.c.b16 %v1688, %v1680
    %v2105 = vpack.c.b16 %v1689, %v1681
    %v2106 = vpack.c.b16 %v1698, %v1690
    %v2107 = vpack.c.b16 %v1699, %v1691
    %v2108 = vpack.c.b16 %v1700, %v1692
    %v2109 = vpack.c.b16 %v1701, %v1693
    %v2110 = vpack.c.b16 %v1702, %v1694
    %v2111 = vpack.c.b16 %v1703, %v1695
    %v2112 = vpack.c.b16 %v1704, %v1696
    %v2113 = vpack.c.b16 %v1705, %v1697
    %v2114 = vpack.c.b16 %v1714, %v1706
    %v2115 = vpack.c.b16 %v1715, %v1707
    %v2116 = vpack.c.b16 %v1716, %v1708
    %v2117 = vpack.c.b16 %v1717, %v1709
    %v2118 = vpack.c.b16 %v1718, %v1710
    %v2119 = vpack.c.b16 %v1719, %v1711
    %v2120 = vpack.c.b16 %v1720, %v1712
    %v2121 = vpack.c.b16 %v1721, %v1713
    %v2122 = vpack.c.b16 %v1730, %v1722
    %v2123 = vpack.c.b16 %v1731, %v1723
    %v2124 = vpack.c.b16 %v1732, %v1724
    %v2125 = vpack.c.b16 %v1733, %v1725
    %v2126 = vpack.c.b16 %v1734, %v1726
    %v2127 = vpack.c.b16 %v1735, %v1727
    %v2128 = vpack.c.b16 %v1736, %v1728
    %v2129 = vpack.c.b16 %v1737, %v1729
    %vm2522 = vcmask 130048
    %v2524 = vsel %vm2522, %v151, 0
    %2526 = vmatpush.bf16.msra.mxu0 %v1794
    %2527 = vmatpush.bf16.msra.mxu0 %v1786
    %2528 = vmatpush.bf16.msra.mxu0 %v1778
    %2529 = vmatpush.bf16.msra.mxu0 %v1770
    %2530 = vmatpush.bf16.msra.mxu0 %v1762
    %2531 = vmatpush.bf16.msra.mxu0 %v1754
    %2532 = vmatpush.bf16.msra.mxu0 %v1746
    %2533 = vmatpush.bf16.msra.mxu0 %v1738
    %2534 = vmatmul.bf16.gmra.mxu0 %v145
    %v2535 = vpop.f32.mrf.mxu0
    %v2536 = vadd.f32 %v546, %v2535
    %v2537 = vpop.f32.mrf.mxu0
    %2538 = vdwg.mxu0
    %2539 = vmatpush.bf16.msra.mxu0 %v1858
    %2540 = vmatpush.bf16.msra.mxu0 %v1850
    %2541 = vmatpush.bf16.msra.mxu0 %v1842
    %2542 = vmatpush.bf16.msra.mxu0 %v1834
    %2543 = vmatpush.bf16.msra.mxu0 %v1826
    %2544 = vmatpush.bf16.msra.mxu0 %v1818
    %2545 = vmatpush.bf16.msra.mxu0 %v1810
    %2546 = vmatpush.bf16.msra.mxu0 %v1802
    %2547 = vmatmul.bf16.gmra.mxu0 %v146
    %v2548 = vpop.f32.mrf.mxu0
    %v2549 = vadd.f32 %v2536, %v2548
    %v2550 = vpop.f32.mrf.mxu0
    %2551 = vdwg.mxu0
    %2552 = vmatpush.bf16.msra.mxu0 %v1922
    %2553 = vmatpush.bf16.msra.mxu0 %v1914
    %2554 = vmatpush.bf16.msra.mxu0 %v1906
    %2555 = vmatpush.bf16.msra.mxu0 %v1898
    %2556 = vmatpush.bf16.msra.mxu0 %v1890
    %2557 = vmatpush.bf16.msra.mxu0 %v1882
    %2558 = vmatpush.bf16.msra.mxu0 %v1874
    %2559 = vmatpush.bf16.msra.mxu0 %v1866
    %2560 = vmatmul.bf16.gmra.mxu0 %v147
    %v2561 = vpop.f32.mrf.mxu0
    %v2562 = vadd.f32 %v2549, %v2561
    %v2563 = vpop.f32.mrf.mxu0
    %2564 = vdwg.mxu0
    %2565 = vmatpush.bf16.msra.mxu0 %v1986
    %2566 = vmatpush.bf16.msra.mxu0 %v1978
    %2567 = vmatpush.bf16.msra.mxu0 %v1970
    %2568 = vmatpush.bf16.msra.mxu0 %v1962
    %2569 = vmatpush.bf16.msra.mxu0 %v1954
    %2570 = vmatpush.bf16.msra.mxu0 %v1946
    %2571 = vmatpush.bf16.msra.mxu0 %v1938
    %2572 = vmatpush.bf16.msra.mxu0 %v1930
    %2573 = vmatmul.bf16.gmra.mxu0 %v148
    %v2574 = vpop.f32.mrf.mxu0
    %v2575 = vadd.f32 %v2562, %v2574
    %v2576 = vpop.f32.mrf.mxu0
    %2577 = vdwg.mxu0
    %2578 = vmatpush.bf16.msra.mxu0 %v2050
    %2579 = vmatpush.bf16.msra.mxu0 %v2042
    %2580 = vmatpush.bf16.msra.mxu0 %v2034
    %2581 = vmatpush.bf16.msra.mxu0 %v2026
    %2582 = vmatpush.bf16.msra.mxu0 %v2018
    %2583 = vmatpush.bf16.msra.mxu0 %v2010
    %2584 = vmatpush.bf16.msra.mxu0 %v2002
    %2585 = vmatpush.bf16.msra.mxu0 %v1994
    %2586 = vmatmul.bf16.gmra.mxu0 %v149
    %v2587 = vpop.f32.mrf.mxu0
    %v2588 = vadd.f32 %v2575, %v2587
    %v2589 = vpop.f32.mrf.mxu0
    %2590 = vdwg.mxu0
    %2591 = vmatpush.bf16.msra.mxu0 %v2114
    %2592 = vmatpush.bf16.msra.mxu0 %v2106
    %2593 = vmatpush.bf16.msra.mxu0 %v2098
    %2594 = vmatpush.bf16.msra.mxu0 %v2090
    %2595 = vmatpush.bf16.msra.mxu0 %v2082
    %2596 = vmatpush.bf16.msra.mxu0 %v2074
    %2597 = vmatpush.bf16.msra.mxu0 %v2066
    %2598 = vmatpush.bf16.msra.mxu0 %v2058
    %2599 = vmatmul.bf16.gmra.mxu0 %v150
    %v2600 = vpop.f32.mrf.mxu0
    %v2601 = vadd.f32 %v2588, %v2600
    %v2602 = vpop.f32.mrf.mxu0
    %2603 = vdwg.mxu0
    %2604 = vmatpush.bf16.msra.mxu0 0
    %2605 = vmatpush.bf16.msra.mxu0 0
    %2606 = vmatpush.bf16.msra.mxu0 0
    %2607 = vmatpush.bf16.msra.mxu0 0
    %2608 = vmatpush.bf16.msra.mxu0 0
    %2609 = vmatpush.bf16.msra.mxu0 0
    %2610 = vmatpush.bf16.msra.mxu0 0
    %2611 = vmatpush.bf16.msra.mxu0 %v2122
    %2612 = vmatmul.bf16.gmra.mxu0 %v2524
    %v2613 = vpop.f32.mrf.mxu0
    %v2614 = vadd.f32 %v2601, %v2613
    %v2615 = vpop.f32.mrf.mxu0
    %2616 = vdwg.mxu0
    %2617 = vmatpush.bf16.msra.mxu0 %v1795
    %2618 = vmatpush.bf16.msra.mxu0 %v1787
    %2619 = vmatpush.bf16.msra.mxu0 %v1779
    %2620 = vmatpush.bf16.msra.mxu0 %v1771
    %2621 = vmatpush.bf16.msra.mxu0 %v1763
    %2622 = vmatpush.bf16.msra.mxu0 %v1755
    %2623 = vmatpush.bf16.msra.mxu0 %v1747
    %2624 = vmatpush.bf16.msra.mxu0 %v1739
    %2625 = vmatmul.bf16.gmra.mxu0 %v145
    %v2626 = vpop.f32.mrf.mxu0
    %v2627 = vadd.f32 %v547, %v2626
    %v2628 = vpop.f32.mrf.mxu0
    %2629 = vdwg.mxu0
    %2630 = vmatpush.bf16.msra.mxu0 %v1859
    %2631 = vmatpush.bf16.msra.mxu0 %v1851
    %2632 = vmatpush.bf16.msra.mxu0 %v1843
    %2633 = vmatpush.bf16.msra.mxu0 %v1835
    %2634 = vmatpush.bf16.msra.mxu0 %v1827
    %2635 = vmatpush.bf16.msra.mxu0 %v1819
    %2636 = vmatpush.bf16.msra.mxu0 %v1811
    %2637 = vmatpush.bf16.msra.mxu0 %v1803
    %2638 = vmatmul.bf16.gmra.mxu0 %v146
    %v2639 = vpop.f32.mrf.mxu0
    %v2640 = vadd.f32 %v2627, %v2639
    %v2641 = vpop.f32.mrf.mxu0
    %2642 = vdwg.mxu0
    %2643 = vmatpush.bf16.msra.mxu0 %v1923
    %2644 = vmatpush.bf16.msra.mxu0 %v1915
    %2645 = vmatpush.bf16.msra.mxu0 %v1907
    %2646 = vmatpush.bf16.msra.mxu0 %v1899
    %2647 = vmatpush.bf16.msra.mxu0 %v1891
    %2648 = vmatpush.bf16.msra.mxu0 %v1883
    %2649 = vmatpush.bf16.msra.mxu0 %v1875
    %2650 = vmatpush.bf16.msra.mxu0 %v1867
    %2651 = vmatmul.bf16.gmra.mxu0 %v147
    %v2652 = vpop.f32.mrf.mxu0
    %v2653 = vadd.f32 %v2640, %v2652
    %v2654 = vpop.f32.mrf.mxu0
    %2655 = vdwg.mxu0
    %2656 = vmatpush.bf16.msra.mxu0 %v1987
    %2657 = vmatpush.bf16.msra.mxu0 %v1979
    %2658 = vmatpush.bf16.msra.mxu0 %v1971
    %2659 = vmatpush.bf16.msra.mxu0 %v1963
    %2660 = vmatpush.bf16.msra.mxu0 %v1955
    %2661 = vmatpush.bf16.msra.mxu0 %v1947
    %2662 = vmatpush.bf16.msra.mxu0 %v1939
    %2663 = vmatpush.bf16.msra.mxu0 %v1931
    %2664 = vmatmul.bf16.gmra.mxu0 %v148
    %v2665 = vpop.f32.mrf.mxu0
    %v2666 = vadd.f32 %v2653, %v2665
    %v2667 = vpop.f32.mrf.mxu0
    %2668 = vdwg.mxu0
    %2669 = vmatpush.bf16.msra.mxu0 %v2051
    %2670 = vmatpush.bf16.msra.mxu0 %v2043
    %2671 = vmatpush.bf16.msra.mxu0 %v2035
    %2672 = vmatpush.bf16.msra.mxu0 %v2027
    %2673 = vmatpush.bf16.msra.mxu0 %v2019
    %2674 = vmatpush.bf16.msra.mxu0 %v2011
    %2675 = vmatpush.bf16.msra.mxu0 %v2003
    %2676 = vmatpush.bf16.msra.mxu0 %v1995
    %2677 = vmatmul.bf16.gmra.mxu0 %v149
    %v2678 = vpop.f32.mrf.mxu0
    %v2679 = vadd.f32 %v2666, %v2678
    %v2680 = vpop.f32.mrf.mxu0
    %2681 = vdwg.mxu0
    %2682 = vmatpush.bf16.msra.mxu0 %v2115
    %2683 = vmatpush.bf16.msra.mxu0 %v2107
    %2684 = vmatpush.bf16.msra.mxu0 %v2099
    %2685 = vmatpush.bf16.msra.mxu0 %v2091
    %2686 = vmatpush.bf16.msra.mxu0 %v2083
    %2687 = vmatpush.bf16.msra.mxu0 %v2075
    %2688 = vmatpush.bf16.msra.mxu0 %v2067
    %2689 = vmatpush.bf16.msra.mxu0 %v2059
    %2690 = vmatmul.bf16.gmra.mxu0 %v150
    %v2691 = vpop.f32.mrf.mxu0
    %v2692 = vadd.f32 %v2679, %v2691
    %v2693 = vpop.f32.mrf.mxu0
    %2694 = vdwg.mxu0
    %2695 = vmatpush.bf16.msra.mxu0 0
    %2696 = vmatpush.bf16.msra.mxu0 0
    %2697 = vmatpush.bf16.msra.mxu0 0
    %2698 = vmatpush.bf16.msra.mxu0 0
    %2699 = vmatpush.bf16.msra.mxu0 0
    %2700 = vmatpush.bf16.msra.mxu0 0
    %2701 = vmatpush.bf16.msra.mxu0 0
    %2702 = vmatpush.bf16.msra.mxu0 %v2123
    %2703 = vmatmul.bf16.gmra.mxu0 %v2524
    %v2704 = vpop.f32.mrf.mxu0
    %v2705 = vadd.f32 %v2692, %v2704
    %v2706 = vpop.f32.mrf.mxu0
    %2707 = vdwg.mxu0
    %2708 = vmatpush.bf16.msra.mxu0 %v1796
    %2709 = vmatpush.bf16.msra.mxu0 %v1788
    %2710 = vmatpush.bf16.msra.mxu0 %v1780
    %2711 = vmatpush.bf16.msra.mxu0 %v1772
    %2712 = vmatpush.bf16.msra.mxu0 %v1764
    %2713 = vmatpush.bf16.msra.mxu0 %v1756
    %2714 = vmatpush.bf16.msra.mxu0 %v1748
    %2715 = vmatpush.bf16.msra.mxu0 %v1740
    %2716 = vmatmul.bf16.gmra.mxu0 %v145
    %v2717 = vpop.f32.mrf.mxu0
    %v2718 = vadd.f32 %v548, %v2717
    %v2719 = vpop.f32.mrf.mxu0
    %2720 = vdwg.mxu0
    %2721 = vmatpush.bf16.msra.mxu0 %v1860
    %2722 = vmatpush.bf16.msra.mxu0 %v1852
    %2723 = vmatpush.bf16.msra.mxu0 %v1844
    %2724 = vmatpush.bf16.msra.mxu0 %v1836
    %2725 = vmatpush.bf16.msra.mxu0 %v1828
    %2726 = vmatpush.bf16.msra.mxu0 %v1820
    %2727 = vmatpush.bf16.msra.mxu0 %v1812
    %2728 = vmatpush.bf16.msra.mxu0 %v1804
    %2729 = vmatmul.bf16.gmra.mxu0 %v146
    %v2730 = vpop.f32.mrf.mxu0
    %v2731 = vadd.f32 %v2718, %v2730
    %v2732 = vpop.f32.mrf.mxu0
    %2733 = vdwg.mxu0
    %2734 = vmatpush.bf16.msra.mxu0 %v1924
    %2735 = vmatpush.bf16.msra.mxu0 %v1916
    %2736 = vmatpush.bf16.msra.mxu0 %v1908
    %2737 = vmatpush.bf16.msra.mxu0 %v1900
    %2738 = vmatpush.bf16.msra.mxu0 %v1892
    %2739 = vmatpush.bf16.msra.mxu0 %v1884
    %2740 = vmatpush.bf16.msra.mxu0 %v1876
    %2741 = vmatpush.bf16.msra.mxu0 %v1868
    %2742 = vmatmul.bf16.gmra.mxu0 %v147
    %v2743 = vpop.f32.mrf.mxu0
    %v2744 = vadd.f32 %v2731, %v2743
    %v2745 = vpop.f32.mrf.mxu0
    %2746 = vdwg.mxu0
    %2747 = vmatpush.bf16.msra.mxu0 %v1988
    %2748 = vmatpush.bf16.msra.mxu0 %v1980
    %2749 = vmatpush.bf16.msra.mxu0 %v1972
    %2750 = vmatpush.bf16.msra.mxu0 %v1964
    %2751 = vmatpush.bf16.msra.mxu0 %v1956
    %2752 = vmatpush.bf16.msra.mxu0 %v1948
    %2753 = vmatpush.bf16.msra.mxu0 %v1940
    %2754 = vmatpush.bf16.msra.mxu0 %v1932
    %2755 = vmatmul.bf16.gmra.mxu0 %v148
    %v2756 = vpop.f32.mrf.mxu0
    %v2757 = vadd.f32 %v2744, %v2756
    %v2758 = vpop.f32.mrf.mxu0
    %2759 = vdwg.mxu0
    %2760 = vmatpush.bf16.msra.mxu0 %v2052
    %2761 = vmatpush.bf16.msra.mxu0 %v2044
    %2762 = vmatpush.bf16.msra.mxu0 %v2036
    %2763 = vmatpush.bf16.msra.mxu0 %v2028
    %2764 = vmatpush.bf16.msra.mxu0 %v2020
    %2765 = vmatpush.bf16.msra.mxu0 %v2012
    %2766 = vmatpush.bf16.msra.mxu0 %v2004
    %2767 = vmatpush.bf16.msra.mxu0 %v1996
    %2768 = vmatmul.bf16.gmra.mxu0 %v149
    %v2769 = vpop.f32.mrf.mxu0
    %v2770 = vadd.f32 %v2757, %v2769
    %v2771 = vpop.f32.mrf.mxu0
    %2772 = vdwg.mxu0
    %2773 = vmatpush.bf16.msra.mxu0 %v2116
    %2774 = vmatpush.bf16.msra.mxu0 %v2108
    %2775 = vmatpush.bf16.msra.mxu0 %v2100
    %2776 = vmatpush.bf16.msra.mxu0 %v2092
    %2777 = vmatpush.bf16.msra.mxu0 %v2084
    %2778 = vmatpush.bf16.msra.mxu0 %v2076
    %2779 = vmatpush.bf16.msra.mxu0 %v2068
    %2780 = vmatpush.bf16.msra.mxu0 %v2060
    %2781 = vmatmul.bf16.gmra.mxu0 %v150
    %v2782 = vpop.f32.mrf.mxu0
    %v2783 = vadd.f32 %v2770, %v2782
    %v2784 = vpop.f32.mrf.mxu0
    %2785 = vdwg.mxu0
    %2786 = vmatpush.bf16.msra.mxu0 0
    %2787 = vmatpush.bf16.msra.mxu0 0
    %2788 = vmatpush.bf16.msra.mxu0 0
    %2789 = vmatpush.bf16.msra.mxu0 0
    %2790 = vmatpush.bf16.msra.mxu0 0
    %2791 = vmatpush.bf16.msra.mxu0 0
    %2792 = vmatpush.bf16.msra.mxu0 0
    %2793 = vmatpush.bf16.msra.mxu0 %v2124
    %2794 = vmatmul.bf16.gmra.mxu0 %v2524
    %v2795 = vpop.f32.mrf.mxu0
    %v2796 = vadd.f32 %v2783, %v2795
    %v2797 = vpop.f32.mrf.mxu0
    %2798 = vdwg.mxu0
    %2799 = vmatpush.bf16.msra.mxu0 %v1797
    %2800 = vmatpush.bf16.msra.mxu0 %v1789
    %2801 = vmatpush.bf16.msra.mxu0 %v1781
    %2802 = vmatpush.bf16.msra.mxu0 %v1773
    %2803 = vmatpush.bf16.msra.mxu0 %v1765
    %2804 = vmatpush.bf16.msra.mxu0 %v1757
    %2805 = vmatpush.bf16.msra.mxu0 %v1749
    %2806 = vmatpush.bf16.msra.mxu0 %v1741
    %2807 = vmatmul.bf16.gmra.mxu0 %v145
    %v2808 = vpop.f32.mrf.mxu0
    %v2809 = vadd.f32 %v549, %v2808
    %v2810 = vpop.f32.mrf.mxu0
    %2811 = vdwg.mxu0
    %2812 = vmatpush.bf16.msra.mxu0 %v1861
    %2813 = vmatpush.bf16.msra.mxu0 %v1853
    %2814 = vmatpush.bf16.msra.mxu0 %v1845
    %2815 = vmatpush.bf16.msra.mxu0 %v1837
    %2816 = vmatpush.bf16.msra.mxu0 %v1829
    %2817 = vmatpush.bf16.msra.mxu0 %v1821
    %2818 = vmatpush.bf16.msra.mxu0 %v1813
    %2819 = vmatpush.bf16.msra.mxu0 %v1805
    %2820 = vmatmul.bf16.gmra.mxu0 %v146
    %v2821 = vpop.f32.mrf.mxu0
    %v2822 = vadd.f32 %v2809, %v2821
    %v2823 = vpop.f32.mrf.mxu0
    %2824 = vdwg.mxu0
    %2825 = vmatpush.bf16.msra.mxu0 %v1925
    %2826 = vmatpush.bf16.msra.mxu0 %v1917
    %2827 = vmatpush.bf16.msra.mxu0 %v1909
    %2828 = vmatpush.bf16.msra.mxu0 %v1901
    %2829 = vmatpush.bf16.msra.mxu0 %v1893
    %2830 = vmatpush.bf16.msra.mxu0 %v1885
    %2831 = vmatpush.bf16.msra.mxu0 %v1877
    %2832 = vmatpush.bf16.msra.mxu0 %v1869
    %2833 = vmatmul.bf16.gmra.mxu0 %v147
    %v2834 = vpop.f32.mrf.mxu0
    %v2835 = vadd.f32 %v2822, %v2834
    %v2836 = vpop.f32.mrf.mxu0
    %2837 = vdwg.mxu0
    %2838 = vmatpush.bf16.msra.mxu0 %v1989
    %2839 = vmatpush.bf16.msra.mxu0 %v1981
    %2840 = vmatpush.bf16.msra.mxu0 %v1973
    %2841 = vmatpush.bf16.msra.mxu0 %v1965
    %2842 = vmatpush.bf16.msra.mxu0 %v1957
    %2843 = vmatpush.bf16.msra.mxu0 %v1949
    %2844 = vmatpush.bf16.msra.mxu0 %v1941
    %2845 = vmatpush.bf16.msra.mxu0 %v1933
    %2846 = vmatmul.bf16.gmra.mxu0 %v148
    %v2847 = vpop.f32.mrf.mxu0
    %v2848 = vadd.f32 %v2835, %v2847
    %v2849 = vpop.f32.mrf.mxu0
    %2850 = vdwg.mxu0
    %2851 = vmatpush.bf16.msra.mxu0 %v2053
    %2852 = vmatpush.bf16.msra.mxu0 %v2045
    %2853 = vmatpush.bf16.msra.mxu0 %v2037
    %2854 = vmatpush.bf16.msra.mxu0 %v2029
    %2855 = vmatpush.bf16.msra.mxu0 %v2021
    %2856 = vmatpush.bf16.msra.mxu0 %v2013
    %2857 = vmatpush.bf16.msra.mxu0 %v2005
    %2858 = vmatpush.bf16.msra.mxu0 %v1997
    %2859 = vmatmul.bf16.gmra.mxu0 %v149
    %v2860 = vpop.f32.mrf.mxu0
    %v2861 = vadd.f32 %v2848, %v2860
    %v2862 = vpop.f32.mrf.mxu0
    %2863 = vdwg.mxu0
    %2864 = vmatpush.bf16.msra.mxu0 %v2117
    %2865 = vmatpush.bf16.msra.mxu0 %v2109
    %2866 = vmatpush.bf16.msra.mxu0 %v2101
    %2867 = vmatpush.bf16.msra.mxu0 %v2093
    %2868 = vmatpush.bf16.msra.mxu0 %v2085
    %2869 = vmatpush.bf16.msra.mxu0 %v2077
    %2870 = vmatpush.bf16.msra.mxu0 %v2069
    %2871 = vmatpush.bf16.msra.mxu0 %v2061
    %2872 = vmatmul.bf16.gmra.mxu0 %v150
    %v2873 = vpop.f32.mrf.mxu0
    %v2874 = vadd.f32 %v2861, %v2873
    %v2875 = vpop.f32.mrf.mxu0
    %2876 = vdwg.mxu0
    %2877 = vmatpush.bf16.msra.mxu0 0
    %2878 = vmatpush.bf16.msra.mxu0 0
    %2879 = vmatpush.bf16.msra.mxu0 0
    %2880 = vmatpush.bf16.msra.mxu0 0
    %2881 = vmatpush.bf16.msra.mxu0 0
    %2882 = vmatpush.bf16.msra.mxu0 0
    %2883 = vmatpush.bf16.msra.mxu0 0
    %2884 = vmatpush.bf16.msra.mxu0 %v2125
    %2885 = vmatmul.bf16.gmra.mxu0 %v2524
    %v2886 = vpop.f32.mrf.mxu0
    %v2887 = vadd.f32 %v2874, %v2886
    %v2888 = vpop.f32.mrf.mxu0
    %2889 = vdwg.mxu0
    %2890 = vmatpush.bf16.msra.mxu0 %v1798
    %2891 = vmatpush.bf16.msra.mxu0 %v1790
    %2892 = vmatpush.bf16.msra.mxu0 %v1782
    %2893 = vmatpush.bf16.msra.mxu0 %v1774
    %2894 = vmatpush.bf16.msra.mxu0 %v1766
    %2895 = vmatpush.bf16.msra.mxu0 %v1758
    %2896 = vmatpush.bf16.msra.mxu0 %v1750
    %2897 = vmatpush.bf16.msra.mxu0 %v1742
    %2898 = vmatmul.bf16.gmra.mxu0 %v145
    %v2899 = vpop.f32.mrf.mxu0
    %v2900 = vadd.f32 %v550, %v2899
    %v2901 = vpop.f32.mrf.mxu0
    %2902 = vdwg.mxu0
    %2903 = vmatpush.bf16.msra.mxu0 %v1862
    %2904 = vmatpush.bf16.msra.mxu0 %v1854
    %2905 = vmatpush.bf16.msra.mxu0 %v1846
    %2906 = vmatpush.bf16.msra.mxu0 %v1838
    %2907 = vmatpush.bf16.msra.mxu0 %v1830
    %2908 = vmatpush.bf16.msra.mxu0 %v1822
    %2909 = vmatpush.bf16.msra.mxu0 %v1814
    %2910 = vmatpush.bf16.msra.mxu0 %v1806
    %2911 = vmatmul.bf16.gmra.mxu0 %v146
    %v2912 = vpop.f32.mrf.mxu0
    %v2913 = vadd.f32 %v2900, %v2912
    %v2914 = vpop.f32.mrf.mxu0
    %2915 = vdwg.mxu0
    %2916 = vmatpush.bf16.msra.mxu0 %v1926
    %2917 = vmatpush.bf16.msra.mxu0 %v1918
    %2918 = vmatpush.bf16.msra.mxu0 %v1910
    %2919 = vmatpush.bf16.msra.mxu0 %v1902
    %2920 = vmatpush.bf16.msra.mxu0 %v1894
    %2921 = vmatpush.bf16.msra.mxu0 %v1886
    %2922 = vmatpush.bf16.msra.mxu0 %v1878
    %2923 = vmatpush.bf16.msra.mxu0 %v1870
    %2924 = vmatmul.bf16.gmra.mxu0 %v147
    %v2925 = vpop.f32.mrf.mxu0
    %v2926 = vadd.f32 %v2913, %v2925
    %v2927 = vpop.f32.mrf.mxu0
    %2928 = vdwg.mxu0
    %2929 = vmatpush.bf16.msra.mxu0 %v1990
    %2930 = vmatpush.bf16.msra.mxu0 %v1982
    %2931 = vmatpush.bf16.msra.mxu0 %v1974
    %2932 = vmatpush.bf16.msra.mxu0 %v1966
    %2933 = vmatpush.bf16.msra.mxu0 %v1958
    %2934 = vmatpush.bf16.msra.mxu0 %v1950
    %2935 = vmatpush.bf16.msra.mxu0 %v1942
    %2936 = vmatpush.bf16.msra.mxu0 %v1934
    %2937 = vmatmul.bf16.gmra.mxu0 %v148
    %v2938 = vpop.f32.mrf.mxu0
    %v2939 = vadd.f32 %v2926, %v2938
    %v2940 = vpop.f32.mrf.mxu0
    %2941 = vdwg.mxu0
    %2942 = vmatpush.bf16.msra.mxu0 %v2054
    %2943 = vmatpush.bf16.msra.mxu0 %v2046
    %2944 = vmatpush.bf16.msra.mxu0 %v2038
    %2945 = vmatpush.bf16.msra.mxu0 %v2030
    %2946 = vmatpush.bf16.msra.mxu0 %v2022
    %2947 = vmatpush.bf16.msra.mxu0 %v2014
    %2948 = vmatpush.bf16.msra.mxu0 %v2006
    %2949 = vmatpush.bf16.msra.mxu0 %v1998
    %2950 = vmatmul.bf16.gmra.mxu0 %v149
    %v2951 = vpop.f32.mrf.mxu0
    %v2952 = vadd.f32 %v2939, %v2951
    %v2953 = vpop.f32.mrf.mxu0
    %2954 = vdwg.mxu0
    %2955 = vmatpush.bf16.msra.mxu0 %v2118
    %2956 = vmatpush.bf16.msra.mxu0 %v2110
    %2957 = vmatpush.bf16.msra.mxu0 %v2102
    %2958 = vmatpush.bf16.msra.mxu0 %v2094
    %2959 = vmatpush.bf16.msra.mxu0 %v2086
    %2960 = vmatpush.bf16.msra.mxu0 %v2078
    %2961 = vmatpush.bf16.msra.mxu0 %v2070
    %2962 = vmatpush.bf16.msra.mxu0 %v2062
    %2963 = vmatmul.bf16.gmra.mxu0 %v150
    %v2964 = vpop.f32.mrf.mxu0
    %v2965 = vadd.f32 %v2952, %v2964
    %v2966 = vpop.f32.mrf.mxu0
    %2967 = vdwg.mxu0
    %2968 = vmatpush.bf16.msra.mxu0 0
    %2969 = vmatpush.bf16.msra.mxu0 0
    %2970 = vmatpush.bf16.msra.mxu0 0
    %2971 = vmatpush.bf16.msra.mxu0 0
    %2972 = vmatpush.bf16.msra.mxu0 0
    %2973 = vmatpush.bf16.msra.mxu0 0
    %2974 = vmatpush.bf16.msra.mxu0 0
    %2975 = vmatpush.bf16.msra.mxu0 %v2126
    %2976 = vmatmul.bf16.gmra.mxu0 %v2524
    %v2977 = vpop.f32.mrf.mxu0
    %v2978 = vadd.f32 %v2965, %v2977
    %v2979 = vpop.f32.mrf.mxu0
    %2980 = vdwg.mxu0
    %2981 = vmatpush.bf16.msra.mxu0 %v1799
    %2982 = vmatpush.bf16.msra.mxu0 %v1791
    %2983 = vmatpush.bf16.msra.mxu0 %v1783
    %2984 = vmatpush.bf16.msra.mxu0 %v1775
    %2985 = vmatpush.bf16.msra.mxu0 %v1767
    %2986 = vmatpush.bf16.msra.mxu0 %v1759
    %2987 = vmatpush.bf16.msra.mxu0 %v1751
    %2988 = vmatpush.bf16.msra.mxu0 %v1743
    %2989 = vmatmul.bf16.gmra.mxu0 %v145
    %v2990 = vpop.f32.mrf.mxu0
    %v2991 = vadd.f32 %v551, %v2990
    %v2992 = vpop.f32.mrf.mxu0
    %2993 = vdwg.mxu0
    %2994 = vmatpush.bf16.msra.mxu0 %v1863
    %2995 = vmatpush.bf16.msra.mxu0 %v1855
    %2996 = vmatpush.bf16.msra.mxu0 %v1847
    %2997 = vmatpush.bf16.msra.mxu0 %v1839
    %2998 = vmatpush.bf16.msra.mxu0 %v1831
    %2999 = vmatpush.bf16.msra.mxu0 %v1823
    %3000 = vmatpush.bf16.msra.mxu0 %v1815
    %3001 = vmatpush.bf16.msra.mxu0 %v1807
    %3002 = vmatmul.bf16.gmra.mxu0 %v146
    %v3003 = vpop.f32.mrf.mxu0
    %v3004 = vadd.f32 %v2991, %v3003
    %v3005 = vpop.f32.mrf.mxu0
    %3006 = vdwg.mxu0
    %3007 = vmatpush.bf16.msra.mxu0 %v1927
    %3008 = vmatpush.bf16.msra.mxu0 %v1919
    %3009 = vmatpush.bf16.msra.mxu0 %v1911
    %3010 = vmatpush.bf16.msra.mxu0 %v1903
    %3011 = vmatpush.bf16.msra.mxu0 %v1895
    %3012 = vmatpush.bf16.msra.mxu0 %v1887
    %3013 = vmatpush.bf16.msra.mxu0 %v1879
    %3014 = vmatpush.bf16.msra.mxu0 %v1871
    %3015 = vmatmul.bf16.gmra.mxu0 %v147
    %v3016 = vpop.f32.mrf.mxu0
    %v3017 = vadd.f32 %v3004, %v3016
    %v3018 = vpop.f32.mrf.mxu0
    %3019 = vdwg.mxu0
    %3020 = vmatpush.bf16.msra.mxu0 %v1991
    %3021 = vmatpush.bf16.msra.mxu0 %v1983
    %3022 = vmatpush.bf16.msra.mxu0 %v1975
    %3023 = vmatpush.bf16.msra.mxu0 %v1967
    %3024 = vmatpush.bf16.msra.mxu0 %v1959
    %3025 = vmatpush.bf16.msra.mxu0 %v1951
    %3026 = vmatpush.bf16.msra.mxu0 %v1943
    %3027 = vmatpush.bf16.msra.mxu0 %v1935
    %3028 = vmatmul.bf16.gmra.mxu0 %v148
    %v3029 = vpop.f32.mrf.mxu0
    %v3030 = vadd.f32 %v3017, %v3029
    %v3031 = vpop.f32.mrf.mxu0
    %3032 = vdwg.mxu0
    %3033 = vmatpush.bf16.msra.mxu0 %v2055
    %3034 = vmatpush.bf16.msra.mxu0 %v2047
    %3035 = vmatpush.bf16.msra.mxu0 %v2039
    %3036 = vmatpush.bf16.msra.mxu0 %v2031
    %3037 = vmatpush.bf16.msra.mxu0 %v2023
    %3038 = vmatpush.bf16.msra.mxu0 %v2015
    %3039 = vmatpush.bf16.msra.mxu0 %v2007
    %3040 = vmatpush.bf16.msra.mxu0 %v1999
    %3041 = vmatmul.bf16.gmra.mxu0 %v149
    %v3042 = vpop.f32.mrf.mxu0
    %v3043 = vadd.f32 %v3030, %v3042
    %v3044 = vpop.f32.mrf.mxu0
    %3045 = vdwg.mxu0
    %3046 = vmatpush.bf16.msra.mxu0 %v2119
    %3047 = vmatpush.bf16.msra.mxu0 %v2111
    %3048 = vmatpush.bf16.msra.mxu0 %v2103
    %3049 = vmatpush.bf16.msra.mxu0 %v2095
    %3050 = vmatpush.bf16.msra.mxu0 %v2087
    %3051 = vmatpush.bf16.msra.mxu0 %v2079
    %3052 = vmatpush.bf16.msra.mxu0 %v2071
    %3053 = vmatpush.bf16.msra.mxu0 %v2063
    %3054 = vmatmul.bf16.gmra.mxu0 %v150
    %v3055 = vpop.f32.mrf.mxu0
    %v3056 = vadd.f32 %v3043, %v3055
    %v3057 = vpop.f32.mrf.mxu0
    %3058 = vdwg.mxu0
    %3059 = vmatpush.bf16.msra.mxu0 0
    %3060 = vmatpush.bf16.msra.mxu0 0
    %3061 = vmatpush.bf16.msra.mxu0 0
    %3062 = vmatpush.bf16.msra.mxu0 0
    %3063 = vmatpush.bf16.msra.mxu0 0
    %3064 = vmatpush.bf16.msra.mxu0 0
    %3065 = vmatpush.bf16.msra.mxu0 0
    %3066 = vmatpush.bf16.msra.mxu0 %v2127
    %3067 = vmatmul.bf16.gmra.mxu0 %v2524
    %v3068 = vpop.f32.mrf.mxu0
    %v3069 = vadd.f32 %v3056, %v3068
    %v3070 = vpop.f32.mrf.mxu0
    %3071 = vdwg.mxu0
    %3072 = vmatpush.bf16.msra.mxu0 %v1800
    %3073 = vmatpush.bf16.msra.mxu0 %v1792
    %3074 = vmatpush.bf16.msra.mxu0 %v1784
    %3075 = vmatpush.bf16.msra.mxu0 %v1776
    %3076 = vmatpush.bf16.msra.mxu0 %v1768
    %3077 = vmatpush.bf16.msra.mxu0 %v1760
    %3078 = vmatpush.bf16.msra.mxu0 %v1752
    %3079 = vmatpush.bf16.msra.mxu0 %v1744
    %3080 = vmatmul.bf16.gmra.mxu0 %v145
    %v3081 = vpop.f32.mrf.mxu0
    %v3082 = vadd.f32 %v552, %v3081
    %v3083 = vpop.f32.mrf.mxu0
    %3084 = vdwg.mxu0
    %3085 = vmatpush.bf16.msra.mxu0 %v1864
    %3086 = vmatpush.bf16.msra.mxu0 %v1856
    %3087 = vmatpush.bf16.msra.mxu0 %v1848
    %3088 = vmatpush.bf16.msra.mxu0 %v1840
    %3089 = vmatpush.bf16.msra.mxu0 %v1832
    %3090 = vmatpush.bf16.msra.mxu0 %v1824
    %3091 = vmatpush.bf16.msra.mxu0 %v1816
    %3092 = vmatpush.bf16.msra.mxu0 %v1808
    %3093 = vmatmul.bf16.gmra.mxu0 %v146
    %v3094 = vpop.f32.mrf.mxu0
    %v3095 = vadd.f32 %v3082, %v3094
    %v3096 = vpop.f32.mrf.mxu0
    %3097 = vdwg.mxu0
    %3098 = vmatpush.bf16.msra.mxu0 %v1928
    %3099 = vmatpush.bf16.msra.mxu0 %v1920
    %3100 = vmatpush.bf16.msra.mxu0 %v1912
    %3101 = vmatpush.bf16.msra.mxu0 %v1904
    %3102 = vmatpush.bf16.msra.mxu0 %v1896
    %3103 = vmatpush.bf16.msra.mxu0 %v1888
    %3104 = vmatpush.bf16.msra.mxu0 %v1880
    %3105 = vmatpush.bf16.msra.mxu0 %v1872
    %3106 = vmatmul.bf16.gmra.mxu0 %v147
    %v3107 = vpop.f32.mrf.mxu0
    %v3108 = vadd.f32 %v3095, %v3107
    %v3109 = vpop.f32.mrf.mxu0
    %3110 = vdwg.mxu0
    %3111 = vmatpush.bf16.msra.mxu0 %v1992
    %3112 = vmatpush.bf16.msra.mxu0 %v1984
    %3113 = vmatpush.bf16.msra.mxu0 %v1976
    %3114 = vmatpush.bf16.msra.mxu0 %v1968
    %3115 = vmatpush.bf16.msra.mxu0 %v1960
    %3116 = vmatpush.bf16.msra.mxu0 %v1952
    %3117 = vmatpush.bf16.msra.mxu0 %v1944
    %3118 = vmatpush.bf16.msra.mxu0 %v1936
    %3119 = vmatmul.bf16.gmra.mxu0 %v148
    %v3120 = vpop.f32.mrf.mxu0
    %v3121 = vadd.f32 %v3108, %v3120
    %v3122 = vpop.f32.mrf.mxu0
    %3123 = vdwg.mxu0
    %3124 = vmatpush.bf16.msra.mxu0 %v2056
    %3125 = vmatpush.bf16.msra.mxu0 %v2048
    %3126 = vmatpush.bf16.msra.mxu0 %v2040
    %3127 = vmatpush.bf16.msra.mxu0 %v2032
    %3128 = vmatpush.bf16.msra.mxu0 %v2024
    %3129 = vmatpush.bf16.msra.mxu0 %v2016
    %3130 = vmatpush.bf16.msra.mxu0 %v2008
    %3131 = vmatpush.bf16.msra.mxu0 %v2000
    %3132 = vmatmul.bf16.gmra.mxu0 %v149
    %v3133 = vpop.f32.mrf.mxu0
    %v3134 = vadd.f32 %v3121, %v3133
    %v3135 = vpop.f32.mrf.mxu0
    %3136 = vdwg.mxu0
    %3137 = vmatpush.bf16.msra.mxu0 %v2120
    %3138 = vmatpush.bf16.msra.mxu0 %v2112
    %3139 = vmatpush.bf16.msra.mxu0 %v2104
    %3140 = vmatpush.bf16.msra.mxu0 %v2096
    %3141 = vmatpush.bf16.msra.mxu0 %v2088
    %3142 = vmatpush.bf16.msra.mxu0 %v2080
    %3143 = vmatpush.bf16.msra.mxu0 %v2072
    %3144 = vmatpush.bf16.msra.mxu0 %v2064
    %3145 = vmatmul.bf16.gmra.mxu0 %v150
    %v3146 = vpop.f32.mrf.mxu0
    %v3147 = vadd.f32 %v3134, %v3146
    %v3148 = vpop.f32.mrf.mxu0
    %3149 = vdwg.mxu0
    %3150 = vmatpush.bf16.msra.mxu0 0
    %3151 = vmatpush.bf16.msra.mxu0 0
    %3152 = vmatpush.bf16.msra.mxu0 0
    %3153 = vmatpush.bf16.msra.mxu0 0
    %3154 = vmatpush.bf16.msra.mxu0 0
    %3155 = vmatpush.bf16.msra.mxu0 0
    %3156 = vmatpush.bf16.msra.mxu0 0
    %3157 = vmatpush.bf16.msra.mxu0 %v2128
    %3158 = vmatmul.bf16.gmra.mxu0 %v2524
    %v3159 = vpop.f32.mrf.mxu0
    %v3160 = vadd.f32 %v3147, %v3159
    %v3161 = vpop.f32.mrf.mxu0
    %3162 = vdwg.mxu0
    %3163 = vmatpush.bf16.msra.mxu0 %v1801
    %3164 = vmatpush.bf16.msra.mxu0 %v1793
    %3165 = vmatpush.bf16.msra.mxu0 %v1785
    %3166 = vmatpush.bf16.msra.mxu0 %v1777
    %3167 = vmatpush.bf16.msra.mxu0 %v1769
    %3168 = vmatpush.bf16.msra.mxu0 %v1761
    %3169 = vmatpush.bf16.msra.mxu0 %v1753
    %3170 = vmatpush.bf16.msra.mxu0 %v1745
    %3171 = vmatmul.bf16.gmra.mxu0 %v145
    %v3172 = vpop.f32.mrf.mxu0
    %v3173 = vadd.f32 %v553, %v3172
    %v3174 = vpop.f32.mrf.mxu0
    %3175 = vdwg.mxu0
    %3176 = vmatpush.bf16.msra.mxu0 %v1865
    %3177 = vmatpush.bf16.msra.mxu0 %v1857
    %3178 = vmatpush.bf16.msra.mxu0 %v1849
    %3179 = vmatpush.bf16.msra.mxu0 %v1841
    %3180 = vmatpush.bf16.msra.mxu0 %v1833
    %3181 = vmatpush.bf16.msra.mxu0 %v1825
    %3182 = vmatpush.bf16.msra.mxu0 %v1817
    %3183 = vmatpush.bf16.msra.mxu0 %v1809
    %3184 = vmatmul.bf16.gmra.mxu0 %v146
    %v3185 = vpop.f32.mrf.mxu0
    %v3186 = vadd.f32 %v3173, %v3185
    %v3187 = vpop.f32.mrf.mxu0
    %3188 = vdwg.mxu0
    %3189 = vmatpush.bf16.msra.mxu0 %v1929
    %3190 = vmatpush.bf16.msra.mxu0 %v1921
    %3191 = vmatpush.bf16.msra.mxu0 %v1913
    %3192 = vmatpush.bf16.msra.mxu0 %v1905
    %3193 = vmatpush.bf16.msra.mxu0 %v1897
    %3194 = vmatpush.bf16.msra.mxu0 %v1889
    %3195 = vmatpush.bf16.msra.mxu0 %v1881
    %3196 = vmatpush.bf16.msra.mxu0 %v1873
    %3197 = vmatmul.bf16.gmra.mxu0 %v147
    %v3198 = vpop.f32.mrf.mxu0
    %v3199 = vadd.f32 %v3186, %v3198
    %v3200 = vpop.f32.mrf.mxu0
    %3201 = vdwg.mxu0
    %3202 = vmatpush.bf16.msra.mxu0 %v1993
    %3203 = vmatpush.bf16.msra.mxu0 %v1985
    %3204 = vmatpush.bf16.msra.mxu0 %v1977
    %3205 = vmatpush.bf16.msra.mxu0 %v1969
    %3206 = vmatpush.bf16.msra.mxu0 %v1961
    %3207 = vmatpush.bf16.msra.mxu0 %v1953
    %3208 = vmatpush.bf16.msra.mxu0 %v1945
    %3209 = vmatpush.bf16.msra.mxu0 %v1937
    %3210 = vmatmul.bf16.gmra.mxu0 %v148
    %v3211 = vpop.f32.mrf.mxu0
    %v3212 = vadd.f32 %v3199, %v3211
    %v3213 = vpop.f32.mrf.mxu0
    %3214 = vdwg.mxu0
    %3215 = vmatpush.bf16.msra.mxu0 %v2057
    %3216 = vmatpush.bf16.msra.mxu0 %v2049
    %3217 = vmatpush.bf16.msra.mxu0 %v2041
    %3218 = vmatpush.bf16.msra.mxu0 %v2033
    %3219 = vmatpush.bf16.msra.mxu0 %v2025
    %3220 = vmatpush.bf16.msra.mxu0 %v2017
    %3221 = vmatpush.bf16.msra.mxu0 %v2009
    %3222 = vmatpush.bf16.msra.mxu0 %v2001
    %3223 = vmatmul.bf16.gmra.mxu0 %v149
    %v3224 = vpop.f32.mrf.mxu0
    %v3225 = vadd.f32 %v3212, %v3224
    %v3226 = vpop.f32.mrf.mxu0
    %3227 = vdwg.mxu0
    %3228 = vmatpush.bf16.msra.mxu0 %v2121
    %3229 = vmatpush.bf16.msra.mxu0 %v2113
    %3230 = vmatpush.bf16.msra.mxu0 %v2105
    %3231 = vmatpush.bf16.msra.mxu0 %v2097
    %3232 = vmatpush.bf16.msra.mxu0 %v2089
    %3233 = vmatpush.bf16.msra.mxu0 %v2081
    %3234 = vmatpush.bf16.msra.mxu0 %v2073
    %3235 = vmatpush.bf16.msra.mxu0 %v2065
    %3236 = vmatmul.bf16.gmra.mxu0 %v150
    %v3237 = vpop.f32.mrf.mxu0
    %v3238 = vadd.f32 %v3225, %v3237
    %v3239 = vpop.f32.mrf.mxu0
    %3240 = vdwg.mxu0
    %3241 = vmatpush.bf16.msra.mxu0 0
    %3242 = vmatpush.bf16.msra.mxu0 0
    %3243 = vmatpush.bf16.msra.mxu0 0
    %3244 = vmatpush.bf16.msra.mxu0 0
    %3245 = vmatpush.bf16.msra.mxu0 0
    %3246 = vmatpush.bf16.msra.mxu0 0
    %3247 = vmatpush.bf16.msra.mxu0 0
    %3248 = vmatpush.bf16.msra.mxu0 %v2129
    %3249 = vmatmul.bf16.gmra.mxu0 %v2524
    %v3250 = vpop.f32.mrf.mxu0
    %v3251 = vadd.f32 %v3238, %v3250
    %v3252 = vpop.f32.mrf.mxu0
    %3253 = vdwg.mxu0
    %v3254 = vpack.c.bf16 %v2705, %v2614
    %v3255 = vpack.c.bf16 %v2887, %v2796
    %v3256 = vpack.c.bf16 %v3069, %v2978
    %v3257 = vpack.c.bf16 %v3251, %v3160
    %v3258 = vunpack.c.l.bf16 %v3254
    %v3259 = vunpack.c.h.bf16 %v3254
    %v3260 = vunpack.c.l.bf16 %v3255
    %v3261 = vunpack.c.h.bf16 %v3255
    %v3262 = vunpack.c.l.bf16 %v3256
    %v3263 = vunpack.c.h.bf16 %v3256
    %v3264 = vunpack.c.l.bf16 %v3257
    %v3265 = vunpack.c.h.bf16 %v3257
    %vm3266 = vcmp.gt.f32.partialorder %v3258, 0.0
    %vm3267 = vcmp.gt.f32.partialorder %v3259, 0.0
    %vm3268 = vcmp.gt.f32.partialorder %v3260, 0.0
    %vm3269 = vcmp.gt.f32.partialorder %v3261, 0.0
    %vm3270 = vcmp.gt.f32.partialorder %v3262, 0.0
    %vm3271 = vcmp.gt.f32.partialorder %v3263, 0.0
    %vm3272 = vcmp.gt.f32.partialorder %v3264, 0.0
    %vm3273 = vcmp.gt.f32.partialorder %v3265, 0.0
    %v3274 = vmul.f32 %v3258, 0.20019531
    %v3275 = vmul.f32 %v3259, 0.20019531
    %v3276 = vmul.f32 %v3260, 0.20019531
    %v3277 = vmul.f32 %v3261, 0.20019531
    %v3278 = vmul.f32 %v3262, 0.20019531
    %v3279 = vmul.f32 %v3263, 0.20019531
    %v3280 = vmul.f32 %v3264, 0.20019531
    %v3281 = vmul.f32 %v3265, 0.20019531
    %v3282 = vpack.c.bf16 %v3275, %v3274
    %v3283 = vpack.c.bf16 %v3277, %v3276
    %v3284 = vpack.c.bf16 %v3279, %v3278
    %v3285 = vpack.c.bf16 %v3281, %v3280
    %vm3286 = vmpackc.low %vm3267, %vm3266
    %vm3287 = vmpackc.low %vm3269, %vm3268
    %vm3288 = vmpackc.low %vm3271, %vm3270
    %vm3289 = vmpackc.low %vm3273, %vm3272
    %v3290 = vsel %vm3286, %v3254, %v3282
    %v3291 = vsel %vm3287, %v3255, %v3283
    %v3292 = vsel %vm3288, %v3256, %v3284
    %v3293 = vsel %vm3289, %v3257, %v3285
    %v3294 = vld [vmem:[#allocation7] sm:$0xff]
    %v3295 = vld [vmem:[#allocation7 + $0x8] sm:$0xff]
    %v3296 = vld [vmem:[#allocation7 + $0x10] sm:$0xff]
    %v3297 = vld [vmem:[#allocation7 + $0x18] sm:$0xff]
    %v3298 = vld [vmem:[#allocation7 + $0x20] sm:$0xff]
    %v3299 = vld [vmem:[#allocation7 + $0x28] sm:$0xff]
    %v3300 = vld [vmem:[#allocation7 + $0x30] sm:$0xff]
    %v3301 = vld [vmem:[#allocation7 + $0x38] sm:$0xff]
    %v3302 = vld [vmem:[#allocation7 + $0x40] sm:$0xff]
    %v3303 = vld [vmem:[#allocation7 + $0x48] sm:$0xff]
    %v3304 = vld [vmem:[#allocation7 + $0x50] sm:$0xff]
    %v3305 = vld [vmem:[#allocation7 + $0x58] sm:$0xff]
    %v3306 = vld [vmem:[#allocation7 + $0x60] sm:$0xff]
    %v3307 = vld [vmem:[#allocation7 + $0x68] sm:$0xff]
    %v3308 = vld [vmem:[#allocation7 + $0x70] sm:$0xff]
    %v3309 = vld [vmem:[#allocation7 + $0x78] sm:$0xff]
    %v3310 = vld [vmem:[#allocation7 + $0x80] sm:$0xff]
    %v3311 = vld [vmem:[#allocation7 + $0x88] sm:$0xff]
    %v3312 = vld [vmem:[#allocation7 + $0x90] sm:$0xff]
    %v3313 = vld [vmem:[#allocation7 + $0x98] sm:$0xff]
    %v3314 = vld [vmem:[#allocation7 + $0xa0] sm:$0xff]
    %v3315 = vld [vmem:[#allocation7 + $0xa8] sm:$0xff]
    %v3316 = vld [vmem:[#allocation7 + $0xb0] sm:$0xff]
    %v3317 = vld [vmem:[#allocation7 + $0xb8] sm:$0xff]
    %v3318 = vld [vmem:[#allocation7 + $0xc0] sm:$0xff]
    %v3319 = vld [vmem:[#allocation7 + $0xc8] sm:$0xff]
    %v3320 = vld [vmem:[#allocation7 + $0xd0] sm:$0xff]
    %v3321 = vld [vmem:[#allocation7 + $0xd8] sm:$0xff]
    %v3322 = vld [vmem:[#allocation7 + $0xe0] sm:$0xff]
    %v3323 = vld [vmem:[#allocation7 + $0xe8] sm:$0xff]
    %v3324 = vld [vmem:[#allocation7 + $0xf0] sm:$0xff]
    %v3325 = vld [vmem:[#allocation7 + $0xf8] sm:$0xff]
    %v3326 = vld [vmem:[#allocation7 + $0x100] sm:$0xff]
    %v3327 = vld [vmem:[#allocation7 + $0x108] sm:$0xff]
    %v3328 = vld [vmem:[#allocation7 + $0x110] sm:$0xff]
    %v3329 = vld [vmem:[#allocation7 + $0x118] sm:$0xff]
    %v3330 = vld [vmem:[#allocation7 + $0x120] sm:$0xff]
    %v3331 = vld [vmem:[#allocation7 + $0x128] sm:$0xff]
    %v3332 = vld [vmem:[#allocation7 + $0x130] sm:$0xff]
    %v3333 = vld [vmem:[#allocation7 + $0x138] sm:$0xff]
    %v3334 = vld [vmem:[#allocation7 + $0x140] sm:$0xff]
    %v3335 = vld [vmem:[#allocation7 + $0x148] sm:$0xff]
    %v3336 = vld [vmem:[#allocation7 + $0x150] sm:$0xff]
    %v3337 = vld [vmem:[#allocation7 + $0x158] sm:$0xff]
    %v3338 = vld [vmem:[#allocation7 + $0x160] sm:$0xff]
    %v3339 = vld [vmem:[#allocation7 + $0x168] sm:$0xff]
    %v3340 = vld [vmem:[#allocation7 + $0x170] sm:$0xff]
    %v3341 = vld [vmem:[#allocation7 + $0x178] sm:$0xff]
    %v3342 = vld [vmem:[#allocation7 + $0x180] sm:$0xff]
    %v3343 = vld [vmem:[#allocation7 + $0x188] sm:$0xff]
    %v3344 = vld [vmem:[#allocation7 + $0x190] sm:$0xff]
    %v3345 = vld [vmem:[#allocation7 + $0x198] sm:$0xff]
    %v3346 = vld [vmem:[#allocation7 + $0x1a0] sm:$0xff]
    %v3347 = vld [vmem:[#allocation7 + $0x1a8] sm:$0xff]
    %v3348 = vld [vmem:[#allocation7 + $0x1b0] sm:$0xff]
    %v3349 = vld [vmem:[#allocation7 + $0x1b8] sm:$0xff]
    %v3350 = vld [vmem:[#allocation7 + $0x1c0] sm:$0xff]
    %v3351 = vld [vmem:[#allocation7 + $0x1c8] sm:$0xff]
    %v3352 = vld [vmem:[#allocation7 + $0x1d0] sm:$0xff]
    %v3353 = vld [vmem:[#allocation7 + $0x1d8] sm:$0xff]
    %v3354 = vld [vmem:[#allocation7 + $0x1e0] sm:$0xff]
    %v3355 = vld [vmem:[#allocation7 + $0x1e8] sm:$0xff]
    %v3356 = vld [vmem:[#allocation7 + $0x1f0] sm:$0xff]
    %v3357 = vld [vmem:[#allocation7 + $0x1f8] sm:$0xff]
    %v3358 = vld [vmem:[#allocation7 + $0x200] sm:$0xff]
    %v3359 = vld [vmem:[#allocation7 + $0x208] sm:$0xff]
    %v3360 = vld [vmem:[#allocation7 + $0x210] sm:$0xff]
    %v3361 = vld [vmem:[#allocation7 + $0x218] sm:$0xff]
    %v3362 = vld [vmem:[#allocation7 + $0x220] sm:$0xff]
    %v3363 = vld [vmem:[#allocation7 + $0x228] sm:$0xff]
    %v3364 = vld [vmem:[#allocation7 + $0x230] sm:$0xff]
    %v3365 = vld [vmem:[#allocation7 + $0x238] sm:$0xff]
    %v3366 = vld [vmem:[#allocation7 + $0x240] sm:$0xff]
    %v3367 = vld [vmem:[#allocation7 + $0x248] sm:$0xff]
    %v3368 = vld [vmem:[#allocation7 + $0x250] sm:$0xff]
    %v3369 = vld [vmem:[#allocation7 + $0x258] sm:$0xff]
    %v3370 = vld [vmem:[#allocation7 + $0x260] sm:$0xff]
    %v3371 = vld [vmem:[#allocation7 + $0x268] sm:$0xff]
    %v3372 = vld [vmem:[#allocation7 + $0x270] sm:$0xff]
    %v3373 = vld [vmem:[#allocation7 + $0x278] sm:$0xff]
    %v3374 = vld [vmem:[#allocation7 + $0x280] sm:$0xff]
    %v3375 = vld [vmem:[#allocation7 + $0x288] sm:$0xff]
    %v3376 = vld [vmem:[#allocation7 + $0x290] sm:$0xff]
    %v3377 = vld [vmem:[#allocation7 + $0x298] sm:$0xff]
    %v3378 = vld [vmem:[#allocation7 + $0x2a0] sm:$0xff]
    %v3379 = vld [vmem:[#allocation7 + $0x2a8] sm:$0xff]
    %v3380 = vld [vmem:[#allocation7 + $0x2b0] sm:$0xff]
    %v3381 = vld [vmem:[#allocation7 + $0x2b8] sm:$0xff]
    %v3382 = vld [vmem:[#allocation7 + $0x2c0] sm:$0xff]
    %v3383 = vld [vmem:[#allocation7 + $0x2c8] sm:$0xff]
    %v3384 = vld [vmem:[#allocation7 + $0x2d0] sm:$0xff]
    %v3385 = vld [vmem:[#allocation7 + $0x2d8] sm:$0xff]
    %v3386 = vld [vmem:[#allocation7 + $0x2e0] sm:$0xff]
    %v3387 = vld [vmem:[#allocation7 + $0x2e8] sm:$0xff]
    %v3388 = vld [vmem:[#allocation7 + $0x2f0] sm:$0xff]
    %v3389 = vld [vmem:[#allocation7 + $0x2f8] sm:$0xff]
    %v3390 = vld [vmem:[#allocation7 + $0x300] sm:$0xff]
    %v3391 = vld [vmem:[#allocation7 + $0x308] sm:$0xff]
    %v3392 = vld [vmem:[#allocation7 + $0x310] sm:$0xff]
    %v3393 = vld [vmem:[#allocation7 + $0x318] sm:$0xff]
    %v3394 = vld [vmem:[#allocation7 + $0x320] sm:$0xff]
    %v3395 = vld [vmem:[#allocation7 + $0x328] sm:$0xff]
    %v3396 = vld [vmem:[#allocation7 + $0x330] sm:$0xff]
    %v3397 = vld [vmem:[#allocation7 + $0x338] sm:$0xff]
    %v3398 = vld [vmem:[#allocation7 + $0x340] sm:$0xff]
    %v3399 = vld [vmem:[#allocation7 + $0x348] sm:$0xff]
    %v3400 = vld [vmem:[#allocation7 + $0x350] sm:$0xff]
    %v3401 = vld [vmem:[#allocation7 + $0x358] sm:$0xff]
    %v3402 = vld [vmem:[#allocation7 + $0x360] sm:$0xff]
    %v3403 = vld [vmem:[#allocation7 + $0x368] sm:$0xff]
    %v3404 = vld [vmem:[#allocation7 + $0x370] sm:$0xff]
    %v3405 = vld [vmem:[#allocation7 + $0x378] sm:$0xff]
    %v3406 = vld [vmem:[#allocation7 + $0x380] sm:$0xff]
    %v3407 = vld [vmem:[#allocation7 + $0x388] sm:$0xff]
    %v3408 = vld [vmem:[#allocation7 + $0x390] sm:$0xff]
    %v3409 = vld [vmem:[#allocation7 + $0x398] sm:$0xff]
    %v3410 = vld [vmem:[#allocation7 + $0x3a0] sm:$0xff]
    %v3411 = vld [vmem:[#allocation7 + $0x3a8] sm:$0xff]
    %v3412 = vld [vmem:[#allocation7 + $0x3b0] sm:$0xff]
    %v3413 = vld [vmem:[#allocation7 + $0x3b8] sm:$0xff]
    %v3414 = vld [vmem:[#allocation7 + $0x3c0] sm:$0xff]
    %v3415 = vld [vmem:[#allocation7 + $0x3c8] sm:$0xff]
    %v3416 = vld [vmem:[#allocation7 + $0x3d0] sm:$0xff]
    %v3417 = vld [vmem:[#allocation7 + $0x3d8] sm:$0xff]
    %v3418 = vld [vmem:[#allocation7 + $0x3e0] sm:$0xff]
    %v3419 = vld [vmem:[#allocation7 + $0x3e8] sm:$0xff]
    %v3420 = vld [vmem:[#allocation7 + $0x3f0] sm:$0xff]
    %v3421 = vld [vmem:[#allocation7 + $0x3f8] sm:$0xff]
    %v3422 = vld [vmem:[#allocation7 + $0x400] sm:$0xff]
    %v3423 = vld [vmem:[#allocation7 + $0x408] sm:$0xff]
    %v3424 = vld [vmem:[#allocation7 + $0x410] sm:$0xff]
    %v3425 = vld [vmem:[#allocation7 + $0x418] sm:$0xff]
    %v3426 = vld [vmem:[#allocation7 + $0x420] sm:$0xff]
    %v3427 = vld [vmem:[#allocation7 + $0x428] sm:$0xff]
    %v3428 = vld [vmem:[#allocation7 + $0x430] sm:$0xff]
    %v3429 = vld [vmem:[#allocation7 + $0x438] sm:$0xff]
    %v3430 = vld [vmem:[#allocation7 + $0x440] sm:$0xff]
    %v3431 = vld [vmem:[#allocation7 + $0x448] sm:$0xff]
    %v3432 = vld [vmem:[#allocation7 + $0x450] sm:$0xff]
    %v3433 = vld [vmem:[#allocation7 + $0x458] sm:$0xff]
    %v3434 = vld [vmem:[#allocation7 + $0x460] sm:$0xff]
    %v3435 = vld [vmem:[#allocation7 + $0x468] sm:$0xff]
    %v3436 = vld [vmem:[#allocation7 + $0x470] sm:$0xff]
    %v3437 = vld [vmem:[#allocation7 + $0x478] sm:$0xff]
    %v3438 = vld [vmem:[#allocation7 + $0x480] sm:$0xff]
    %v3439 = vld [vmem:[#allocation7 + $0x488] sm:$0xff]
    %v3440 = vld [vmem:[#allocation7 + $0x490] sm:$0xff]
    %v3441 = vld [vmem:[#allocation7 + $0x498] sm:$0xff]
    %v3442 = vld [vmem:[#allocation7 + $0x4a0] sm:$0xff]
    %v3443 = vld [vmem:[#allocation7 + $0x4a8] sm:$0xff]
    %v3444 = vld [vmem:[#allocation7 + $0x4b0] sm:$0xff]
    %v3445 = vld [vmem:[#allocation7 + $0x4b8] sm:$0xff]
    %v3446 = vld [vmem:[#allocation7 + $0x4c0] sm:$0xff]
    %v3447 = vld [vmem:[#allocation7 + $0x4c8] sm:$0xff]
    %v3448 = vld [vmem:[#allocation7 + $0x4d0] sm:$0xff]
    %v3449 = vld [vmem:[#allocation7 + $0x4d8] sm:$0xff]
    %v3450 = vld [vmem:[#allocation7 + $0x4e0] sm:$0xff]
    %v3451 = vld [vmem:[#allocation7 + $0x4e8] sm:$0xff]
    %v3452 = vld [vmem:[#allocation7 + $0x4f0] sm:$0xff]
    %v3453 = vld [vmem:[#allocation7 + $0x4f8] sm:$0xff]
    %v3454 = vld [vmem:[#allocation7 + $0x500] sm:$0xff]
    %v3455 = vld [vmem:[#allocation7 + $0x508] sm:$0xff]
    %v3456 = vld [vmem:[#allocation7 + $0x510] sm:$0xff]
    %v3457 = vld [vmem:[#allocation7 + $0x518] sm:$0xff]
    %v3458 = vld [vmem:[#allocation7 + $0x520] sm:$0xff]
    %v3459 = vld [vmem:[#allocation7 + $0x528] sm:$0xff]
    %v3460 = vld [vmem:[#allocation7 + $0x530] sm:$0xff]
    %v3461 = vld [vmem:[#allocation7 + $0x538] sm:$0xff]
    %v3462 = vld [vmem:[#allocation7 + $0x540] sm:$0xff]
    %v3463 = vld [vmem:[#allocation7 + $0x548] sm:$0xff]
    %v3464 = vld [vmem:[#allocation7 + $0x550] sm:$0xff]
    %v3465 = vld [vmem:[#allocation7 + $0x558] sm:$0xff]
    %v3466 = vld [vmem:[#allocation7 + $0x560] sm:$0xff]
    %v3467 = vld [vmem:[#allocation7 + $0x568] sm:$0xff]
    %v3468 = vld [vmem:[#allocation7 + $0x570] sm:$0xff]
    %v3469 = vld [vmem:[#allocation7 + $0x578] sm:$0xff]
    %v3470 = vld [vmem:[#allocation7 + $0x580] sm:$0xff]
    %v3471 = vld [vmem:[#allocation7 + $0x588] sm:$0xff]
    %v3472 = vld [vmem:[#allocation7 + $0x590] sm:$0xff]
    %v3473 = vld [vmem:[#allocation7 + $0x598] sm:$0xff]
    %v3474 = vld [vmem:[#allocation7 + $0x5a0] sm:$0xff]
    %v3475 = vld [vmem:[#allocation7 + $0x5a8] sm:$0xff]
    %v3476 = vld [vmem:[#allocation7 + $0x5b0] sm:$0xff]
    %v3477 = vld [vmem:[#allocation7 + $0x5b8] sm:$0xff]
    %v3478 = vld [vmem:[#allocation7 + $0x5c0] sm:$0xff]
    %v3479 = vld [vmem:[#allocation7 + $0x5c8] sm:$0xff]
    %v3480 = vld [vmem:[#allocation7 + $0x5d0] sm:$0xff]
    %v3481 = vld [vmem:[#allocation7 + $0x5d8] sm:$0xff]
    %v3482 = vld [vmem:[#allocation7 + $0x5e0] sm:$0xff]
    %v3483 = vld [vmem:[#allocation7 + $0x5e8] sm:$0xff]
    %v3484 = vld [vmem:[#allocation7 + $0x5f0] sm:$0xff]
    %v3485 = vld [vmem:[#allocation7 + $0x5f8] sm:$0xff]
    %v3486 = vld [vmem:[#allocation7 + $0x600] sm:$0xff]
    %v3487 = vld [vmem:[#allocation7 + $0x608] sm:$0xff]
    %v3488 = vld [vmem:[#allocation7 + $0x610] sm:$0xff]
    %v3489 = vld [vmem:[#allocation7 + $0x618] sm:$0xff]
    %v3490 = vld [vmem:[#allocation7 + $0x620] sm:$0xff]
    %v3491 = vld [vmem:[#allocation7 + $0x628] sm:$0xff]
    %v3492 = vld [vmem:[#allocation7 + $0x630] sm:$0xff]
    %v3493 = vld [vmem:[#allocation7 + $0x638] sm:$0xff]
    %v3494 = vld [vmem:[#allocation7 + $0x640] sm:$0xff]
    %v3495 = vld [vmem:[#allocation7 + $0x648] sm:$0xff]
    %v3496 = vld [vmem:[#allocation7 + $0x650] sm:$0xff]
    %v3497 = vld [vmem:[#allocation7 + $0x658] sm:$0xff]
    %v3498 = vld [vmem:[#allocation7 + $0x660] sm:$0xff]
    %v3499 = vld [vmem:[#allocation7 + $0x668] sm:$0xff]
    %v3500 = vld [vmem:[#allocation7 + $0x670] sm:$0xff]
    %v3501 = vld [vmem:[#allocation7 + $0x678] sm:$0xff]
    %v3502 = vld [vmem:[#allocation7 + $0x680] sm:$0xff]
    %v3503 = vld [vmem:[#allocation7 + $0x688] sm:$0xff]
    %v3504 = vld [vmem:[#allocation7 + $0x690] sm:$0xff]
    %v3505 = vld [vmem:[#allocation7 + $0x698] sm:$0xff]
    %v3506 = vld [vmem:[#allocation7 + $0x6a0] sm:$0xff]
    %v3507 = vld [vmem:[#allocation7 + $0x6a8] sm:$0xff]
    %v3508 = vld [vmem:[#allocation7 + $0x6b0] sm:$0xff]
    %v3509 = vld [vmem:[#allocation7 + $0x6b8] sm:$0xff]
    %v3510 = vld [vmem:[#allocation7 + $0x6c0] sm:$0xff]
    %v3511 = vld [vmem:[#allocation7 + $0x6c8] sm:$0xff]
    %v3512 = vld [vmem:[#allocation7 + $0x6d0] sm:$0xff]
    %v3513 = vld [vmem:[#allocation7 + $0x6d8] sm:$0xff]
    %v3514 = vld [vmem:[#allocation7 + $0x6e0] sm:$0xff]
    %v3515 = vld [vmem:[#allocation7 + $0x6e8] sm:$0xff]
    %v3516 = vld [vmem:[#allocation7 + $0x6f0] sm:$0xff]
    %v3517 = vld [vmem:[#allocation7 + $0x6f8] sm:$0xff]
    %v3518 = vld [vmem:[#allocation7 + $0x700] sm:$0xff]
    %v3519 = vld [vmem:[#allocation7 + $0x708] sm:$0xff]
    %v3520 = vld [vmem:[#allocation7 + $0x710] sm:$0xff]
    %v3521 = vld [vmem:[#allocation7 + $0x718] sm:$0xff]
    %v3522 = vld [vmem:[#allocation7 + $0x720] sm:$0xff]
    %v3523 = vld [vmem:[#allocation7 + $0x728] sm:$0xff]
    %v3524 = vld [vmem:[#allocation7 + $0x730] sm:$0xff]
    %v3525 = vld [vmem:[#allocation7 + $0x738] sm:$0xff]
    %v3526 = vld [vmem:[#allocation7 + $0x740] sm:$0xff]
    %v3527 = vld [vmem:[#allocation7 + $0x748] sm:$0xff]
    %v3528 = vld [vmem:[#allocation7 + $0x750] sm:$0xff]
    %v3529 = vld [vmem:[#allocation7 + $0x758] sm:$0xff]
    %v3530 = vld [vmem:[#allocation7 + $0x760] sm:$0xff]
    %v3531 = vld [vmem:[#allocation7 + $0x768] sm:$0xff]
    %v3532 = vld [vmem:[#allocation7 + $0x770] sm:$0xff]
    %v3533 = vld [vmem:[#allocation7 + $0x778] sm:$0xff]
    %v3534 = vld [vmem:[#allocation7 + $0x780] sm:$0xff]
    %v3535 = vld [vmem:[#allocation7 + $0x788] sm:$0xff]
    %v3536 = vld [vmem:[#allocation7 + $0x790] sm:$0xff]
    %v3537 = vld [vmem:[#allocation7 + $0x798] sm:$0xff]
    %v3538 = vld [vmem:[#allocation7 + $0x7a0] sm:$0xff]
    %v3539 = vld [vmem:[#allocation7 + $0x7a8] sm:$0xff]
    %v3540 = vld [vmem:[#allocation7 + $0x7b0] sm:$0xff]
    %v3541 = vld [vmem:[#allocation7 + $0x7b8] sm:$0xff]
    %v3542 = vld [vmem:[#allocation7 + $0x7c0] sm:$0xff]
    %v3543 = vld [vmem:[#allocation7 + $0x7c8] sm:$0xff]
    %v3544 = vld [vmem:[#allocation7 + $0x7d0] sm:$0xff]
    %v3545 = vld [vmem:[#allocation7 + $0x7d8] sm:$0xff]
    %v3546 = vld [vmem:[#allocation7 + $0x7e0] sm:$0xff]
    %v3547 = vld [vmem:[#allocation7 + $0x7e8] sm:$0xff]
    %v3548 = vld [vmem:[#allocation7 + $0x7f0] sm:$0xff]
    %v3549 = vld [vmem:[#allocation7 + $0x7f8] sm:$0xff]
    %v3550 = vld [vmem:[#allocation8] sm:$0xf]
    %v3552 = vperm.slane %v3550, 0
    %v3553 = vperm.slane %v3550, 1
    %v3554 = vperm.slane %v3550, 2
    %v3555 = vperm.slane %v3550, 3
    %v3564 = vunpack.c.l.b16 %v3290
    %v3565 = vunpack.c.h.b16 %v3290
    %v3566 = vunpack.c.l.b16 %v3291
    %v3567 = vunpack.c.h.b16 %v3291
    %v3568 = vunpack.c.l.b16 %v3292
    %v3569 = vunpack.c.h.b16 %v3292
    %v3570 = vunpack.c.l.b16 %v3293
    %v3571 = vunpack.c.h.b16 %v3293
    %v3572 = vpack.c.b16 %v3564, %v3564
    %v3573 = vpack.c.b16 %v3565, %v3565
    %v3574 = vpack.c.b16 %v3566, %v3566
    %v3575 = vpack.c.b16 %v3567, %v3567
    %v3576 = vpack.c.b16 %v3568, %v3568
    %v3577 = vpack.c.b16 %v3569, %v3569
    %v3578 = vpack.c.b16 %v3570, %v3570
    %v3579 = vpack.c.b16 %v3571, %v3571
    %v3844 = vunpack.c.l.b16 %v3294
    %v3845 = vunpack.c.h.b16 %v3294
    %v3846 = vunpack.c.l.b16 %v3295
    %v3847 = vunpack.c.h.b16 %v3295
    %v3848 = vunpack.c.l.b16 %v3296
    %v3849 = vunpack.c.h.b16 %v3296
    %v3850 = vunpack.c.l.b16 %v3297
    %v3851 = vunpack.c.h.b16 %v3297
    %v3852 = vunpack.c.l.b16 %v3298
    %v3853 = vunpack.c.h.b16 %v3298
    %v3854 = vunpack.c.l.b16 %v3299
    %v3855 = vunpack.c.h.b16 %v3299
    %v3856 = vunpack.c.l.b16 %v3300
    %v3857 = vunpack.c.h.b16 %v3300
    %v3858 = vunpack.c.l.b16 %v3301
    %v3859 = vunpack.c.h.b16 %v3301
    %v3860 = vunpack.c.l.b16 %v3302
    %v3861 = vunpack.c.h.b16 %v3302
    %v3862 = vunpack.c.l.b16 %v3303
    %v3863 = vunpack.c.h.b16 %v3303
    %v3864 = vunpack.c.l.b16 %v3304
    %v3865 = vunpack.c.h.b16 %v3304
    %v3866 = vunpack.c.l.b16 %v3305
    %v3867 = vunpack.c.h.b16 %v3305
    %v3868 = vunpack.c.l.b16 %v3306
    %v3869 = vunpack.c.h.b16 %v3306
    %v3870 = vunpack.c.l.b16 %v3307
    %v3871 = vunpack.c.h.b16 %v3307
    %v3872 = vunpack.c.l.b16 %v3308
    %v3873 = vunpack.c.h.b16 %v3308
    %v3874 = vunpack.c.l.b16 %v3309
    %v3875 = vunpack.c.h.b16 %v3309
    %v3876 = vunpack.c.l.b16 %v3310
    %v3877 = vunpack.c.h.b16 %v3310
    %v3878 = vunpack.c.l.b16 %v3311
    %v3879 = vunpack.c.h.b16 %v3311
    %v3880 = vunpack.c.l.b16 %v3312
    %v3881 = vunpack.c.h.b16 %v3312
    %v3882 = vunpack.c.l.b16 %v3313
    %v3883 = vunpack.c.h.b16 %v3313
    %v3884 = vunpack.c.l.b16 %v3314
    %v3885 = vunpack.c.h.b16 %v3314
    %v3886 = vunpack.c.l.b16 %v3315
    %v3887 = vunpack.c.h.b16 %v3315
    %v3888 = vunpack.c.l.b16 %v3316
    %v3889 = vunpack.c.h.b16 %v3316
    %v3890 = vunpack.c.l.b16 %v3317
    %v3891 = vunpack.c.h.b16 %v3317
    %v3892 = vunpack.c.l.b16 %v3318
    %v3893 = vunpack.c.h.b16 %v3318
    %v3894 = vunpack.c.l.b16 %v3319
    %v3895 = vunpack.c.h.b16 %v3319
    %v3896 = vunpack.c.l.b16 %v3320
    %v3897 = vunpack.c.h.b16 %v3320
    %v3898 = vunpack.c.l.b16 %v3321
    %v3899 = vunpack.c.h.b16 %v3321
    %v3900 = vunpack.c.l.b16 %v3322
    %v3901 = vunpack.c.h.b16 %v3322
    %v3902 = vunpack.c.l.b16 %v3323
    %v3903 = vunpack.c.h.b16 %v3323
    %v3904 = vunpack.c.l.b16 %v3324
    %v3905 = vunpack.c.h.b16 %v3324
    %v3906 = vunpack.c.l.b16 %v3325
    %v3907 = vunpack.c.h.b16 %v3325
    %v3908 = vunpack.c.l.b16 %v3326
    %v3909 = vunpack.c.h.b16 %v3326
    %v3910 = vunpack.c.l.b16 %v3327
    %v3911 = vunpack.c.h.b16 %v3327
    %v3912 = vunpack.c.l.b16 %v3328
    %v3913 = vunpack.c.h.b16 %v3328
    %v3914 = vunpack.c.l.b16 %v3329
    %v3915 = vunpack.c.h.b16 %v3329
    %v3916 = vunpack.c.l.b16 %v3330
    %v3917 = vunpack.c.h.b16 %v3330
    %v3918 = vunpack.c.l.b16 %v3331
    %v3919 = vunpack.c.h.b16 %v3331
    %v3920 = vunpack.c.l.b16 %v3332
    %v3921 = vunpack.c.h.b16 %v3332
    %v3922 = vunpack.c.l.b16 %v3333
    %v3923 = vunpack.c.h.b16 %v3333
    %v3924 = vunpack.c.l.b16 %v3334
    %v3925 = vunpack.c.h.b16 %v3334
    %v3926 = vunpack.c.l.b16 %v3335
    %v3927 = vunpack.c.h.b16 %v3335
    %v3928 = vunpack.c.l.b16 %v3336
    %v3929 = vunpack.c.h.b16 %v3336
    %v3930 = vunpack.c.l.b16 %v3337
    %v3931 = vunpack.c.h.b16 %v3337
    %v3932 = vunpack.c.l.b16 %v3338
    %v3933 = vunpack.c.h.b16 %v3338
    %v3934 = vunpack.c.l.b16 %v3339
    %v3935 = vunpack.c.h.b16 %v3339
    %v3936 = vunpack.c.l.b16 %v3340
    %v3937 = vunpack.c.h.b16 %v3340
    %v3938 = vunpack.c.l.b16 %v3341
    %v3939 = vunpack.c.h.b16 %v3341
    %v3940 = vunpack.c.l.b16 %v3342
    %v3941 = vunpack.c.h.b16 %v3342
    %v3942 = vunpack.c.l.b16 %v3343
    %v3943 = vunpack.c.h.b16 %v3343
    %v3944 = vunpack.c.l.b16 %v3344
    %v3945 = vunpack.c.h.b16 %v3344
    %v3946 = vunpack.c.l.b16 %v3345
    %v3947 = vunpack.c.h.b16 %v3345
    %v3948 = vunpack.c.l.b16 %v3346
    %v3949 = vunpack.c.h.b16 %v3346
    %v3950 = vunpack.c.l.b16 %v3347
    %v3951 = vunpack.c.h.b16 %v3347
    %v3952 = vunpack.c.l.b16 %v3348
    %v3953 = vunpack.c.h.b16 %v3348
    %v3954 = vunpack.c.l.b16 %v3349
    %v3955 = vunpack.c.h.b16 %v3349
    %v3956 = vunpack.c.l.b16 %v3350
    %v3957 = vunpack.c.h.b16 %v3350
    %v3958 = vunpack.c.l.b16 %v3351
    %v3959 = vunpack.c.h.b16 %v3351
    %v3960 = vunpack.c.l.b16 %v3352
    %v3961 = vunpack.c.h.b16 %v3352
    %v3962 = vunpack.c.l.b16 %v3353
    %v3963 = vunpack.c.h.b16 %v3353
    %v3964 = vunpack.c.l.b16 %v3354
    %v3965 = vunpack.c.h.b16 %v3354
    %v3966 = vunpack.c.l.b16 %v3355
    %v3967 = vunpack.c.h.b16 %v3355
    %v3968 = vunpack.c.l.b16 %v3356
    %v3969 = vunpack.c.h.b16 %v3356
    %v3970 = vunpack.c.l.b16 %v3357
    %v3971 = vunpack.c.h.b16 %v3357
    %v3972 = vunpack.c.l.b16 %v3358
    %v3973 = vunpack.c.h.b16 %v3358
    %v3974 = vunpack.c.l.b16 %v3359
    %v3975 = vunpack.c.h.b16 %v3359
    %v3976 = vunpack.c.l.b16 %v3360
    %v3977 = vunpack.c.h.b16 %v3360
    %v3978 = vunpack.c.l.b16 %v3361
    %v3979 = vunpack.c.h.b16 %v3361
    %v3980 = vunpack.c.l.b16 %v3362
    %v3981 = vunpack.c.h.b16 %v3362
    %v3982 = vunpack.c.l.b16 %v3363
    %v3983 = vunpack.c.h.b16 %v3363
    %v3984 = vunpack.c.l.b16 %v3364
    %v3985 = vunpack.c.h.b16 %v3364
    %v3986 = vunpack.c.l.b16 %v3365
    %v3987 = vunpack.c.h.b16 %v3365
    %v3988 = vunpack.c.l.b16 %v3366
    %v3989 = vunpack.c.h.b16 %v3366
    %v3990 = vunpack.c.l.b16 %v3367
    %v3991 = vunpack.c.h.b16 %v3367
    %v3992 = vunpack.c.l.b16 %v3368
    %v3993 = vunpack.c.h.b16 %v3368
    %v3994 = vunpack.c.l.b16 %v3369
    %v3995 = vunpack.c.h.b16 %v3369
    %v3996 = vunpack.c.l.b16 %v3370
    %v3997 = vunpack.c.h.b16 %v3370
    %v3998 = vunpack.c.l.b16 %v3371
    %v3999 = vunpack.c.h.b16 %v3371
    %v4000 = vunpack.c.l.b16 %v3372
    %v4001 = vunpack.c.h.b16 %v3372
    %v4002 = vunpack.c.l.b16 %v3373
    %v4003 = vunpack.c.h.b16 %v3373
    %v4004 = vunpack.c.l.b16 %v3374
    %v4005 = vunpack.c.h.b16 %v3374
    %v4006 = vunpack.c.l.b16 %v3375
    %v4007 = vunpack.c.h.b16 %v3375
    %v4008 = vunpack.c.l.b16 %v3376
    %v4009 = vunpack.c.h.b16 %v3376
    %v4010 = vunpack.c.l.b16 %v3377
    %v4011 = vunpack.c.h.b16 %v3377
    %v4012 = vunpack.c.l.b16 %v3378
    %v4013 = vunpack.c.h.b16 %v3378
    %v4014 = vunpack.c.l.b16 %v3379
    %v4015 = vunpack.c.h.b16 %v3379
    %v4016 = vunpack.c.l.b16 %v3380
    %v4017 = vunpack.c.h.b16 %v3380
    %v4018 = vunpack.c.l.b16 %v3381
    %v4019 = vunpack.c.h.b16 %v3381
    %v4020 = vunpack.c.l.b16 %v3382
    %v4021 = vunpack.c.h.b16 %v3382
    %v4022 = vunpack.c.l.b16 %v3383
    %v4023 = vunpack.c.h.b16 %v3383
    %v4024 = vunpack.c.l.b16 %v3384
    %v4025 = vunpack.c.h.b16 %v3384
    %v4026 = vunpack.c.l.b16 %v3385
    %v4027 = vunpack.c.h.b16 %v3385
    %v4028 = vunpack.c.l.b16 %v3386
    %v4029 = vunpack.c.h.b16 %v3386
    %v4030 = vunpack.c.l.b16 %v3387
    %v4031 = vunpack.c.h.b16 %v3387
    %v4032 = vunpack.c.l.b16 %v3388
    %v4033 = vunpack.c.h.b16 %v3388
    %v4034 = vunpack.c.l.b16 %v3389
    %v4035 = vunpack.c.h.b16 %v3389
    %v4036 = vunpack.c.l.b16 %v3390
    %v4037 = vunpack.c.h.b16 %v3390
    %v4038 = vunpack.c.l.b16 %v3391
    %v4039 = vunpack.c.h.b16 %v3391
    %v4040 = vunpack.c.l.b16 %v3392
    %v4041 = vunpack.c.h.b16 %v3392
    %v4042 = vunpack.c.l.b16 %v3393
    %v4043 = vunpack.c.h.b16 %v3393
    %v4044 = vunpack.c.l.b16 %v3394
    %v4045 = vunpack.c.h.b16 %v3394
    %v4046 = vunpack.c.l.b16 %v3395
    %v4047 = vunpack.c.h.b16 %v3395
    %v4048 = vunpack.c.l.b16 %v3396
    %v4049 = vunpack.c.h.b16 %v3396
    %v4050 = vunpack.c.l.b16 %v3397
    %v4051 = vunpack.c.h.b16 %v3397
    %v4052 = vunpack.c.l.b16 %v3398
    %v4053 = vunpack.c.h.b16 %v3398
    %v4054 = vunpack.c.l.b16 %v3399
    %v4055 = vunpack.c.h.b16 %v3399
    %v4056 = vunpack.c.l.b16 %v3400
    %v4057 = vunpack.c.h.b16 %v3400
    %v4058 = vunpack.c.l.b16 %v3401
    %v4059 = vunpack.c.h.b16 %v3401
    %v4060 = vunpack.c.l.b16 %v3402
    %v4061 = vunpack.c.h.b16 %v3402
    %v4062 = vunpack.c.l.b16 %v3403
    %v4063 = vunpack.c.h.b16 %v3403
    %v4064 = vunpack.c.l.b16 %v3404
    %v4065 = vunpack.c.h.b16 %v3404
    %v4066 = vunpack.c.l.b16 %v3405
    %v4067 = vunpack.c.h.b16 %v3405
    %v4068 = vunpack.c.l.b16 %v3406
    %v4069 = vunpack.c.h.b16 %v3406
    %v4070 = vunpack.c.l.b16 %v3407
    %v4071 = vunpack.c.h.b16 %v3407
    %v4072 = vunpack.c.l.b16 %v3408
    %v4073 = vunpack.c.h.b16 %v3408
    %v4074 = vunpack.c.l.b16 %v3409
    %v4075 = vunpack.c.h.b16 %v3409
    %v4076 = vunpack.c.l.b16 %v3410
    %v4077 = vunpack.c.h.b16 %v3410
    %v4078 = vunpack.c.l.b16 %v3411
    %v4079 = vunpack.c.h.b16 %v3411
    %v4080 = vunpack.c.l.b16 %v3412
    %v4081 = vunpack.c.h.b16 %v3412
    %v4082 = vunpack.c.l.b16 %v3413
    %v4083 = vunpack.c.h.b16 %v3413
    %v4084 = vunpack.c.l.b16 %v3414
    %v4085 = vunpack.c.h.b16 %v3414
    %v4086 = vunpack.c.l.b16 %v3415
    %v4087 = vunpack.c.h.b16 %v3415
    %v4088 = vunpack.c.l.b16 %v3416
    %v4089 = vunpack.c.h.b16 %v3416
    %v4090 = vunpack.c.l.b16 %v3417
    %v4091 = vunpack.c.h.b16 %v3417
    %v4092 = vunpack.c.l.b16 %v3418
    %v4093 = vunpack.c.h.b16 %v3418
    %v4094 = vunpack.c.l.b16 %v3419
    %v4095 = vunpack.c.h.b16 %v3419
    %v4096 = vunpack.c.l.b16 %v3420
    %v4097 = vunpack.c.h.b16 %v3420
    %v4098 = vunpack.c.l.b16 %v3421
    %v4099 = vunpack.c.h.b16 %v3421
    %v4100 = vunpack.c.l.b16 %v3422
    %v4101 = vunpack.c.h.b16 %v3422
    %v4102 = vunpack.c.l.b16 %v3423
    %v4103 = vunpack.c.h.b16 %v3423
    %v4104 = vunpack.c.l.b16 %v3424
    %v4105 = vunpack.c.h.b16 %v3424
    %v4106 = vunpack.c.l.b16 %v3425
    %v4107 = vunpack.c.h.b16 %v3425
    %v4108 = vunpack.c.l.b16 %v3426
    %v4109 = vunpack.c.h.b16 %v3426
    %v4110 = vunpack.c.l.b16 %v3427
    %v4111 = vunpack.c.h.b16 %v3427
    %v4112 = vunpack.c.l.b16 %v3428
    %v4113 = vunpack.c.h.b16 %v3428
    %v4114 = vunpack.c.l.b16 %v3429
    %v4115 = vunpack.c.h.b16 %v3429
    %v4116 = vunpack.c.l.b16 %v3430
    %v4117 = vunpack.c.h.b16 %v3430
    %v4118 = vunpack.c.l.b16 %v3431
    %v4119 = vunpack.c.h.b16 %v3431
    %v4120 = vunpack.c.l.b16 %v3432
    %v4121 = vunpack.c.h.b16 %v3432
    %v4122 = vunpack.c.l.b16 %v3433
    %v4123 = vunpack.c.h.b16 %v3433
    %v4124 = vunpack.c.l.b16 %v3434
    %v4125 = vunpack.c.h.b16 %v3434
    %v4126 = vunpack.c.l.b16 %v3435
    %v4127 = vunpack.c.h.b16 %v3435
    %v4128 = vunpack.c.l.b16 %v3436
    %v4129 = vunpack.c.h.b16 %v3436
    %v4130 = vunpack.c.l.b16 %v3437
    %v4131 = vunpack.c.h.b16 %v3437
    %v4132 = vunpack.c.l.b16 %v3438
    %v4133 = vunpack.c.h.b16 %v3438
    %v4134 = vunpack.c.l.b16 %v3439
    %v4135 = vunpack.c.h.b16 %v3439
    %v4136 = vunpack.c.l.b16 %v3440
    %v4137 = vunpack.c.h.b16 %v3440
    %v4138 = vunpack.c.l.b16 %v3441
    %v4139 = vunpack.c.h.b16 %v3441
    %v4140 = vunpack.c.l.b16 %v3442
    %v4141 = vunpack.c.h.b16 %v3442
    %v4142 = vunpack.c.l.b16 %v3443
    %v4143 = vunpack.c.h.b16 %v3443
    %v4144 = vunpack.c.l.b16 %v3444
    %v4145 = vunpack.c.h.b16 %v3444
    %v4146 = vunpack.c.l.b16 %v3445
    %v4147 = vunpack.c.h.b16 %v3445
    %v4148 = vunpack.c.l.b16 %v3446
    %v4149 = vunpack.c.h.b16 %v3446
    %v4150 = vunpack.c.l.b16 %v3447
    %v4151 = vunpack.c.h.b16 %v3447
    %v4152 = vunpack.c.l.b16 %v3448
    %v4153 = vunpack.c.h.b16 %v3448
    %v4154 = vunpack.c.l.b16 %v3449
    %v4155 = vunpack.c.h.b16 %v3449
    %v4156 = vunpack.c.l.b16 %v3450
    %v4157 = vunpack.c.h.b16 %v3450
    %v4158 = vunpack.c.l.b16 %v3451
    %v4159 = vunpack.c.h.b16 %v3451
    %v4160 = vunpack.c.l.b16 %v3452
    %v4161 = vunpack.c.h.b16 %v3452
    %v4162 = vunpack.c.l.b16 %v3453
    %v4163 = vunpack.c.h.b16 %v3453
    %v4164 = vunpack.c.l.b16 %v3454
    %v4165 = vunpack.c.h.b16 %v3454
    %v4166 = vunpack.c.l.b16 %v3455
    %v4167 = vunpack.c.h.b16 %v3455
    %v4168 = vunpack.c.l.b16 %v3456
    %v4169 = vunpack.c.h.b16 %v3456
    %v4170 = vunpack.c.l.b16 %v3457
    %v4171 = vunpack.c.h.b16 %v3457
    %v4172 = vunpack.c.l.b16 %v3458
    %v4173 = vunpack.c.h.b16 %v3458
    %v4174 = vunpack.c.l.b16 %v3459
    %v4175 = vunpack.c.h.b16 %v3459
    %v4176 = vunpack.c.l.b16 %v3460
    %v4177 = vunpack.c.h.b16 %v3460
    %v4178 = vunpack.c.l.b16 %v3461
    %v4179 = vunpack.c.h.b16 %v3461
    %v4180 = vunpack.c.l.b16 %v3462
    %v4181 = vunpack.c.h.b16 %v3462
    %v4182 = vunpack.c.l.b16 %v3463
    %v4183 = vunpack.c.h.b16 %v3463
    %v4184 = vunpack.c.l.b16 %v3464
    %v4185 = vunpack.c.h.b16 %v3464
    %v4186 = vunpack.c.l.b16 %v3465
    %v4187 = vunpack.c.h.b16 %v3465
    %v4188 = vunpack.c.l.b16 %v3466
    %v4189 = vunpack.c.h.b16 %v3466
    %v4190 = vunpack.c.l.b16 %v3467
    %v4191 = vunpack.c.h.b16 %v3467
    %v4192 = vunpack.c.l.b16 %v3468
    %v4193 = vunpack.c.h.b16 %v3468
    %v4194 = vunpack.c.l.b16 %v3469
    %v4195 = vunpack.c.h.b16 %v3469
    %v4196 = vunpack.c.l.b16 %v3470
    %v4197 = vunpack.c.h.b16 %v3470
    %v4198 = vunpack.c.l.b16 %v3471
    %v4199 = vunpack.c.h.b16 %v3471
    %v4200 = vunpack.c.l.b16 %v3472
    %v4201 = vunpack.c.h.b16 %v3472
    %v4202 = vunpack.c.l.b16 %v3473
    %v4203 = vunpack.c.h.b16 %v3473
    %v4204 = vunpack.c.l.b16 %v3474
    %v4205 = vunpack.c.h.b16 %v3474
    %v4206 = vunpack.c.l.b16 %v3475
    %v4207 = vunpack.c.h.b16 %v3475
    %v4208 = vunpack.c.l.b16 %v3476
    %v4209 = vunpack.c.h.b16 %v3476
    %v4210 = vunpack.c.l.b16 %v3477
    %v4211 = vunpack.c.h.b16 %v3477
    %v4212 = vunpack.c.l.b16 %v3478
    %v4213 = vunpack.c.h.b16 %v3478
    %v4214 = vunpack.c.l.b16 %v3479
    %v4215 = vunpack.c.h.b16 %v3479
    %v4216 = vunpack.c.l.b16 %v3480
    %v4217 = vunpack.c.h.b16 %v3480
    %v4218 = vunpack.c.l.b16 %v3481
    %v4219 = vunpack.c.h.b16 %v3481
    %v4220 = vunpack.c.l.b16 %v3482
    %v4221 = vunpack.c.h.b16 %v3482
    %v4222 = vunpack.c.l.b16 %v3483
    %v4223 = vunpack.c.h.b16 %v3483
    %v4224 = vunpack.c.l.b16 %v3484
    %v4225 = vunpack.c.h.b16 %v3484
    %v4226 = vunpack.c.l.b16 %v3485
    %v4227 = vunpack.c.h.b16 %v3485
    %v4228 = vunpack.c.l.b16 %v3486
    %v4229 = vunpack.c.h.b16 %v3486
    %v4230 = vunpack.c.l.b16 %v3487
    %v4231 = vunpack.c.h.b16 %v3487
    %v4232 = vunpack.c.l.b16 %v3488
    %v4233 = vunpack.c.h.b16 %v3488
    %v4234 = vunpack.c.l.b16 %v3489
    %v4235 = vunpack.c.h.b16 %v3489
    %v4236 = vunpack.c.l.b16 %v3490
    %v4237 = vunpack.c.h.b16 %v3490
    %v4238 = vunpack.c.l.b16 %v3491
    %v4239 = vunpack.c.h.b16 %v3491
    %v4240 = vunpack.c.l.b16 %v3492
    %v4241 = vunpack.c.h.b16 %v3492
    %v4242 = vunpack.c.l.b16 %v3493
    %v4243 = vunpack.c.h.b16 %v3493
    %v4244 = vunpack.c.l.b16 %v3494
    %v4245 = vunpack.c.h.b16 %v3494
    %v4246 = vunpack.c.l.b16 %v3495
    %v4247 = vunpack.c.h.b16 %v3495
    %v4248 = vunpack.c.l.b16 %v3496
    %v4249 = vunpack.c.h.b16 %v3496
    %v4250 = vunpack.c.l.b16 %v3497
    %v4251 = vunpack.c.h.b16 %v3497
    %v4252 = vunpack.c.l.b16 %v3498
    %v4253 = vunpack.c.h.b16 %v3498
    %v4254 = vunpack.c.l.b16 %v3499
    %v4255 = vunpack.c.h.b16 %v3499
    %v4256 = vunpack.c.l.b16 %v3500
    %v4257 = vunpack.c.h.b16 %v3500
    %v4258 = vunpack.c.l.b16 %v3501
    %v4259 = vunpack.c.h.b16 %v3501
    %v4260 = vunpack.c.l.b16 %v3502
    %v4261 = vunpack.c.h.b16 %v3502
    %v4262 = vunpack.c.l.b16 %v3503
    %v4263 = vunpack.c.h.b16 %v3503
    %v4264 = vunpack.c.l.b16 %v3504
    %v4265 = vunpack.c.h.b16 %v3504
    %v4266 = vunpack.c.l.b16 %v3505
    %v4267 = vunpack.c.h.b16 %v3505
    %v4268 = vunpack.c.l.b16 %v3506
    %v4269 = vunpack.c.h.b16 %v3506
    %v4270 = vunpack.c.l.b16 %v3507
    %v4271 = vunpack.c.h.b16 %v3507
    %v4272 = vunpack.c.l.b16 %v3508
    %v4273 = vunpack.c.h.b16 %v3508
    %v4274 = vunpack.c.l.b16 %v3509
    %v4275 = vunpack.c.h.b16 %v3509
    %v4276 = vunpack.c.l.b16 %v3510
    %v4277 = vunpack.c.h.b16 %v3510
    %v4278 = vunpack.c.l.b16 %v3511
    %v4279 = vunpack.c.h.b16 %v3511
    %v4280 = vunpack.c.l.b16 %v3512
    %v4281 = vunpack.c.h.b16 %v3512
    %v4282 = vunpack.c.l.b16 %v3513
    %v4283 = vunpack.c.h.b16 %v3513
    %v4284 = vunpack.c.l.b16 %v3514
    %v4285 = vunpack.c.h.b16 %v3514
    %v4286 = vunpack.c.l.b16 %v3515
    %v4287 = vunpack.c.h.b16 %v3515
    %v4288 = vunpack.c.l.b16 %v3516
    %v4289 = vunpack.c.h.b16 %v3516
    %v4290 = vunpack.c.l.b16 %v3517
    %v4291 = vunpack.c.h.b16 %v3517
    %v4292 = vunpack.c.l.b16 %v3518
    %v4293 = vunpack.c.h.b16 %v3518
    %v4294 = vunpack.c.l.b16 %v3519
    %v4295 = vunpack.c.h.b16 %v3519
    %v4296 = vunpack.c.l.b16 %v3520
    %v4297 = vunpack.c.h.b16 %v3520
    %v4298 = vunpack.c.l.b16 %v3521
    %v4299 = vunpack.c.h.b16 %v3521
    %v4300 = vunpack.c.l.b16 %v3522
    %v4301 = vunpack.c.h.b16 %v3522
    %v4302 = vunpack.c.l.b16 %v3523
    %v4303 = vunpack.c.h.b16 %v3523
    %v4304 = vunpack.c.l.b16 %v3524
    %v4305 = vunpack.c.h.b16 %v3524
    %v4306 = vunpack.c.l.b16 %v3525
    %v4307 = vunpack.c.h.b16 %v3525
    %v4308 = vunpack.c.l.b16 %v3526
    %v4309 = vunpack.c.h.b16 %v3526
    %v4310 = vunpack.c.l.b16 %v3527
    %v4311 = vunpack.c.h.b16 %v3527
    %v4312 = vunpack.c.l.b16 %v3528
    %v4313 = vunpack.c.h.b16 %v3528
    %v4314 = vunpack.c.l.b16 %v3529
    %v4315 = vunpack.c.h.b16 %v3529
    %v4316 = vunpack.c.l.b16 %v3530
    %v4317 = vunpack.c.h.b16 %v3530
    %v4318 = vunpack.c.l.b16 %v3531
    %v4319 = vunpack.c.h.b16 %v3531
    %v4320 = vunpack.c.l.b16 %v3532
    %v4321 = vunpack.c.h.b16 %v3532
    %v4322 = vunpack.c.l.b16 %v3533
    %v4323 = vunpack.c.h.b16 %v3533
    %v4324 = vunpack.c.l.b16 %v3534
    %v4325 = vunpack.c.h.b16 %v3534
    %v4326 = vunpack.c.l.b16 %v3535
    %v4327 = vunpack.c.h.b16 %v3535
    %v4328 = vunpack.c.l.b16 %v3536
    %v4329 = vunpack.c.h.b16 %v3536
    %v4330 = vunpack.c.l.b16 %v3537
    %v4331 = vunpack.c.h.b16 %v3537
    %v4332 = vunpack.c.l.b16 %v3538
    %v4333 = vunpack.c.h.b16 %v3538
    %v4334 = vunpack.c.l.b16 %v3539
    %v4335 = vunpack.c.h.b16 %v3539
    %v4336 = vunpack.c.l.b16 %v3540
    %v4337 = vunpack.c.h.b16 %v3540
    %v4338 = vunpack.c.l.b16 %v3541
    %v4339 = vunpack.c.h.b16 %v3541
    %v4340 = vunpack.c.l.b16 %v3542
    %v4341 = vunpack.c.h.b16 %v3542
    %v4342 = vunpack.c.l.b16 %v3543
    %v4343 = vunpack.c.h.b16 %v3543
    %v4344 = vunpack.c.l.b16 %v3544
    %v4345 = vunpack.c.h.b16 %v3544
    %v4346 = vunpack.c.l.b16 %v3545
    %v4347 = vunpack.c.h.b16 %v3545
    %v4348 = vunpack.c.l.b16 %v3546
    %v4349 = vunpack.c.h.b16 %v3546
    %v4350 = vunpack.c.l.b16 %v3547
    %v4351 = vunpack.c.h.b16 %v3547
    %v4352 = vunpack.c.l.b16 %v3548
    %v4353 = vunpack.c.h.b16 %v3548
    %v4354 = vunpack.c.l.b16 %v3549
    %v4355 = vunpack.c.h.b16 %v3549
    %v4356 = vpack.c.b16 %v3848, %v3844
    %v4357 = vpack.c.b16 %v3849, %v3845
    %v4358 = vpack.c.b16 %v3850, %v3846
    %v4359 = vpack.c.b16 %v3851, %v3847
    %v4360 = vpack.c.b16 %v3856, %v3852
    %v4361 = vpack.c.b16 %v3857, %v3853
    %v4362 = vpack.c.b16 %v3858, %v3854
    %v4363 = vpack.c.b16 %v3859, %v3855
    %v4364 = vpack.c.b16 %v3864, %v3860
    %v4365 = vpack.c.b16 %v3865, %v3861
    %v4366 = vpack.c.b16 %v3866, %v3862
    %v4367 = vpack.c.b16 %v3867, %v3863
    %v4368 = vpack.c.b16 %v3872, %v3868
    %v4369 = vpack.c.b16 %v3873, %v3869
    %v4370 = vpack.c.b16 %v3874, %v3870
    %v4371 = vpack.c.b16 %v3875, %v3871
    %v4372 = vpack.c.b16 %v3880, %v3876
    %v4373 = vpack.c.b16 %v3881, %v3877
    %v4374 = vpack.c.b16 %v3882, %v3878
    %v4375 = vpack.c.b16 %v3883, %v3879
    %v4376 = vpack.c.b16 %v3888, %v3884
    %v4377 = vpack.c.b16 %v3889, %v3885
    %v4378 = vpack.c.b16 %v3890, %v3886
    %v4379 = vpack.c.b16 %v3891, %v3887
    %v4380 = vpack.c.b16 %v3896, %v3892
    %v4381 = vpack.c.b16 %v3897, %v3893
    %v4382 = vpack.c.b16 %v3898, %v3894
    %v4383 = vpack.c.b16 %v3899, %v3895
    %v4384 = vpack.c.b16 %v3904, %v3900
    %v4385 = vpack.c.b16 %v3905, %v3901
    %v4386 = vpack.c.b16 %v3906, %v3902
    %v4387 = vpack.c.b16 %v3907, %v3903
    %v4388 = vpack.c.b16 %v3912, %v3908
    %v4389 = vpack.c.b16 %v3913, %v3909
    %v4390 = vpack.c.b16 %v3914, %v3910
    %v4391 = vpack.c.b16 %v3915, %v3911
    %v4392 = vpack.c.b16 %v3920, %v3916
    %v4393 = vpack.c.b16 %v3921, %v3917
    %v4394 = vpack.c.b16 %v3922, %v3918
    %v4395 = vpack.c.b16 %v3923, %v3919
    %v4396 = vpack.c.b16 %v3928, %v3924
    %v4397 = vpack.c.b16 %v3929, %v3925
    %v4398 = vpack.c.b16 %v3930, %v3926
    %v4399 = vpack.c.b16 %v3931, %v3927
    %v4400 = vpack.c.b16 %v3936, %v3932
    %v4401 = vpack.c.b16 %v3937, %v3933
    %v4402 = vpack.c.b16 %v3938, %v3934
    %v4403 = vpack.c.b16 %v3939, %v3935
    %v4404 = vpack.c.b16 %v3944, %v3940
    %v4405 = vpack.c.b16 %v3945, %v3941
    %v4406 = vpack.c.b16 %v3946, %v3942
    %v4407 = vpack.c.b16 %v3947, %v3943
    %v4408 = vpack.c.b16 %v3952, %v3948
    %v4409 = vpack.c.b16 %v3953, %v3949
    %v4410 = vpack.c.b16 %v3954, %v3950
    %v4411 = vpack.c.b16 %v3955, %v3951
    %v4412 = vpack.c.b16 %v3960, %v3956
    %v4413 = vpack.c.b16 %v3961, %v3957
    %v4414 = vpack.c.b16 %v3962, %v3958
    %v4415 = vpack.c.b16 %v3963, %v3959
    %v4416 = vpack.c.b16 %v3968, %v3964
    %v4417 = vpack.c.b16 %v3969, %v3965
    %v4418 = vpack.c.b16 %v3970, %v3966
    %v4419 = vpack.c.b16 %v3971, %v3967
    %v4420 = vpack.c.b16 %v3976, %v3972
    %v4421 = vpack.c.b16 %v3977, %v3973
    %v4422 = vpack.c.b16 %v3978, %v3974
    %v4423 = vpack.c.b16 %v3979, %v3975
    %v4424 = vpack.c.b16 %v3984, %v3980
    %v4425 = vpack.c.b16 %v3985, %v3981
    %v4426 = vpack.c.b16 %v3986, %v3982
    %v4427 = vpack.c.b16 %v3987, %v3983
    %v4428 = vpack.c.b16 %v3992, %v3988
    %v4429 = vpack.c.b16 %v3993, %v3989
    %v4430 = vpack.c.b16 %v3994, %v3990
    %v4431 = vpack.c.b16 %v3995, %v3991
    %v4432 = vpack.c.b16 %v4000, %v3996
    %v4433 = vpack.c.b16 %v4001, %v3997
    %v4434 = vpack.c.b16 %v4002, %v3998
    %v4435 = vpack.c.b16 %v4003, %v3999
    %v4436 = vpack.c.b16 %v4008, %v4004
    %v4437 = vpack.c.b16 %v4009, %v4005
    %v4438 = vpack.c.b16 %v4010, %v4006
    %v4439 = vpack.c.b16 %v4011, %v4007
    %v4440 = vpack.c.b16 %v4016, %v4012
    %v4441 = vpack.c.b16 %v4017, %v4013
    %v4442 = vpack.c.b16 %v4018, %v4014
    %v4443 = vpack.c.b16 %v4019, %v4015
    %v4444 = vpack.c.b16 %v4024, %v4020
    %v4445 = vpack.c.b16 %v4025, %v4021
    %v4446 = vpack.c.b16 %v4026, %v4022
    %v4447 = vpack.c.b16 %v4027, %v4023
    %v4448 = vpack.c.b16 %v4032, %v4028
    %v4449 = vpack.c.b16 %v4033, %v4029
    %v4450 = vpack.c.b16 %v4034, %v4030
    %v4451 = vpack.c.b16 %v4035, %v4031
    %v4452 = vpack.c.b16 %v4040, %v4036
    %v4453 = vpack.c.b16 %v4041, %v4037
    %v4454 = vpack.c.b16 %v4042, %v4038
    %v4455 = vpack.c.b16 %v4043, %v4039
    %v4456 = vpack.c.b16 %v4048, %v4044
    %v4457 = vpack.c.b16 %v4049, %v4045
    %v4458 = vpack.c.b16 %v4050, %v4046
    %v4459 = vpack.c.b16 %v4051, %v4047
    %v4460 = vpack.c.b16 %v4056, %v4052
    %v4461 = vpack.c.b16 %v4057, %v4053
    %v4462 = vpack.c.b16 %v4058, %v4054
    %v4463 = vpack.c.b16 %v4059, %v4055
    %v4464 = vpack.c.b16 %v4064, %v4060
    %v4465 = vpack.c.b16 %v4065, %v4061
    %v4466 = vpack.c.b16 %v4066, %v4062
    %v4467 = vpack.c.b16 %v4067, %v4063
    %v4468 = vpack.c.b16 %v4072, %v4068
    %v4469 = vpack.c.b16 %v4073, %v4069
    %v4470 = vpack.c.b16 %v4074, %v4070
    %v4471 = vpack.c.b16 %v4075, %v4071
    %v4472 = vpack.c.b16 %v4080, %v4076
    %v4473 = vpack.c.b16 %v4081, %v4077
    %v4474 = vpack.c.b16 %v4082, %v4078
    %v4475 = vpack.c.b16 %v4083, %v4079
    %v4476 = vpack.c.b16 %v4088, %v4084
    %v4477 = vpack.c.b16 %v4089, %v4085
    %v4478 = vpack.c.b16 %v4090, %v4086
    %v4479 = vpack.c.b16 %v4091, %v4087
    %v4480 = vpack.c.b16 %v4096, %v4092
    %v4481 = vpack.c.b16 %v4097, %v4093
    %v4482 = vpack.c.b16 %v4098, %v4094
    %v4483 = vpack.c.b16 %v4099, %v4095
    %v4484 = vpack.c.b16 %v4104, %v4100
    %v4485 = vpack.c.b16 %v4105, %v4101
    %v4486 = vpack.c.b16 %v4106, %v4102
    %v4487 = vpack.c.b16 %v4107, %v4103
    %v4488 = vpack.c.b16 %v4112, %v4108
    %v4489 = vpack.c.b16 %v4113, %v4109
    %v4490 = vpack.c.b16 %v4114, %v4110
    %v4491 = vpack.c.b16 %v4115, %v4111
    %v4492 = vpack.c.b16 %v4120, %v4116
    %v4493 = vpack.c.b16 %v4121, %v4117
    %v4494 = vpack.c.b16 %v4122, %v4118
    %v4495 = vpack.c.b16 %v4123, %v4119
    %v4496 = vpack.c.b16 %v4128, %v4124
    %v4497 = vpack.c.b16 %v4129, %v4125
    %v4498 = vpack.c.b16 %v4130, %v4126
    %v4499 = vpack.c.b16 %v4131, %v4127
    %v4500 = vpack.c.b16 %v4136, %v4132
    %v4501 = vpack.c.b16 %v4137, %v4133
    %v4502 = vpack.c.b16 %v4138, %v4134
    %v4503 = vpack.c.b16 %v4139, %v4135
    %v4504 = vpack.c.b16 %v4144, %v4140
    %v4505 = vpack.c.b16 %v4145, %v4141
    %v4506 = vpack.c.b16 %v4146, %v4142
    %v4507 = vpack.c.b16 %v4147, %v4143
    %v4508 = vpack.c.b16 %v4152, %v4148
    %v4509 = vpack.c.b16 %v4153, %v4149
    %v4510 = vpack.c.b16 %v4154, %v4150
    %v4511 = vpack.c.b16 %v4155, %v4151
    %v4512 = vpack.c.b16 %v4160, %v4156
    %v4513 = vpack.c.b16 %v4161, %v4157
    %v4514 = vpack.c.b16 %v4162, %v4158
    %v4515 = vpack.c.b16 %v4163, %v4159
    %v4516 = vpack.c.b16 %v4168, %v4164
    %v4517 = vpack.c.b16 %v4169, %v4165
    %v4518 = vpack.c.b16 %v4170, %v4166
    %v4519 = vpack.c.b16 %v4171, %v4167
    %v4520 = vpack.c.b16 %v4176, %v4172
    %v4521 = vpack.c.b16 %v4177, %v4173
    %v4522 = vpack.c.b16 %v4178, %v4174
    %v4523 = vpack.c.b16 %v4179, %v4175
    %v4524 = vpack.c.b16 %v4184, %v4180
    %v4525 = vpack.c.b16 %v4185, %v4181
    %v4526 = vpack.c.b16 %v4186, %v4182
    %v4527 = vpack.c.b16 %v4187, %v4183
    %v4528 = vpack.c.b16 %v4192, %v4188
    %v4529 = vpack.c.b16 %v4193, %v4189
    %v4530 = vpack.c.b16 %v4194, %v4190
    %v4531 = vpack.c.b16 %v4195, %v4191
    %v4532 = vpack.c.b16 %v4200, %v4196
    %v4533 = vpack.c.b16 %v4201, %v4197
    %v4534 = vpack.c.b16 %v4202, %v4198
    %v4535 = vpack.c.b16 %v4203, %v4199
    %v4536 = vpack.c.b16 %v4208, %v4204
    %v4537 = vpack.c.b16 %v4209, %v4205
    %v4538 = vpack.c.b16 %v4210, %v4206
    %v4539 = vpack.c.b16 %v4211, %v4207
    %v4540 = vpack.c.b16 %v4216, %v4212
    %v4541 = vpack.c.b16 %v4217, %v4213
    %v4542 = vpack.c.b16 %v4218, %v4214
    %v4543 = vpack.c.b16 %v4219, %v4215
    %v4544 = vpack.c.b16 %v4224, %v4220
    %v4545 = vpack.c.b16 %v4225, %v4221
    %v4546 = vpack.c.b16 %v4226, %v4222
    %v4547 = vpack.c.b16 %v4227, %v4223
    %v4548 = vpack.c.b16 %v4232, %v4228
    %v4549 = vpack.c.b16 %v4233, %v4229
    %v4550 = vpack.c.b16 %v4234, %v4230
    %v4551 = vpack.c.b16 %v4235, %v4231
    %v4552 = vpack.c.b16 %v4240, %v4236
    %v4553 = vpack.c.b16 %v4241, %v4237
    %v4554 = vpack.c.b16 %v4242, %v4238
    %v4555 = vpack.c.b16 %v4243, %v4239
    %v4556 = vpack.c.b16 %v4248, %v4244
    %v4557 = vpack.c.b16 %v4249, %v4245
    %v4558 = vpack.c.b16 %v4250, %v4246
    %v4559 = vpack.c.b16 %v4251, %v4247
    %v4560 = vpack.c.b16 %v4256, %v4252
    %v4561 = vpack.c.b16 %v4257, %v4253
    %v4562 = vpack.c.b16 %v4258, %v4254
    %v4563 = vpack.c.b16 %v4259, %v4255
    %v4564 = vpack.c.b16 %v4264, %v4260
    %v4565 = vpack.c.b16 %v4265, %v4261
    %v4566 = vpack.c.b16 %v4266, %v4262
    %v4567 = vpack.c.b16 %v4267, %v4263
    %v4568 = vpack.c.b16 %v4272, %v4268
    %v4569 = vpack.c.b16 %v4273, %v4269
    %v4570 = vpack.c.b16 %v4274, %v4270
    %v4571 = vpack.c.b16 %v4275, %v4271
    %v4572 = vpack.c.b16 %v4280, %v4276
    %v4573 = vpack.c.b16 %v4281, %v4277
    %v4574 = vpack.c.b16 %v4282, %v4278
    %v4575 = vpack.c.b16 %v4283, %v4279
    %v4576 = vpack.c.b16 %v4288, %v4284
    %v4577 = vpack.c.b16 %v4289, %v4285
    %v4578 = vpack.c.b16 %v4290, %v4286
    %v4579 = vpack.c.b16 %v4291, %v4287
    %v4580 = vpack.c.b16 %v4296, %v4292
    %v4581 = vpack.c.b16 %v4297, %v4293
    %v4582 = vpack.c.b16 %v4298, %v4294
    %v4583 = vpack.c.b16 %v4299, %v4295
    %v4584 = vpack.c.b16 %v4304, %v4300
    %v4585 = vpack.c.b16 %v4305, %v4301
    %v4586 = vpack.c.b16 %v4306, %v4302
    %v4587 = vpack.c.b16 %v4307, %v4303
    %v4588 = vpack.c.b16 %v4312, %v4308
    %v4589 = vpack.c.b16 %v4313, %v4309
    %v4590 = vpack.c.b16 %v4314, %v4310
    %v4591 = vpack.c.b16 %v4315, %v4311
    %v4592 = vpack.c.b16 %v4320, %v4316
    %v4593 = vpack.c.b16 %v4321, %v4317
    %v4594 = vpack.c.b16 %v4322, %v4318
    %v4595 = vpack.c.b16 %v4323, %v4319
    %v4596 = vpack.c.b16 %v4328, %v4324
    %v4597 = vpack.c.b16 %v4329, %v4325
    %v4598 = vpack.c.b16 %v4330, %v4326
    %v4599 = vpack.c.b16 %v4331, %v4327
    %v4600 = vpack.c.b16 %v4336, %v4332
    %v4601 = vpack.c.b16 %v4337, %v4333
    %v4602 = vpack.c.b16 %v4338, %v4334
    %v4603 = vpack.c.b16 %v4339, %v4335
    %v4604 = vpack.c.b16 %v4344, %v4340
    %v4605 = vpack.c.b16 %v4345, %v4341
    %v4606 = vpack.c.b16 %v4346, %v4342
    %v4607 = vpack.c.b16 %v4347, %v4343
    %v4608 = vpack.c.b16 %v4352, %v4348
    %v4609 = vpack.c.b16 %v4353, %v4349
    %v4610 = vpack.c.b16 %v4354, %v4350
    %v4611 = vpack.c.b16 %v4355, %v4351
    %4868 = vmatpush.bf16.msra.mxu0 %v4384
    %4869 = vmatpush.bf16.msra.mxu0 %v4380
    %4870 = vmatpush.bf16.msra.mxu0 %v4376
    %4871 = vmatpush.bf16.msra.mxu0 %v4372
    %4872 = vmatpush.bf16.msra.mxu0 %v4368
    %4873 = vmatpush.bf16.msra.mxu0 %v4364
    %4874 = vmatpush.bf16.msra.mxu0 %v4360
    %4875 = vmatpush.bf16.msra.mxu0 %v4356
    %4876 = vmatmul.bf16.gmra.mxu0 %v3572
    %v4877 = vpop.f32.mrf.mxu0
    %v4878 = vadd.f32 %v3552, %v4877
    %v4879 = vpop.f32.mrf.mxu0
    %4880 = vdwg.mxu0
    %4881 = vmatpush.bf16.msra.mxu0 %v4416
    %4882 = vmatpush.bf16.msra.mxu0 %v4412
    %4883 = vmatpush.bf16.msra.mxu0 %v4408
    %4884 = vmatpush.bf16.msra.mxu0 %v4404
    %4885 = vmatpush.bf16.msra.mxu0 %v4400
    %4886 = vmatpush.bf16.msra.mxu0 %v4396
    %4887 = vmatpush.bf16.msra.mxu0 %v4392
    %4888 = vmatpush.bf16.msra.mxu0 %v4388
    %4889 = vmatmul.bf16.gmra.mxu0 %v3573
    %v4890 = vpop.f32.mrf.mxu0
    %v4891 = vadd.f32 %v4878, %v4890
    %v4892 = vpop.f32.mrf.mxu0
    %4893 = vdwg.mxu0
    %4894 = vmatpush.bf16.msra.mxu0 %v4448
    %4895 = vmatpush.bf16.msra.mxu0 %v4444
    %4896 = vmatpush.bf16.msra.mxu0 %v4440
    %4897 = vmatpush.bf16.msra.mxu0 %v4436
    %4898 = vmatpush.bf16.msra.mxu0 %v4432
    %4899 = vmatpush.bf16.msra.mxu0 %v4428
    %4900 = vmatpush.bf16.msra.mxu0 %v4424
    %4901 = vmatpush.bf16.msra.mxu0 %v4420
    %4902 = vmatmul.bf16.gmra.mxu0 %v3574
    %v4903 = vpop.f32.mrf.mxu0
    %v4904 = vadd.f32 %v4891, %v4903
    %v4905 = vpop.f32.mrf.mxu0
    %4906 = vdwg.mxu0
    %4907 = vmatpush.bf16.msra.mxu0 %v4480
    %4908 = vmatpush.bf16.msra.mxu0 %v4476
    %4909 = vmatpush.bf16.msra.mxu0 %v4472
    %4910 = vmatpush.bf16.msra.mxu0 %v4468
    %4911 = vmatpush.bf16.msra.mxu0 %v4464
    %4912 = vmatpush.bf16.msra.mxu0 %v4460
    %4913 = vmatpush.bf16.msra.mxu0 %v4456
    %4914 = vmatpush.bf16.msra.mxu0 %v4452
    %4915 = vmatmul.bf16.gmra.mxu0 %v3575
    %v4916 = vpop.f32.mrf.mxu0
    %v4917 = vadd.f32 %v4904, %v4916
    %v4918 = vpop.f32.mrf.mxu0
    %4919 = vdwg.mxu0
    %4920 = vmatpush.bf16.msra.mxu0 %v4512
    %4921 = vmatpush.bf16.msra.mxu0 %v4508
    %4922 = vmatpush.bf16.msra.mxu0 %v4504
    %4923 = vmatpush.bf16.msra.mxu0 %v4500
    %4924 = vmatpush.bf16.msra.mxu0 %v4496
    %4925 = vmatpush.bf16.msra.mxu0 %v4492
    %4926 = vmatpush.bf16.msra.mxu0 %v4488
    %4927 = vmatpush.bf16.msra.mxu0 %v4484
    %4928 = vmatmul.bf16.gmra.mxu0 %v3576
    %v4929 = vpop.f32.mrf.mxu0
    %v4930 = vadd.f32 %v4917, %v4929
    %v4931 = vpop.f32.mrf.mxu0
    %4932 = vdwg.mxu0
    %4933 = vmatpush.bf16.msra.mxu0 %v4544
    %4934 = vmatpush.bf16.msra.mxu0 %v4540
    %4935 = vmatpush.bf16.msra.mxu0 %v4536
    %4936 = vmatpush.bf16.msra.mxu0 %v4532
    %4937 = vmatpush.bf16.msra.mxu0 %v4528
    %4938 = vmatpush.bf16.msra.mxu0 %v4524
    %4939 = vmatpush.bf16.msra.mxu0 %v4520
    %4940 = vmatpush.bf16.msra.mxu0 %v4516
    %4941 = vmatmul.bf16.gmra.mxu0 %v3577
    %v4942 = vpop.f32.mrf.mxu0
    %v4943 = vadd.f32 %v4930, %v4942
    %v4944 = vpop.f32.mrf.mxu0
    %4945 = vdwg.mxu0
    %4946 = vmatpush.bf16.msra.mxu0 %v4576
    %4947 = vmatpush.bf16.msra.mxu0 %v4572
    %4948 = vmatpush.bf16.msra.mxu0 %v4568
    %4949 = vmatpush.bf16.msra.mxu0 %v4564
    %4950 = vmatpush.bf16.msra.mxu0 %v4560
    %4951 = vmatpush.bf16.msra.mxu0 %v4556
    %4952 = vmatpush.bf16.msra.mxu0 %v4552
    %4953 = vmatpush.bf16.msra.mxu0 %v4548
    %4954 = vmatmul.bf16.gmra.mxu0 %v3578
    %v4955 = vpop.f32.mrf.mxu0
    %v4956 = vadd.f32 %v4943, %v4955
    %v4957 = vpop.f32.mrf.mxu0
    %4958 = vdwg.mxu0
    %4959 = vmatpush.bf16.msra.mxu0 %v4608
    %4960 = vmatpush.bf16.msra.mxu0 %v4604
    %4961 = vmatpush.bf16.msra.mxu0 %v4600
    %4962 = vmatpush.bf16.msra.mxu0 %v4596
    %4963 = vmatpush.bf16.msra.mxu0 %v4592
    %4964 = vmatpush.bf16.msra.mxu0 %v4588
    %4965 = vmatpush.bf16.msra.mxu0 %v4584
    %4966 = vmatpush.bf16.msra.mxu0 %v4580
    %4967 = vmatmul.bf16.gmra.mxu0 %v3579
    %v4968 = vpop.f32.mrf.mxu0
    %v4969 = vadd.f32 %v4956, %v4968
    %v4970 = vpop.f32.mrf.mxu0
    %4971 = vdwg.mxu0
    %4972 = vmatpush.bf16.msra.mxu0 %v4385
    %4973 = vmatpush.bf16.msra.mxu0 %v4381
    %4974 = vmatpush.bf16.msra.mxu0 %v4377
    %4975 = vmatpush.bf16.msra.mxu0 %v4373
    %4976 = vmatpush.bf16.msra.mxu0 %v4369
    %4977 = vmatpush.bf16.msra.mxu0 %v4365
    %4978 = vmatpush.bf16.msra.mxu0 %v4361
    %4979 = vmatpush.bf16.msra.mxu0 %v4357
    %4980 = vmatmul.bf16.gmra.mxu0 %v3572
    %v4981 = vpop.f32.mrf.mxu0
    %v4982 = vadd.f32 %v3553, %v4981
    %v4983 = vpop.f32.mrf.mxu0
    %4984 = vdwg.mxu0
    %4985 = vmatpush.bf16.msra.mxu0 %v4417
    %4986 = vmatpush.bf16.msra.mxu0 %v4413
    %4987 = vmatpush.bf16.msra.mxu0 %v4409
    %4988 = vmatpush.bf16.msra.mxu0 %v4405
    %4989 = vmatpush.bf16.msra.mxu0 %v4401
    %4990 = vmatpush.bf16.msra.mxu0 %v4397
    %4991 = vmatpush.bf16.msra.mxu0 %v4393
    %4992 = vmatpush.bf16.msra.mxu0 %v4389
    %4993 = vmatmul.bf16.gmra.mxu0 %v3573
    %v4994 = vpop.f32.mrf.mxu0
    %v4995 = vadd.f32 %v4982, %v4994
    %v4996 = vpop.f32.mrf.mxu0
    %4997 = vdwg.mxu0
    %4998 = vmatpush.bf16.msra.mxu0 %v4449
    %4999 = vmatpush.bf16.msra.mxu0 %v4445
    %5000 = vmatpush.bf16.msra.mxu0 %v4441
    %5001 = vmatpush.bf16.msra.mxu0 %v4437
    %5002 = vmatpush.bf16.msra.mxu0 %v4433
    %5003 = vmatpush.bf16.msra.mxu0 %v4429
    %5004 = vmatpush.bf16.msra.mxu0 %v4425
    %5005 = vmatpush.bf16.msra.mxu0 %v4421
    %5006 = vmatmul.bf16.gmra.mxu0 %v3574
    %v5007 = vpop.f32.mrf.mxu0
    %v5008 = vadd.f32 %v4995, %v5007
    %v5009 = vpop.f32.mrf.mxu0
    %5010 = vdwg.mxu0
    %5011 = vmatpush.bf16.msra.mxu0 %v4481
    %5012 = vmatpush.bf16.msra.mxu0 %v4477
    %5013 = vmatpush.bf16.msra.mxu0 %v4473
    %5014 = vmatpush.bf16.msra.mxu0 %v4469
    %5015 = vmatpush.bf16.msra.mxu0 %v4465
    %5016 = vmatpush.bf16.msra.mxu0 %v4461
    %5017 = vmatpush.bf16.msra.mxu0 %v4457
    %5018 = vmatpush.bf16.msra.mxu0 %v4453
    %5019 = vmatmul.bf16.gmra.mxu0 %v3575
    %v5020 = vpop.f32.mrf.mxu0
    %v5021 = vadd.f32 %v5008, %v5020
    %v5022 = vpop.f32.mrf.mxu0
    %5023 = vdwg.mxu0
    %5024 = vmatpush.bf16.msra.mxu0 %v4513
    %5025 = vmatpush.bf16.msra.mxu0 %v4509
    %5026 = vmatpush.bf16.msra.mxu0 %v4505
    %5027 = vmatpush.bf16.msra.mxu0 %v4501
    %5028 = vmatpush.bf16.msra.mxu0 %v4497
    %5029 = vmatpush.bf16.msra.mxu0 %v4493
    %5030 = vmatpush.bf16.msra.mxu0 %v4489
    %5031 = vmatpush.bf16.msra.mxu0 %v4485
    %5032 = vmatmul.bf16.gmra.mxu0 %v3576
    %v5033 = vpop.f32.mrf.mxu0
    %v5034 = vadd.f32 %v5021, %v5033
    %v5035 = vpop.f32.mrf.mxu0
    %5036 = vdwg.mxu0
    %5037 = vmatpush.bf16.msra.mxu0 %v4545
    %5038 = vmatpush.bf16.msra.mxu0 %v4541
    %5039 = vmatpush.bf16.msra.mxu0 %v4537
    %5040 = vmatpush.bf16.msra.mxu0 %v4533
    %5041 = vmatpush.bf16.msra.mxu0 %v4529
    %5042 = vmatpush.bf16.msra.mxu0 %v4525
    %5043 = vmatpush.bf16.msra.mxu0 %v4521
    %5044 = vmatpush.bf16.msra.mxu0 %v4517
    %5045 = vmatmul.bf16.gmra.mxu0 %v3577
    %v5046 = vpop.f32.mrf.mxu0
    %v5047 = vadd.f32 %v5034, %v5046
    %v5048 = vpop.f32.mrf.mxu0
    %5049 = vdwg.mxu0
    %5050 = vmatpush.bf16.msra.mxu0 %v4577
    %5051 = vmatpush.bf16.msra.mxu0 %v4573
    %5052 = vmatpush.bf16.msra.mxu0 %v4569
    %5053 = vmatpush.bf16.msra.mxu0 %v4565
    %5054 = vmatpush.bf16.msra.mxu0 %v4561
    %5055 = vmatpush.bf16.msra.mxu0 %v4557
    %5056 = vmatpush.bf16.msra.mxu0 %v4553
    %5057 = vmatpush.bf16.msra.mxu0 %v4549
    %5058 = vmatmul.bf16.gmra.mxu0 %v3578
    %v5059 = vpop.f32.mrf.mxu0
    %v5060 = vadd.f32 %v5047, %v5059
    %v5061 = vpop.f32.mrf.mxu0
    %5062 = vdwg.mxu0
    %5063 = vmatpush.bf16.msra.mxu0 %v4609
    %5064 = vmatpush.bf16.msra.mxu0 %v4605
    %5065 = vmatpush.bf16.msra.mxu0 %v4601
    %5066 = vmatpush.bf16.msra.mxu0 %v4597
    %5067 = vmatpush.bf16.msra.mxu0 %v4593
    %5068 = vmatpush.bf16.msra.mxu0 %v4589
    %5069 = vmatpush.bf16.msra.mxu0 %v4585
    %5070 = vmatpush.bf16.msra.mxu0 %v4581
    %5071 = vmatmul.bf16.gmra.mxu0 %v3579
    %v5072 = vpop.f32.mrf.mxu0
    %v5073 = vadd.f32 %v5060, %v5072
    %v5074 = vpop.f32.mrf.mxu0
    %5075 = vdwg.mxu0
    %5076 = vmatpush.bf16.msra.mxu0 %v4386
    %5077 = vmatpush.bf16.msra.mxu0 %v4382
    %5078 = vmatpush.bf16.msra.mxu0 %v4378
    %5079 = vmatpush.bf16.msra.mxu0 %v4374
    %5080 = vmatpush.bf16.msra.mxu0 %v4370
    %5081 = vmatpush.bf16.msra.mxu0 %v4366
    %5082 = vmatpush.bf16.msra.mxu0 %v4362
    %5083 = vmatpush.bf16.msra.mxu0 %v4358
    %5084 = vmatmul.bf16.gmra.mxu0 %v3572
    %v5085 = vpop.f32.mrf.mxu0
    %v5086 = vadd.f32 %v3554, %v5085
    %v5087 = vpop.f32.mrf.mxu0
    %5088 = vdwg.mxu0
    %5089 = vmatpush.bf16.msra.mxu0 %v4418
    %5090 = vmatpush.bf16.msra.mxu0 %v4414
    %5091 = vmatpush.bf16.msra.mxu0 %v4410
    %5092 = vmatpush.bf16.msra.mxu0 %v4406
    %5093 = vmatpush.bf16.msra.mxu0 %v4402
    %5094 = vmatpush.bf16.msra.mxu0 %v4398
    %5095 = vmatpush.bf16.msra.mxu0 %v4394
    %5096 = vmatpush.bf16.msra.mxu0 %v4390
    %5097 = vmatmul.bf16.gmra.mxu0 %v3573
    %v5098 = vpop.f32.mrf.mxu0
    %v5099 = vadd.f32 %v5086, %v5098
    %v5100 = vpop.f32.mrf.mxu0
    %5101 = vdwg.mxu0
    %5102 = vmatpush.bf16.msra.mxu0 %v4450
    %5103 = vmatpush.bf16.msra.mxu0 %v4446
    %5104 = vmatpush.bf16.msra.mxu0 %v4442
    %5105 = vmatpush.bf16.msra.mxu0 %v4438
    %5106 = vmatpush.bf16.msra.mxu0 %v4434
    %5107 = vmatpush.bf16.msra.mxu0 %v4430
    %5108 = vmatpush.bf16.msra.mxu0 %v4426
    %5109 = vmatpush.bf16.msra.mxu0 %v4422
    %5110 = vmatmul.bf16.gmra.mxu0 %v3574
    %v5111 = vpop.f32.mrf.mxu0
    %v5112 = vadd.f32 %v5099, %v5111
    %v5113 = vpop.f32.mrf.mxu0
    %5114 = vdwg.mxu0
    %5115 = vmatpush.bf16.msra.mxu0 %v4482
    %5116 = vmatpush.bf16.msra.mxu0 %v4478
    %5117 = vmatpush.bf16.msra.mxu0 %v4474
    %5118 = vmatpush.bf16.msra.mxu0 %v4470
    %5119 = vmatpush.bf16.msra.mxu0 %v4466
    %5120 = vmatpush.bf16.msra.mxu0 %v4462
    %5121 = vmatpush.bf16.msra.mxu0 %v4458
    %5122 = vmatpush.bf16.msra.mxu0 %v4454
    %5123 = vmatmul.bf16.gmra.mxu0 %v3575
    %v5124 = vpop.f32.mrf.mxu0
    %v5125 = vadd.f32 %v5112, %v5124
    %v5126 = vpop.f32.mrf.mxu0
    %5127 = vdwg.mxu0
    %5128 = vmatpush.bf16.msra.mxu0 %v4514
    %5129 = vmatpush.bf16.msra.mxu0 %v4510
    %5130 = vmatpush.bf16.msra.mxu0 %v4506
    %5131 = vmatpush.bf16.msra.mxu0 %v4502
    %5132 = vmatpush.bf16.msra.mxu0 %v4498
    %5133 = vmatpush.bf16.msra.mxu0 %v4494
    %5134 = vmatpush.bf16.msra.mxu0 %v4490
    %5135 = vmatpush.bf16.msra.mxu0 %v4486
    %5136 = vmatmul.bf16.gmra.mxu0 %v3576
    %v5137 = vpop.f32.mrf.mxu0
    %v5138 = vadd.f32 %v5125, %v5137
    %v5139 = vpop.f32.mrf.mxu0
    %5140 = vdwg.mxu0
    %5141 = vmatpush.bf16.msra.mxu0 %v4546
    %5142 = vmatpush.bf16.msra.mxu0 %v4542
    %5143 = vmatpush.bf16.msra.mxu0 %v4538
    %5144 = vmatpush.bf16.msra.mxu0 %v4534
    %5145 = vmatpush.bf16.msra.mxu0 %v4530
    %5146 = vmatpush.bf16.msra.mxu0 %v4526
    %5147 = vmatpush.bf16.msra.mxu0 %v4522
    %5148 = vmatpush.bf16.msra.mxu0 %v4518
    %5149 = vmatmul.bf16.gmra.mxu0 %v3577
    %v5150 = vpop.f32.mrf.mxu0
    %v5151 = vadd.f32 %v5138, %v5150
    %v5152 = vpop.f32.mrf.mxu0
    %5153 = vdwg.mxu0
    %5154 = vmatpush.bf16.msra.mxu0 %v4578
    %5155 = vmatpush.bf16.msra.mxu0 %v4574
    %5156 = vmatpush.bf16.msra.mxu0 %v4570
    %5157 = vmatpush.bf16.msra.mxu0 %v4566
    %5158 = vmatpush.bf16.msra.mxu0 %v4562
    %5159 = vmatpush.bf16.msra.mxu0 %v4558
    %5160 = vmatpush.bf16.msra.mxu0 %v4554
    %5161 = vmatpush.bf16.msra.mxu0 %v4550
    %5162 = vmatmul.bf16.gmra.mxu0 %v3578
    %v5163 = vpop.f32.mrf.mxu0
    %v5164 = vadd.f32 %v5151, %v5163
    %v5165 = vpop.f32.mrf.mxu0
    %5166 = vdwg.mxu0
    %5167 = vmatpush.bf16.msra.mxu0 %v4610
    %5168 = vmatpush.bf16.msra.mxu0 %v4606
    %5169 = vmatpush.bf16.msra.mxu0 %v4602
    %5170 = vmatpush.bf16.msra.mxu0 %v4598
    %5171 = vmatpush.bf16.msra.mxu0 %v4594
    %5172 = vmatpush.bf16.msra.mxu0 %v4590
    %5173 = vmatpush.bf16.msra.mxu0 %v4586
    %5174 = vmatpush.bf16.msra.mxu0 %v4582
    %5175 = vmatmul.bf16.gmra.mxu0 %v3579
    %v5176 = vpop.f32.mrf.mxu0
    %v5177 = vadd.f32 %v5164, %v5176
    %v5178 = vpop.f32.mrf.mxu0
    %5179 = vdwg.mxu0
    %5180 = vmatpush.bf16.msra.mxu0 %v4387
    %5181 = vmatpush.bf16.msra.mxu0 %v4383
    %5182 = vmatpush.bf16.msra.mxu0 %v4379
    %5183 = vmatpush.bf16.msra.mxu0 %v4375
    %5184 = vmatpush.bf16.msra.mxu0 %v4371
    %5185 = vmatpush.bf16.msra.mxu0 %v4367
    %5186 = vmatpush.bf16.msra.mxu0 %v4363
    %5187 = vmatpush.bf16.msra.mxu0 %v4359
    %5188 = vmatmul.bf16.gmra.mxu0 %v3572
    %v5189 = vpop.f32.mrf.mxu0
    %v5190 = vadd.f32 %v3555, %v5189
    %v5191 = vpop.f32.mrf.mxu0
    %5192 = vdwg.mxu0
    %5193 = vmatpush.bf16.msra.mxu0 %v4419
    %5194 = vmatpush.bf16.msra.mxu0 %v4415
    %5195 = vmatpush.bf16.msra.mxu0 %v4411
    %5196 = vmatpush.bf16.msra.mxu0 %v4407
    %5197 = vmatpush.bf16.msra.mxu0 %v4403
    %5198 = vmatpush.bf16.msra.mxu0 %v4399
    %5199 = vmatpush.bf16.msra.mxu0 %v4395
    %5200 = vmatpush.bf16.msra.mxu0 %v4391
    %5201 = vmatmul.bf16.gmra.mxu0 %v3573
    %v5202 = vpop.f32.mrf.mxu0
    %v5203 = vadd.f32 %v5190, %v5202
    %v5204 = vpop.f32.mrf.mxu0
    %5205 = vdwg.mxu0
    %5206 = vmatpush.bf16.msra.mxu0 %v4451
    %5207 = vmatpush.bf16.msra.mxu0 %v4447
    %5208 = vmatpush.bf16.msra.mxu0 %v4443
    %5209 = vmatpush.bf16.msra.mxu0 %v4439
    %5210 = vmatpush.bf16.msra.mxu0 %v4435
    %5211 = vmatpush.bf16.msra.mxu0 %v4431
    %5212 = vmatpush.bf16.msra.mxu0 %v4427
    %5213 = vmatpush.bf16.msra.mxu0 %v4423
    %5214 = vmatmul.bf16.gmra.mxu0 %v3574
    %v5215 = vpop.f32.mrf.mxu0
    %v5216 = vadd.f32 %v5203, %v5215
    %v5217 = vpop.f32.mrf.mxu0
    %5218 = vdwg.mxu0
    %5219 = vmatpush.bf16.msra.mxu0 %v4483
    %5220 = vmatpush.bf16.msra.mxu0 %v4479
    %5221 = vmatpush.bf16.msra.mxu0 %v4475
    %5222 = vmatpush.bf16.msra.mxu0 %v4471
    %5223 = vmatpush.bf16.msra.mxu0 %v4467
    %5224 = vmatpush.bf16.msra.mxu0 %v4463
    %5225 = vmatpush.bf16.msra.mxu0 %v4459
    %5226 = vmatpush.bf16.msra.mxu0 %v4455
    %5227 = vmatmul.bf16.gmra.mxu0 %v3575
    %v5228 = vpop.f32.mrf.mxu0
    %v5229 = vadd.f32 %v5216, %v5228
    %v5230 = vpop.f32.mrf.mxu0
    %5231 = vdwg.mxu0
    %5232 = vmatpush.bf16.msra.mxu0 %v4515
    %5233 = vmatpush.bf16.msra.mxu0 %v4511
    %5234 = vmatpush.bf16.msra.mxu0 %v4507
    %5235 = vmatpush.bf16.msra.mxu0 %v4503
    %5236 = vmatpush.bf16.msra.mxu0 %v4499
    %5237 = vmatpush.bf16.msra.mxu0 %v4495
    %5238 = vmatpush.bf16.msra.mxu0 %v4491
    %5239 = vmatpush.bf16.msra.mxu0 %v4487
    %5240 = vmatmul.bf16.gmra.mxu0 %v3576
    %v5241 = vpop.f32.mrf.mxu0
    %v5242 = vadd.f32 %v5229, %v5241
    %v5243 = vpop.f32.mrf.mxu0
    %5244 = vdwg.mxu0
    %5245 = vmatpush.bf16.msra.mxu0 %v4547
    %5246 = vmatpush.bf16.msra.mxu0 %v4543
    %5247 = vmatpush.bf16.msra.mxu0 %v4539
    %5248 = vmatpush.bf16.msra.mxu0 %v4535
    %5249 = vmatpush.bf16.msra.mxu0 %v4531
    %5250 = vmatpush.bf16.msra.mxu0 %v4527
    %5251 = vmatpush.bf16.msra.mxu0 %v4523
    %5252 = vmatpush.bf16.msra.mxu0 %v4519
    %5253 = vmatmul.bf16.gmra.mxu0 %v3577
    %v5254 = vpop.f32.mrf.mxu0
    %v5255 = vadd.f32 %v5242, %v5254
    %v5256 = vpop.f32.mrf.mxu0
    %5257 = vdwg.mxu0
    %5258 = vmatpush.bf16.msra.mxu0 %v4579
    %5259 = vmatpush.bf16.msra.mxu0 %v4575
    %5260 = vmatpush.bf16.msra.mxu0 %v4571
    %5261 = vmatpush.bf16.msra.mxu0 %v4567
    %5262 = vmatpush.bf16.msra.mxu0 %v4563
    %5263 = vmatpush.bf16.msra.mxu0 %v4559
    %5264 = vmatpush.bf16.msra.mxu0 %v4555
    %5265 = vmatpush.bf16.msra.mxu0 %v4551
    %5266 = vmatmul.bf16.gmra.mxu0 %v3578
    %v5267 = vpop.f32.mrf.mxu0
    %v5268 = vadd.f32 %v5255, %v5267
    %v5269 = vpop.f32.mrf.mxu0
    %5270 = vdwg.mxu0
    %5271 = vmatpush.bf16.msra.mxu0 %v4611
    %5272 = vmatpush.bf16.msra.mxu0 %v4607
    %5273 = vmatpush.bf16.msra.mxu0 %v4603
    %5274 = vmatpush.bf16.msra.mxu0 %v4599
    %5275 = vmatpush.bf16.msra.mxu0 %v4595
    %5276 = vmatpush.bf16.msra.mxu0 %v4591
    %5277 = vmatpush.bf16.msra.mxu0 %v4587
    %5278 = vmatpush.bf16.msra.mxu0 %v4583
    %5279 = vmatmul.bf16.gmra.mxu0 %v3579
    %v5280 = vpop.f32.mrf.mxu0
    %v5281 = vadd.f32 %v5268, %v5280
    %v5282 = vpop.f32.mrf.mxu0
    %5283 = vdwg.mxu0
    %v5284 = vpack.c.bf16 %v5073, %v4969
    %v5285 = vpack.c.bf16 %v5281, %v5177
    %v5286 = vunpack.c.l.bf16 %v5284
    %v5287 = vunpack.c.h.bf16 %v5284
    %v5288 = vunpack.c.l.bf16 %v5285
    %v5289 = vunpack.c.h.bf16 %v5285
    %vm5290 = vcmp.gt.f32.partialorder %v5286, 0.0
    %vm5291 = vcmp.gt.f32.partialorder %v5287, 0.0
    %vm5292 = vcmp.gt.f32.partialorder %v5288, 0.0
    %vm5293 = vcmp.gt.f32.partialorder %v5289, 0.0
    %v5294 = vmul.f32 %v5286, 0.20019531
    %v5295 = vmul.f32 %v5287, 0.20019531
    %v5296 = vmul.f32 %v5288, 0.20019531
    %v5297 = vmul.f32 %v5289, 0.20019531
    %v5298 = vpack.c.bf16 %v5295, %v5294
    %v5299 = vpack.c.bf16 %v5297, %v5296
    %vm5300 = vmpackc.low %vm5291, %vm5290
    %vm5301 = vmpackc.low %vm5293, %vm5292
    %v5302 = vsel %vm5300, %v5284, %v5298
    %v5303 = vsel %vm5301, %v5285, %v5299
    %v5304 = vld [vmem:[#allocation10] sm:$0xff]
    %v5305 = vld [vmem:[#allocation10 + $0x8] sm:$0xff]
    %v5306 = vld [vmem:[#allocation10 + $0x10] sm:$0xff]
    %v5307 = vld [vmem:[#allocation10 + $0x18] sm:$0xff]
    %v5308 = vld [vmem:[#allocation10 + $0x20] sm:$0xff]
    %v5309 = vld [vmem:[#allocation10 + $0x28] sm:$0xff]
    %v5310 = vld [vmem:[#allocation10 + $0x30] sm:$0xff]
    %v5311 = vld [vmem:[#allocation10 + $0x38] sm:$0xff]
    %v5312 = vld [vmem:[#allocation10 + $0x40] sm:$0xff]
    %v5313 = vld [vmem:[#allocation10 + $0x48] sm:$0xff]
    %v5314 = vld [vmem:[#allocation10 + $0x50] sm:$0xff]
    %v5315 = vld [vmem:[#allocation10 + $0x58] sm:$0xff]
    %v5316 = vld [vmem:[#allocation10 + $0x60] sm:$0xff]
    %v5317 = vld [vmem:[#allocation10 + $0x68] sm:$0xff]
    %v5318 = vld [vmem:[#allocation10 + $0x70] sm:$0xff]
    %v5319 = vld [vmem:[#allocation10 + $0x78] sm:$0xff]
    %v5320 = vld [vmem:[#allocation10 + $0x80] sm:$0xff]
    %v5321 = vld [vmem:[#allocation10 + $0x88] sm:$0xff]
    %v5322 = vld [vmem:[#allocation10 + $0x90] sm:$0xff]
    %v5323 = vld [vmem:[#allocation10 + $0x98] sm:$0xff]
    %v5324 = vld [vmem:[#allocation10 + $0xa0] sm:$0xff]
    %v5325 = vld [vmem:[#allocation10 + $0xa8] sm:$0xff]
    %v5326 = vld [vmem:[#allocation10 + $0xb0] sm:$0xff]
    %v5327 = vld [vmem:[#allocation10 + $0xb8] sm:$0xff]
    %v5328 = vld [vmem:[#allocation10 + $0xc0] sm:$0xff]
    %v5329 = vld [vmem:[#allocation10 + $0xc8] sm:$0xff]
    %v5330 = vld [vmem:[#allocation10 + $0xd0] sm:$0xff]
    %v5331 = vld [vmem:[#allocation10 + $0xd8] sm:$0xff]
    %v5332 = vld [vmem:[#allocation10 + $0xe0] sm:$0xff]
    %v5333 = vld [vmem:[#allocation10 + $0xe8] sm:$0xff]
    %v5334 = vld [vmem:[#allocation10 + $0xf0] sm:$0xff]
    %v5335 = vld [vmem:[#allocation10 + $0xf8] sm:$0xff]
    %v5336 = vld [vmem:[#allocation10 + $0x100] sm:$0xff]
    %v5337 = vld [vmem:[#allocation10 + $0x108] sm:$0xff]
    %v5338 = vld [vmem:[#allocation10 + $0x110] sm:$0xff]
    %v5339 = vld [vmem:[#allocation10 + $0x118] sm:$0xff]
    %v5340 = vld [vmem:[#allocation10 + $0x120] sm:$0xff]
    %v5341 = vld [vmem:[#allocation10 + $0x128] sm:$0xff]
    %v5342 = vld [vmem:[#allocation10 + $0x130] sm:$0xff]
    %v5343 = vld [vmem:[#allocation10 + $0x138] sm:$0xff]
    %v5344 = vld [vmem:[#allocation10 + $0x140] sm:$0xff]
    %v5345 = vld [vmem:[#allocation10 + $0x148] sm:$0xff]
    %v5346 = vld [vmem:[#allocation10 + $0x150] sm:$0xff]
    %v5347 = vld [vmem:[#allocation10 + $0x158] sm:$0xff]
    %v5348 = vld [vmem:[#allocation10 + $0x160] sm:$0xff]
    %v5349 = vld [vmem:[#allocation10 + $0x168] sm:$0xff]
    %v5350 = vld [vmem:[#allocation10 + $0x170] sm:$0xff]
    %v5351 = vld [vmem:[#allocation10 + $0x178] sm:$0xff]
    %v5352 = vld [vmem:[#allocation10 + $0x180] sm:$0xff]
    %v5353 = vld [vmem:[#allocation10 + $0x188] sm:$0xff]
    %v5354 = vld [vmem:[#allocation10 + $0x190] sm:$0xff]
    %v5355 = vld [vmem:[#allocation10 + $0x198] sm:$0xff]
    %v5356 = vld [vmem:[#allocation10 + $0x1a0] sm:$0xff]
    %v5357 = vld [vmem:[#allocation10 + $0x1a8] sm:$0xff]
    %v5358 = vld [vmem:[#allocation10 + $0x1b0] sm:$0xff]
    %v5359 = vld [vmem:[#allocation10 + $0x1b8] sm:$0xff]
    %v5360 = vld [vmem:[#allocation10 + $0x1c0] sm:$0xff]
    %v5361 = vld [vmem:[#allocation10 + $0x1c8] sm:$0xff]
    %v5362 = vld [vmem:[#allocation10 + $0x1d0] sm:$0xff]
    %v5363 = vld [vmem:[#allocation10 + $0x1d8] sm:$0xff]
    %v5364 = vld [vmem:[#allocation10 + $0x1e0] sm:$0xff]
    %v5365 = vld [vmem:[#allocation10 + $0x1e8] sm:$0xff]
    %v5366 = vld [vmem:[#allocation10 + $0x1f0] sm:$0xff]
    %v5367 = vld [vmem:[#allocation10 + $0x1f8] sm:$0xff]
    %v5368 = vld [vmem:[#allocation11] sm:$0x3]
    %v5370 = vperm.slane %v5368, 0
    %v5371 = vperm.slane %v5368, 1
    %v5376 = vunpack.c.l.b16 %v5302
    %v5377 = vunpack.c.h.b16 %v5302
    %v5378 = vunpack.c.l.b16 %v5303
    %v5379 = vunpack.c.h.b16 %v5303
    %v5380 = vpack.c.b16 %v5376, %v5376
    %v5381 = vpack.c.b16 %v5377, %v5377
    %v5382 = vpack.c.b16 %v5378, %v5378
    %v5383 = vpack.c.b16 %v5379, %v5379
    %v5452 = vunpack.c.l.b16 %v5304
    %v5453 = vunpack.c.h.b16 %v5304
    %v5454 = vunpack.c.l.b16 %v5305
    %v5455 = vunpack.c.h.b16 %v5305
    %v5456 = vunpack.c.l.b16 %v5306
    %v5457 = vunpack.c.h.b16 %v5306
    %v5458 = vunpack.c.l.b16 %v5307
    %v5459 = vunpack.c.h.b16 %v5307
    %v5460 = vunpack.c.l.b16 %v5308
    %v5461 = vunpack.c.h.b16 %v5308
    %v5462 = vunpack.c.l.b16 %v5309
    %v5463 = vunpack.c.h.b16 %v5309
    %v5464 = vunpack.c.l.b16 %v5310
    %v5465 = vunpack.c.h.b16 %v5310
    %v5466 = vunpack.c.l.b16 %v5311
    %v5467 = vunpack.c.h.b16 %v5311
    %v5468 = vunpack.c.l.b16 %v5312
    %v5469 = vunpack.c.h.b16 %v5312
    %v5470 = vunpack.c.l.b16 %v5313
    %v5471 = vunpack.c.h.b16 %v5313
    %v5472 = vunpack.c.l.b16 %v5314
    %v5473 = vunpack.c.h.b16 %v5314
    %v5474 = vunpack.c.l.b16 %v5315
    %v5475 = vunpack.c.h.b16 %v5315
    %v5476 = vunpack.c.l.b16 %v5316
    %v5477 = vunpack.c.h.b16 %v5316
    %v5478 = vunpack.c.l.b16 %v5317
    %v5479 = vunpack.c.h.b16 %v5317
    %v5480 = vunpack.c.l.b16 %v5318
    %v5481 = vunpack.c.h.b16 %v5318
    %v5482 = vunpack.c.l.b16 %v5319
    %v5483 = vunpack.c.h.b16 %v5319
    %v5484 = vunpack.c.l.b16 %v5320
    %v5485 = vunpack.c.h.b16 %v5320
    %v5486 = vunpack.c.l.b16 %v5321
    %v5487 = vunpack.c.h.b16 %v5321
    %v5488 = vunpack.c.l.b16 %v5322
    %v5489 = vunpack.c.h.b16 %v5322
    %v5490 = vunpack.c.l.b16 %v5323
    %v5491 = vunpack.c.h.b16 %v5323
    %v5492 = vunpack.c.l.b16 %v5324
    %v5493 = vunpack.c.h.b16 %v5324
    %v5494 = vunpack.c.l.b16 %v5325
    %v5495 = vunpack.c.h.b16 %v5325
    %v5496 = vunpack.c.l.b16 %v5326
    %v5497 = vunpack.c.h.b16 %v5326
    %v5498 = vunpack.c.l.b16 %v5327
    %v5499 = vunpack.c.h.b16 %v5327
    %v5500 = vunpack.c.l.b16 %v5328
    %v5501 = vunpack.c.h.b16 %v5328
    %v5502 = vunpack.c.l.b16 %v5329
    %v5503 = vunpack.c.h.b16 %v5329
    %v5504 = vunpack.c.l.b16 %v5330
    %v5505 = vunpack.c.h.b16 %v5330
    %v5506 = vunpack.c.l.b16 %v5331
    %v5507 = vunpack.c.h.b16 %v5331
    %v5508 = vunpack.c.l.b16 %v5332
    %v5509 = vunpack.c.h.b16 %v5332
    %v5510 = vunpack.c.l.b16 %v5333
    %v5511 = vunpack.c.h.b16 %v5333
    %v5512 = vunpack.c.l.b16 %v5334
    %v5513 = vunpack.c.h.b16 %v5334
    %v5514 = vunpack.c.l.b16 %v5335
    %v5515 = vunpack.c.h.b16 %v5335
    %v5516 = vunpack.c.l.b16 %v5336
    %v5517 = vunpack.c.h.b16 %v5336
    %v5518 = vunpack.c.l.b16 %v5337
    %v5519 = vunpack.c.h.b16 %v5337
    %v5520 = vunpack.c.l.b16 %v5338
    %v5521 = vunpack.c.h.b16 %v5338
    %v5522 = vunpack.c.l.b16 %v5339
    %v5523 = vunpack.c.h.b16 %v5339
    %v5524 = vunpack.c.l.b16 %v5340
    %v5525 = vunpack.c.h.b16 %v5340
    %v5526 = vunpack.c.l.b16 %v5341
    %v5527 = vunpack.c.h.b16 %v5341
    %v5528 = vunpack.c.l.b16 %v5342
    %v5529 = vunpack.c.h.b16 %v5342
    %v5530 = vunpack.c.l.b16 %v5343
    %v5531 = vunpack.c.h.b16 %v5343
    %v5532 = vunpack.c.l.b16 %v5344
    %v5533 = vunpack.c.h.b16 %v5344
    %v5534 = vunpack.c.l.b16 %v5345
    %v5535 = vunpack.c.h.b16 %v5345
    %v5536 = vunpack.c.l.b16 %v5346
    %v5537 = vunpack.c.h.b16 %v5346
    %v5538 = vunpack.c.l.b16 %v5347
    %v5539 = vunpack.c.h.b16 %v5347
    %v5540 = vunpack.c.l.b16 %v5348
    %v5541 = vunpack.c.h.b16 %v5348
    %v5542 = vunpack.c.l.b16 %v5349
    %v5543 = vunpack.c.h.b16 %v5349
    %v5544 = vunpack.c.l.b16 %v5350
    %v5545 = vunpack.c.h.b16 %v5350
    %v5546 = vunpack.c.l.b16 %v5351
    %v5547 = vunpack.c.h.b16 %v5351
    %v5548 = vunpack.c.l.b16 %v5352
    %v5549 = vunpack.c.h.b16 %v5352
    %v5550 = vunpack.c.l.b16 %v5353
    %v5551 = vunpack.c.h.b16 %v5353
    %v5552 = vunpack.c.l.b16 %v5354
    %v5553 = vunpack.c.h.b16 %v5354
    %v5554 = vunpack.c.l.b16 %v5355
    %v5555 = vunpack.c.h.b16 %v5355
    %v5556 = vunpack.c.l.b16 %v5356
    %v5557 = vunpack.c.h.b16 %v5356
    %v5558 = vunpack.c.l.b16 %v5357
    %v5559 = vunpack.c.h.b16 %v5357
    %v5560 = vunpack.c.l.b16 %v5358
    %v5561 = vunpack.c.h.b16 %v5358
    %v5562 = vunpack.c.l.b16 %v5359
    %v5563 = vunpack.c.h.b16 %v5359
    %v5564 = vunpack.c.l.b16 %v5360
    %v5565 = vunpack.c.h.b16 %v5360
    %v5566 = vunpack.c.l.b16 %v5361
    %v5567 = vunpack.c.h.b16 %v5361
    %v5568 = vunpack.c.l.b16 %v5362
    %v5569 = vunpack.c.h.b16 %v5362
    %v5570 = vunpack.c.l.b16 %v5363
    %v5571 = vunpack.c.h.b16 %v5363
    %v5572 = vunpack.c.l.b16 %v5364
    %v5573 = vunpack.c.h.b16 %v5364
    %v5574 = vunpack.c.l.b16 %v5365
    %v5575 = vunpack.c.h.b16 %v5365
    %v5576 = vunpack.c.l.b16 %v5366
    %v5577 = vunpack.c.h.b16 %v5366
    %v5578 = vunpack.c.l.b16 %v5367
    %v5579 = vunpack.c.h.b16 %v5367
    %v5580 = vpack.c.b16 %v5454, %v5452
    %v5581 = vpack.c.b16 %v5455, %v5453
    %v5582 = vpack.c.b16 %v5458, %v5456
    %v5583 = vpack.c.b16 %v5459, %v5457
    %v5584 = vpack.c.b16 %v5462, %v5460
    %v5585 = vpack.c.b16 %v5463, %v5461
    %v5586 = vpack.c.b16 %v5466, %v5464
    %v5587 = vpack.c.b16 %v5467, %v5465
    %v5588 = vpack.c.b16 %v5470, %v5468
    %v5589 = vpack.c.b16 %v5471, %v5469
    %v5590 = vpack.c.b16 %v5474, %v5472
    %v5591 = vpack.c.b16 %v5475, %v5473
    %v5592 = vpack.c.b16 %v5478, %v5476
    %v5593 = vpack.c.b16 %v5479, %v5477
    %v5594 = vpack.c.b16 %v5482, %v5480
    %v5595 = vpack.c.b16 %v5483, %v5481
    %v5596 = vpack.c.b16 %v5486, %v5484
    %v5597 = vpack.c.b16 %v5487, %v5485
    %v5598 = vpack.c.b16 %v5490, %v5488
    %v5599 = vpack.c.b16 %v5491, %v5489
    %v5600 = vpack.c.b16 %v5494, %v5492
    %v5601 = vpack.c.b16 %v5495, %v5493
    %v5602 = vpack.c.b16 %v5498, %v5496
    %v5603 = vpack.c.b16 %v5499, %v5497
    %v5604 = vpack.c.b16 %v5502, %v5500
    %v5605 = vpack.c.b16 %v5503, %v5501
    %v5606 = vpack.c.b16 %v5506, %v5504
    %v5607 = vpack.c.b16 %v5507, %v5505
    %v5608 = vpack.c.b16 %v5510, %v5508
    %v5609 = vpack.c.b16 %v5511, %v5509
    %v5610 = vpack.c.b16 %v5514, %v5512
    %v5611 = vpack.c.b16 %v5515, %v5513
    %v5612 = vpack.c.b16 %v5518, %v5516
    %v5613 = vpack.c.b16 %v5519, %v5517
    %v5614 = vpack.c.b16 %v5522, %v5520
    %v5615 = vpack.c.b16 %v5523, %v5521
    %v5616 = vpack.c.b16 %v5526, %v5524
    %v5617 = vpack.c.b16 %v5527, %v5525
    %v5618 = vpack.c.b16 %v5530, %v5528
    %v5619 = vpack.c.b16 %v5531, %v5529
    %v5620 = vpack.c.b16 %v5534, %v5532
    %v5621 = vpack.c.b16 %v5535, %v5533
    %v5622 = vpack.c.b16 %v5538, %v5536
    %v5623 = vpack.c.b16 %v5539, %v5537
    %v5624 = vpack.c.b16 %v5542, %v5540
    %v5625 = vpack.c.b16 %v5543, %v5541
    %v5626 = vpack.c.b16 %v5546, %v5544
    %v5627 = vpack.c.b16 %v5547, %v5545
    %v5628 = vpack.c.b16 %v5550, %v5548
    %v5629 = vpack.c.b16 %v5551, %v5549
    %v5630 = vpack.c.b16 %v5554, %v5552
    %v5631 = vpack.c.b16 %v5555, %v5553
    %v5632 = vpack.c.b16 %v5558, %v5556
    %v5633 = vpack.c.b16 %v5559, %v5557
    %v5634 = vpack.c.b16 %v5562, %v5560
    %v5635 = vpack.c.b16 %v5563, %v5561
    %v5636 = vpack.c.b16 %v5566, %v5564
    %v5637 = vpack.c.b16 %v5567, %v5565
    %v5638 = vpack.c.b16 %v5570, %v5568
    %v5639 = vpack.c.b16 %v5571, %v5569
    %v5640 = vpack.c.b16 %v5574, %v5572
    %v5641 = vpack.c.b16 %v5575, %v5573
    %v5642 = vpack.c.b16 %v5578, %v5576
    %v5643 = vpack.c.b16 %v5579, %v5577
    %5708 = vmatpush.bf16.msra.mxu0 %v5594
    %5709 = vmatpush.bf16.msra.mxu0 %v5592
    %5710 = vmatpush.bf16.msra.mxu0 %v5590
    %5711 = vmatpush.bf16.msra.mxu0 %v5588
    %5712 = vmatpush.bf16.msra.mxu0 %v5586
    %5713 = vmatpush.bf16.msra.mxu0 %v5584
    %5714 = vmatpush.bf16.msra.mxu0 %v5582
    %5715 = vmatpush.bf16.msra.mxu0 %v5580
    %5716 = vmatmul.bf16.gmra.mxu0 %v5380
    %v5717 = vpop.f32.mrf.mxu0
    %v5718 = vadd.f32 %v5370, %v5717
    %v5719 = vpop.f32.mrf.mxu0
    %5720 = vdwg.mxu0
    %5721 = vmatpush.bf16.msra.mxu0 %v5610
    %5722 = vmatpush.bf16.msra.mxu0 %v5608
    %5723 = vmatpush.bf16.msra.mxu0 %v5606
    %5724 = vmatpush.bf16.msra.mxu0 %v5604
    %5725 = vmatpush.bf16.msra.mxu0 %v5602
    %5726 = vmatpush.bf16.msra.mxu0 %v5600
    %5727 = vmatpush.bf16.msra.mxu0 %v5598
    %5728 = vmatpush.bf16.msra.mxu0 %v5596
    %5729 = vmatmul.bf16.gmra.mxu0 %v5381
    %v5730 = vpop.f32.mrf.mxu0
    %v5731 = vadd.f32 %v5718, %v5730
    %v5732 = vpop.f32.mrf.mxu0
    %5733 = vdwg.mxu0
    %5734 = vmatpush.bf16.msra.mxu0 %v5626
    %5735 = vmatpush.bf16.msra.mxu0 %v5624
    %5736 = vmatpush.bf16.msra.mxu0 %v5622
    %5737 = vmatpush.bf16.msra.mxu0 %v5620
    %5738 = vmatpush.bf16.msra.mxu0 %v5618
    %5739 = vmatpush.bf16.msra.mxu0 %v5616
    %5740 = vmatpush.bf16.msra.mxu0 %v5614
    %5741 = vmatpush.bf16.msra.mxu0 %v5612
    %5742 = vmatmul.bf16.gmra.mxu0 %v5382
    %v5743 = vpop.f32.mrf.mxu0
    %v5744 = vadd.f32 %v5731, %v5743
    %v5745 = vpop.f32.mrf.mxu0
    %5746 = vdwg.mxu0
    %5747 = vmatpush.bf16.msra.mxu0 %v5642
    %5748 = vmatpush.bf16.msra.mxu0 %v5640
    %5749 = vmatpush.bf16.msra.mxu0 %v5638
    %5750 = vmatpush.bf16.msra.mxu0 %v5636
    %5751 = vmatpush.bf16.msra.mxu0 %v5634
    %5752 = vmatpush.bf16.msra.mxu0 %v5632
    %5753 = vmatpush.bf16.msra.mxu0 %v5630
    %5754 = vmatpush.bf16.msra.mxu0 %v5628
    %5755 = vmatmul.bf16.gmra.mxu0 %v5383
    %v5756 = vpop.f32.mrf.mxu0
    %v5757 = vadd.f32 %v5744, %v5756
    %v5758 = vpop.f32.mrf.mxu0
    %5759 = vdwg.mxu0
    %5760 = vmatpush.bf16.msra.mxu0 %v5595
    %5761 = vmatpush.bf16.msra.mxu0 %v5593
    %5762 = vmatpush.bf16.msra.mxu0 %v5591
    %5763 = vmatpush.bf16.msra.mxu0 %v5589
    %5764 = vmatpush.bf16.msra.mxu0 %v5587
    %5765 = vmatpush.bf16.msra.mxu0 %v5585
    %5766 = vmatpush.bf16.msra.mxu0 %v5583
    %5767 = vmatpush.bf16.msra.mxu0 %v5581
    %5768 = vmatmul.bf16.gmra.mxu0 %v5380
    %v5769 = vpop.f32.mrf.mxu0
    %v5770 = vadd.f32 %v5371, %v5769
    %v5771 = vpop.f32.mrf.mxu0
    %5772 = vdwg.mxu0
    %5773 = vmatpush.bf16.msra.mxu0 %v5611
    %5774 = vmatpush.bf16.msra.mxu0 %v5609
    %5775 = vmatpush.bf16.msra.mxu0 %v5607
    %5776 = vmatpush.bf16.msra.mxu0 %v5605
    %5777 = vmatpush.bf16.msra.mxu0 %v5603
    %5778 = vmatpush.bf16.msra.mxu0 %v5601
    %5779 = vmatpush.bf16.msra.mxu0 %v5599
    %5780 = vmatpush.bf16.msra.mxu0 %v5597
    %5781 = vmatmul.bf16.gmra.mxu0 %v5381
    %v5782 = vpop.f32.mrf.mxu0
    %v5783 = vadd.f32 %v5770, %v5782
    %v5784 = vpop.f32.mrf.mxu0
    %5785 = vdwg.mxu0
    %5786 = vmatpush.bf16.msra.mxu0 %v5627
    %5787 = vmatpush.bf16.msra.mxu0 %v5625
    %5788 = vmatpush.bf16.msra.mxu0 %v5623
    %5789 = vmatpush.bf16.msra.mxu0 %v5621
    %5790 = vmatpush.bf16.msra.mxu0 %v5619
    %5791 = vmatpush.bf16.msra.mxu0 %v5617
    %5792 = vmatpush.bf16.msra.mxu0 %v5615
    %5793 = vmatpush.bf16.msra.mxu0 %v5613
    %5794 = vmatmul.bf16.gmra.mxu0 %v5382
    %v5795 = vpop.f32.mrf.mxu0
    %v5796 = vadd.f32 %v5783, %v5795
    %v5797 = vpop.f32.mrf.mxu0
    %5798 = vdwg.mxu0
    %5799 = vmatpush.bf16.msra.mxu0 %v5643
    %5800 = vmatpush.bf16.msra.mxu0 %v5641
    %5801 = vmatpush.bf16.msra.mxu0 %v5639
    %5802 = vmatpush.bf16.msra.mxu0 %v5637
    %5803 = vmatpush.bf16.msra.mxu0 %v5635
    %5804 = vmatpush.bf16.msra.mxu0 %v5633
    %5805 = vmatpush.bf16.msra.mxu0 %v5631
    %5806 = vmatpush.bf16.msra.mxu0 %v5629
    %5807 = vmatmul.bf16.gmra.mxu0 %v5383
    %v5808 = vpop.f32.mrf.mxu0
    %v5809 = vadd.f32 %v5796, %v5808
    %v5810 = vpop.f32.mrf.mxu0
    %5811 = vdwg.mxu0
    %v5812 = vpack.c.bf16 %v5809, %v5757
    %v5813 = vunpack.c.l.bf16 %v5812
    %v5814 = vunpack.c.h.bf16 %v5812
    %vm5815 = vcmp.gt.f32.partialorder %v5813, 0.0
    %vm5816 = vcmp.gt.f32.partialorder %v5814, 0.0
    %v5817 = vmul.f32 %v5813, 0.20019531
    %v5818 = vmul.f32 %v5814, 0.20019531
    %v5819 = vpack.c.bf16 %v5818, %v5817
    %vm5820 = vmpackc.low %vm5816, %vm5815
    %v5821 = vsel %vm5820, %v5812, %v5819
    %v5822 = vld [vmem:[#allocation13] sm:$0xf]
    %v5823 = vld [vmem:[#allocation13 + $0x4] sm:$0xf]
    %v5824 = vld [vmem:[#allocation13 + $0x8] sm:$0xf]
    %v5825 = vld [vmem:[#allocation13 + $0xc] sm:$0xf]
    %v5826 = vld [vmem:[#allocation13 + $0x10] sm:$0xf]
    %v5827 = vld [vmem:[#allocation13 + $0x14] sm:$0xf]
    %v5828 = vld [vmem:[#allocation13 + $0x18] sm:$0xf]
    %v5829 = vld [vmem:[#allocation13 + $0x1c] sm:$0xf]
    %v5830 = vld [vmem:[#allocation13 + $0x20] sm:$0xf]
    %v5831 = vld [vmem:[#allocation13 + $0x24] sm:$0xf]
    %v5832 = vld [vmem:[#allocation13 + $0x28] sm:$0xf]
    %v5833 = vld [vmem:[#allocation13 + $0x2c] sm:$0xf]
    %v5834 = vld [vmem:[#allocation13 + $0x30] sm:$0xf]
    %v5835 = vld [vmem:[#allocation13 + $0x34] sm:$0xf]
    %v5836 = vld [vmem:[#allocation13 + $0x38] sm:$0xf]
    %v5837 = vld [vmem:[#allocation13 + $0x3c] sm:$0xf]
    %v5838 = vld [vmem:[#allocation13 + $0x40] sm:$0xf]
    %v5839 = vld [vmem:[#allocation13 + $0x44] sm:$0xf]
    %v5840 = vld [vmem:[#allocation13 + $0x48] sm:$0xf]
    %v5841 = vld [vmem:[#allocation13 + $0x4c] sm:$0xf]
    %v5842 = vld [vmem:[#allocation13 + $0x50] sm:$0xf]
    %v5843 = vld [vmem:[#allocation13 + $0x54] sm:$0xf]
    %v5844 = vld [vmem:[#allocation13 + $0x58] sm:$0xf]
    %v5845 = vld [vmem:[#allocation13 + $0x5c] sm:$0xf]
    %v5846 = vld [vmem:[#allocation13 + $0x60] sm:$0xf]
    %v5847 = vld [vmem:[#allocation13 + $0x64] sm:$0xf]
    %v5848 = vld [vmem:[#allocation13 + $0x68] sm:$0xf]
    %v5849 = vld [vmem:[#allocation13 + $0x6c] sm:$0xf]
    %v5850 = vld [vmem:[#allocation13 + $0x70] sm:$0xf]
    %v5851 = vld [vmem:[#allocation13 + $0x74] sm:$0xf]
    %v5852 = vld [vmem:[#allocation13 + $0x78] sm:$0xf]
    %v5853 = vld [vmem:[#allocation13 + $0x7c] sm:$0xf]
    %v5855 = vunpack.c.l.b16 %v5821
    %v5856 = vunpack.c.h.b16 %v5821
    %v5857 = vpack.c.b16 %v5855, %v5855
    %v5858 = vpack.c.b16 %v5856, %v5856
    %v5893 = vunpack.c.l.b16 %v5822
    %v5894 = vunpack.c.l.b16 %v5823
    %v5895 = vunpack.c.l.b16 %v5824
    %v5896 = vunpack.c.l.b16 %v5825
    %v5897 = vunpack.c.l.b16 %v5826
    %v5898 = vunpack.c.l.b16 %v5827
    %v5899 = vunpack.c.l.b16 %v5828
    %v5900 = vunpack.c.l.b16 %v5829
    %v5901 = vunpack.c.l.b16 %v5830
    %v5902 = vunpack.c.l.b16 %v5831
    %v5903 = vunpack.c.l.b16 %v5832
    %v5904 = vunpack.c.l.b16 %v5833
    %v5905 = vunpack.c.l.b16 %v5834
    %v5906 = vunpack.c.l.b16 %v5835
    %v5907 = vunpack.c.l.b16 %v5836
    %v5908 = vunpack.c.l.b16 %v5837
    %v5909 = vunpack.c.l.b16 %v5838
    %v5910 = vunpack.c.l.b16 %v5839
    %v5911 = vunpack.c.l.b16 %v5840
    %v5912 = vunpack.c.l.b16 %v5841
    %v5913 = vunpack.c.l.b16 %v5842
    %v5914 = vunpack.c.l.b16 %v5843
    %v5915 = vunpack.c.l.b16 %v5844
    %v5916 = vunpack.c.l.b16 %v5845
    %v5917 = vunpack.c.l.b16 %v5846
    %v5918 = vunpack.c.l.b16 %v5847
    %v5919 = vunpack.c.l.b16 %v5848
    %v5920 = vunpack.c.l.b16 %v5849
    %v5921 = vunpack.c.l.b16 %v5850
    %v5922 = vunpack.c.l.b16 %v5851
    %v5923 = vunpack.c.l.b16 %v5852
    %v5924 = vunpack.c.l.b16 %v5853
    %v5925 = vpack.c.b16 %v5894, %v5893
    %v5926 = vpack.c.b16 %v5896, %v5895
    %v5927 = vpack.c.b16 %v5898, %v5897
    %v5928 = vpack.c.b16 %v5900, %v5899
    %v5929 = vpack.c.b16 %v5902, %v5901
    %v5930 = vpack.c.b16 %v5904, %v5903
    %v5931 = vpack.c.b16 %v5906, %v5905
    %v5932 = vpack.c.b16 %v5908, %v5907
    %v5933 = vpack.c.b16 %v5910, %v5909
    %v5934 = vpack.c.b16 %v5912, %v5911
    %v5935 = vpack.c.b16 %v5914, %v5913
    %v5936 = vpack.c.b16 %v5916, %v5915
    %v5937 = vpack.c.b16 %v5918, %v5917
    %v5938 = vpack.c.b16 %v5920, %v5919
    %v5939 = vpack.c.b16 %v5922, %v5921
    %v5940 = vpack.c.b16 %v5924, %v5923
    %5957 = vmatpush.bf16.msra.mxu0 %v5932
    %5958 = vmatpush.bf16.msra.mxu0 %v5931
    %5959 = vmatpush.bf16.msra.mxu0 %v5930
    %5960 = vmatpush.bf16.msra.mxu0 %v5929
    %5961 = vmatpush.bf16.msra.mxu0 %v5928
    %5962 = vmatpush.bf16.msra.mxu0 %v5927
    %5963 = vmatpush.bf16.msra.mxu0 %v5926
    %5964 = vmatpush.bf16.msra.mxu0 %v5925
    %5965 = vmatmul.bf16.gmra.mxu0 %v5857
    %v5966 = vpop.f32.mrf.mxu0
    %v5967 = vadd.f32 0.0, %v5966
    %v5968 = vpop.f32.mrf.mxu0
    %5969 = vdwg.mxu0
    %5970 = vmatpush.bf16.msra.mxu0 %v5940
    %5971 = vmatpush.bf16.msra.mxu0 %v5939
    %5972 = vmatpush.bf16.msra.mxu0 %v5938
    %5973 = vmatpush.bf16.msra.mxu0 %v5937
    %5974 = vmatpush.bf16.msra.mxu0 %v5936
    %5975 = vmatpush.bf16.msra.mxu0 %v5935
    %5976 = vmatpush.bf16.msra.mxu0 %v5934
    %5977 = vmatpush.bf16.msra.mxu0 %v5933
    %5978 = vmatmul.bf16.gmra.mxu0 %v5858
    %v5979 = vpop.f32.mrf.mxu0
    %v5980 = vadd.f32 %v5967, %v5979
    %v5981 = vpop.f32.mrf.mxu0
    %5982 = vdwg.mxu0
    %v5983 = vld [vmem:[#allocation2] sm:$0x1]
    %v5985 = vperm.slane %v5983, 0
    %v5987 = vadd.f32 %v5980, %v5985
    %v5988 = vmax.f32 %v5987, -30.0
    %v5989 = vmin.f32 %v5988, 30.0
    %v5990 = vsub.f32 0.0, %v5989
    %v5991 = vmul.f32 %v5990, 1.442695
    %v5992 = vpow.pop %v5991
    %v5993 = vadd.f32 %v5992, 1.0
    %v5994 = vrcp.pop %v5993
    %vm5995 = vcmask 7168
    %5996 = vst.msk [vmem:[%s9] sm:$0xff] %vm5995, %v5994
    // Predicated region
    $region66: #{discriminator_forward.1} parent=1 // pred_check
      _
    $region67: #{discriminator_forward.1} parent=1 // pred_check_branch
      %5998 = sbr.rel (0) target = $region69
    $region68: #{discriminator_forward.1} parent=1 // pred_region
      _
    $region69: #{discriminator_forward.1} parent=1 // pred_fallthru
      _
    // Predicated region
    $region70: #{discriminator_forward.1} parent=1 // pred_check
      _
    $region71: #{discriminator_forward.1} parent=1 // pred_check_branch
      %6000 = sbr.rel (0) target = $region73
    $region72: #{discriminator_forward.1} parent=1 // pred_region
      _
    $region73: #{discriminator_forward.1} parent=1 // pred_fallthru
      _
    %6001 = vsyncpa [#allocation4], 1
    %6002 = vsyncpa [#allocation6], 1
    %6003 = vsyncpa [#allocation9], 1
    %6004 = vsyncpa [#allocation12], 1

</llo_original>
